<compile_context>
chip_gen: v7x
topology: tpu7x:2x2x1
jax: 0.10.0
libtpu: 0.0.40
codegen_flags: <defaults>
</compile_context>

<pallas_src>
import math
import numpy as np

import jax
import jax.numpy as jnp
from jax.experimental import pallas as pl
from jax.experimental.pallas import tpu as pltpu


# ----------------------------------------------------------------------------- #
# Host-side: exact 1-D adaptive-avg-pool / bilinear (align_corners=False) matrices.
# ----------------------------------------------------------------------------- #
def adaptive_avg_pool_matrix(in_size: int, out_size: int) -> np.ndarray:
    """P[i, h] such that pooled[i] = sum_h P[i, h] * x[h] (matches F.adaptive_avg_pool)."""
    P = np.zeros((out_size, in_size), dtype=np.float32)
    for i in range(out_size):
        start = (i * in_size) // out_size
        end = -(-((i + 1) * in_size) // out_size)  # ceil div
        P[i, start:end] = 1.0 / (end - start)
    return P


def bilinear_upsample_matrix(in_size: int, out_size: int) -> np.ndarray:
    """U[h, i] such that up[h] = sum_i U[h, i] * x[i] (bilinear, align_corners=False)."""
    U = np.zeros((out_size, in_size), dtype=np.float32)
    if in_size == 1:
        U[:, 0] = 1.0
        return U
    scale = in_size / out_size
    for h in range(out_size):
        src = max((h + 0.5) * scale - 0.5, 0.0)
        i0 = min(int(math.floor(src)), in_size - 1)
        i1 = min(i0 + 1, in_size - 1)
        w1 = src - i0
        U[h, i0] += 1.0 - w1
        U[h, i1] += w1
    return U


def _choose_row_tile(H, W, bytes_per_pixel, vmem_budget=12 << 20):
    """Largest multiple-of-8 divisor of H whose th*W-pixel row tile fits the budget."""
    max_rows = max(128, vmem_budget // max(1, 2 * bytes_per_pixel))
    cands = [d for d in range(8, H + 1, 8) if H % d == 0]
    if not cands:
        return H                      # no multiple-of-8 divisor: single row tile
    best = cands[0]
    for d in cands:                   # ascending -> ends at largest tile that fits
        if d * W <= max_rows:
            best = d
    return best


def _vmem_limit(block_elems):
    return int(min(max(2 * 4 * block_elems + (6 << 20), 16 << 20), 64 << 20))


# ----------------------------------------------------------------------------- #
# Kernel A:  ReLU(x) @ W_bn + b  (spp_bn 1x1 conv)  +  all-level separable pooling.
#   grid = (N, H // th); the row-tile axis is a reduction axis for `pooled`
#   (output block constant along it -> resident accumulator, init via pl.when).
# ----------------------------------------------------------------------------- #
def _bn_pool_kernel(x_ref, wbn_ref, bbn_ref, ph_ref, pw_ref, y_ref, pooled_ref):
    ht = pl.program_id(1)
    _, th, W, Cin = x_ref.shape
    bt = wbn_ref.shape[1]
    Lnum, ghm, gwm, _ = pooled_ref.shape

    x = x_ref[0]                                                  # (th, W, Cin)
    xr = jnp.maximum(x, 0.0).reshape(th * W, Cin)
    y2 = (jnp.dot(xr, wbn_ref[...], preferred_element_type=jnp.float32)
          + bbn_ref[...])                                         # (th*W, bt)
    y3 = y2.reshape(th, W, bt)
    y_ref[0] = y3

    @pl.when(ht == 0)
    def _init():
        pooled_ref[...] = jnp.zeros_like(pooled_ref)

    # Separable adaptive-avg-pool, accumulated across row tiles.
    for l in range(Lnum):
        pw = pw_ref[l]                                            # (gwm, W)
        pwb = jnp.broadcast_to(pw[None], (th, gwm, W))
        # W-pool (batched over the rows of this tile): t[h, v, c] = sum_w pw[v,w] y[h,w,c]
        t = jnp.einsum('hvw,hwc->hvc', pwb, y3,
                       preferred_element_type=jnp.float32)        # (th, gwm, bt)
        # H-pool for this tile's rows: p[u, (v,c)] = sum_h ph[h,u] t[h, (v,c)]
        p = jnp.dot(ph_ref[l].T, t.reshape(th, gwm * bt),
                    preferred_element_type=jnp.float32)           # (ghm, gwm*bt)
        pooled_ref[l] = pooled_ref[l] + p.reshape(ghm, gwm, bt)


def spp_bn_pool(x_nhwc, w_bn, b_bn, ph_stack, pw_stack, *, th):
    """x: (N,H,W,Cin) -> y: (N,H,W,bt), pooled: (N*L, ghm, gwm, bt)."""
    N, H, W, Cin = x_nhwc.shape
    bt = w_bn.shape[1]
    Lnum, _, ghm = ph_stack.shape
    gwm = pw_stack.shape[1]
    nH = H // th
    b2 = b_bn.reshape(1, bt)

    block_elems = (th * W * Cin + Cin * bt + bt + Lnum * th * ghm
                   + Lnum * gwm * W + th * W * bt + Lnum * ghm * gwm * bt)
    return pl.pallas_call(
        _bn_pool_kernel,
        out_shape=(jax.ShapeDtypeStruct((N, H, W, bt), jnp.float32),
                   jax.ShapeDtypeStruct((N * Lnum, ghm, gwm, bt), jnp.float32)),
        grid=(N, nH),
        in_specs=[
            pl.BlockSpec((1, th, W, Cin), lambda n, h: (n, h, 0, 0)),
            pl.BlockSpec((Cin, bt), lambda n, h: (0, 0)),
            pl.BlockSpec((1, bt), lambda n, h: (0, 0)),
            pl.BlockSpec((Lnum, th, ghm), lambda n, h: (0, h, 0)),
            pl.BlockSpec((Lnum, gwm, W), lambda n, h: (0, 0, 0)),
        ],
        out_specs=(
            pl.BlockSpec((1, th, W, bt), lambda n, h: (n, h, 0, 0)),
            pl.BlockSpec((Lnum, ghm, gwm, bt), lambda n, h: (n, 0, 0, 0)),
        ),
        compiler_params=pltpu.CompilerParams(
            dimension_semantics=("parallel", "arbitrary"),
            vmem_limit_bytes=_vmem_limit(block_elems)),
    )(x_nhwc, w_bn, b2, ph_stack, pw_stack)


# ----------------------------------------------------------------------------- #
# Kernel B (fused tail): per row tile compute
#   acc  = ReLU(y) @ Wf_y + b_fuse
#   for each level: lvl = ReLU(pooled_l) @ W_l + b_l ; up = Uh_tile lvl Uw^T (separable)
#                   acc += ReLU(up) @ Wf_l
# This is exactly ReLU(concat([y, up_0, up_1, ...])) @ W_fuse + b_fuse, without the
# HBM concat or any per-level HBM round trips.  Output channels lane-padded to 128.
# ----------------------------------------------------------------------------- #
def _tail_kernel(y_ref, pooled_ref, wl_ref, bl_ref, uh_ref, uw_ref,
                 wfy_ref, wfl_ref, bf_ref, o_ref):
    _, th, W, bt = y_ref.shape
    Lnum, ghm, gwm, _ = pooled_ref.shape
    Ls = wl_ref.shape[2]
    out_pad = o_ref.shape[3]

    y3 = y_ref[0]                                                 # (th, W, bt)
    yr = jnp.maximum(y3, 0.0).reshape(th * W, bt)
    acc = (jnp.dot(yr, wfy_ref[...], preferred_element_type=jnp.float32)
           + bf_ref[...])                                         # (th*W, out_pad)

    for l in range(Lnum):
        act = jnp.maximum(pooled_ref[l], 0.0)                     # (ghm, gwm, bt)
        lvl = (jnp.dot(act.reshape(ghm * gwm, bt), wl_ref[l],
                       preferred_element_type=jnp.float32)
               + bl_ref[l])                                       # (ghm*gwm, Ls)
        # H-upsample for this tile's rows: a[h, (v,d)] = sum_u uh[h,u] lvl[(u),(v,d)]
        a = jnp.dot(uh_ref[l], lvl.reshape(ghm, gwm * Ls),
                    preferred_element_type=jnp.float32)           # (th, gwm*Ls)
        a3 = a.reshape(th, gwm, Ls)
        # W-upsample (batched over rows): up[h,w,d] = sum_v uw[w,v] a3[h,v,d]
        uwb = jnp.broadcast_to(uw_ref[l][None], (th, W, gwm))
        up = jnp.einsum('hwv,hvd->hwd', uwb, a3,
                        preferred_element_type=jnp.float32)       # (th, W, Ls)
        upr = jnp.maximum(up, 0.0).reshape(th * W, Ls)
        acc = acc + jnp.dot(upr, wfl_ref[l],
                            preferred_element_type=jnp.float32)

    o_ref[0] = acc.reshape(th, W, out_pad)


def spp_tail(y, pooled, w_lvl, b_lvl, uh_stack, uw_stack, wf_y, wf_lvl, b_fuse, *, th):
    N, H, W, bt = y.shape
    Lnum, ghm, gwm, _ = pooled.shape[0] // N, pooled.shape[1], pooled.shape[2], pooled.shape[3]
    Ls = w_lvl.shape[2]
    out_pad = wf_y.shape[1]
    nH = H // th

    block_elems = (th * W * bt + Lnum * ghm * gwm * bt + Lnum * bt * Ls + Lnum * Ls
                   + Lnum * th * ghm + Lnum * W * gwm + bt * out_pad
                   + Lnum * Ls * out_pad + out_pad + th * W * out_pad)
    return pl.pallas_call(
        _tail_kernel,
        out_shape=jax.ShapeDtypeStruct((N, H, W, out_pad), jnp.float32),
        grid=(N, nH),
        in_specs=[
            pl.BlockSpec((1, th, W, bt), lambda n, h: (n, h, 0, 0)),
            pl.BlockSpec((Lnum, ghm, gwm, bt), lambda n, h: (n, 0, 0, 0)),
            pl.BlockSpec((Lnum, bt, Ls), lambda n, h: (0, 0, 0)),
            pl.BlockSpec((Lnum, 1, Ls), lambda n, h: (0, 0, 0)),
            pl.BlockSpec((Lnum, th, ghm), lambda n, h: (0, h, 0)),
            pl.BlockSpec((Lnum, W, gwm), lambda n, h: (0, 0, 0)),
            pl.BlockSpec((bt, out_pad), lambda n, h: (0, 0)),
            pl.BlockSpec((Lnum, Ls, out_pad), lambda n, h: (0, 0, 0)),
            pl.BlockSpec((1, out_pad), lambda n, h: (0, 0)),
        ],
        out_specs=pl.BlockSpec((1, th, W, out_pad), lambda n, h: (n, h, 0, 0)),
        compiler_params=pltpu.CompilerParams(
            dimension_semantics=("parallel", "parallel"),
            vmem_limit_bytes=_vmem_limit(block_elems)),
    )(y, pooled, w_lvl, b_lvl, uh_stack, uw_stack, wf_y, wf_lvl, b_fuse)


# ----------------------------------------------------------------------------- #
# Module wrapper
# ----------------------------------------------------------------------------- #
class SpatialPyramidPoolingPallas:
    """Mirrors SpatialPyramidPooling(fixed_size=None, square_grid=False, norm=False)."""

    def __init__(self, num_maps_in, num_levels=3, bt_size=128, out_size=128,
                 grids=(8, 4, 2, 1), key=None):
        self.num_maps_in = num_maps_in
        self.num_levels = num_levels
        self.bt_size = bt_size
        self.out_size = out_size
        self.grids = list(grids)
        level_size = out_size // num_levels
        self.level_size = level_size
        self.final_size = bt_size + num_levels * level_size
        self.out_pad = ((out_size + 127) // 128) * 128    # lane-dense final store

        key = jax.random.PRNGKey(0) if key is None else key
        ks = jax.random.split(key, 2 * (num_levels + 2))

        def init_w(k, cin, cout):
            return (jax.random.normal(k, (cin, cout), dtype=jnp.float32)
                    / jnp.sqrt(jnp.float32(cin)))

        def init_b(k, cout):
            return jax.random.normal(k, (cout,), dtype=jnp.float32) * 0.01

        # spp_bn: ReluConv(num_maps_in -> bt_size, k=1)
        self.w_bn = init_w(ks[0], num_maps_in, bt_size)
        self.b_bn = init_b(ks[1], bt_size)
        # spp0..spp{L-1}: ReluConv(bt_size -> level_size, k=1)
        w_lvl, b_lvl = [], []
        for i in range(num_levels):
            w_lvl.append(init_w(ks[2 + 2 * i], bt_size, level_size))
            b_lvl.append(init_b(ks[3 + 2 * i], level_size))
        self.w_lvl_stack = jnp.stack(w_lvl)                                # (L, bt, Ls)
        self.b_lvl_stack = jnp.stack(b_lvl).reshape(num_levels, 1, level_size)
        # spp_fuse: ReluConv(final_size -> out_size, k=1)
        self.w_fuse = init_w(ks[2 + 2 * num_levels], self.final_size, out_size)
        self.b_fuse = init_b(ks[3 + 2 * num_levels], out_size)

        # Pre-split and lane-pad the fuse weights so the tail kernel never slices
        # weights in-kernel and all HBM stores are full 128-lane wide.
        pad = self.out_pad - out_size
        self.wf_y = jnp.pad(self.w_fuse[:bt_size], ((0, 0), (0, pad)))     # (bt, out_pad)
        wf_lvl = [self.w_fuse[bt_size + i * level_size: bt_size + (i + 1) * level_size]
                  for i in range(num_levels)]
        self.wf_lvl = jnp.pad(jnp.stack(wf_lvl), ((0, 0), (0, 0), (0, pad)))  # (L, Ls, out_pad)
        self.b_fuse_pad = jnp.pad(self.b_fuse, (0, pad)).reshape(1, self.out_pad)

    # -- host-side separable pooling / upsample matrices (zero-padded per level) --
    def _level_mats(self, H, W):
        ar = W / H
        sizes, ph_l, pw_l, uh_l, uw_l = [], [], [], [], []
        for i in range(self.num_levels):
            g = self.grids[i]
            gh, gw = g, max(1, round(ar * g))
            sizes.append((gh, gw))
            ph_l.append(adaptive_avg_pool_matrix(H, gh).T)    # (H, gh)
            pw_l.append(adaptive_avg_pool_matrix(W, gw))      # (gw, W)
            uh_l.append(bilinear_upsample_matrix(gh, H))      # (H, gh)
            uw_l.append(bilinear_upsample_matrix(gw, W))      # (W, gw)
        ghm = max(s[0] for s in sizes)
        gwm = max(s[1] for s in sizes)

        def pad_stack(mats, shape):
            out = np.zeros((len(mats),) + shape, np.float32)
            for i, m in enumerate(mats):
                out[i, :m.shape[0], :m.shape[1]] = m
            return jnp.asarray(out)

        ph = pad_stack(ph_l, (H, ghm))      # (L, H, ghm)
        pw = pad_stack(pw_l, (gwm, W))      # (L, gwm, W)
        uh = pad_stack(uh_l, (H, ghm))      # (L, H, ghm)
        uw = pad_stack(uw_l, (W, gwm))      # (L, W, gwm)
        return ph, pw, uh, uw, ghm, gwm, sizes

    # -- plain-jnp reference (original un-fused structure) used only for checking --
    def _forward_ref(self, x_nhwc, ph, pw, uh, uw, sizes):
        N, H, W, Cin = x_nhwc.shape
        y = (jnp.maximum(x_nhwc, 0.0).reshape(N, H * W, Cin) @ self.w_bn
             + self.b_bn).reshape(N, H, W, self.bt_size)
        feats = [y]
        for l, (gh, gw) in enumerate(sizes):
            P_h, P_w = ph[l, :, :gh], pw[l, :gw, :]
            U_h, U_w = uh[l, :, :gh], uw[l, :, :gw]
            pooled = jnp.einsum('hu,nhwc->nuwc', P_h, y)
            pooled = jnp.einsum('vw,nuwc->nuvc', P_w, pooled)          # (N, gh, gw, bt)
            lvl = jnp.maximum(pooled, 0.0) @ self.w_lvl_stack[l] + self.b_lvl_stack[l]
            up = jnp.einsum('hu,nuvd->nhvd', U_h, lvl)
            up = jnp.einsum('wv,nhvd->nhwd', U_w, up)                  # (N, H, W, Ls)
            feats.append(up)
        cat = jnp.concatenate(feats, axis=-1)
        out = (jnp.maximum(cat, 0.0).reshape(N, H * W, -1) @ self.w_fuse
               + self.b_fuse).reshape(N, H, W, self.out_size)
        return jnp.transpose(out, (0, 3, 1, 2))

    def __call__(self, x_nchw, use_pallas=True):
        N, Cin, H, W = x_nchw.shape
        x = jnp.transpose(x_nchw, (0, 2, 3, 1))                        # NCHW -> NHWC
        ph, pw, uh, uw, ghm, gwm, sizes = self._level_mats(H, W)

        if not use_pallas:
            return self._forward_ref(x, ph, pw, uh, uw, sizes)

        bpp = 4 * (Cin + 2 * self.bt_size + self.out_pad)              # bytes per pixel (row-tiled blocks)
        th = _choose_row_tile(H, W, bpp)

        y, pooled = spp_bn_pool(x, self.w_bn, self.b_bn, ph, pw, th=th)
        out = spp_tail(y, pooled, self.w_lvl_stack, self.b_lvl_stack, uh, uw,
                       self.wf_y, self.wf_lvl, self.b_fuse_pad, th=th)
        out = out[..., :self.out_size]                                 # drop lane padding
        return jnp.transpose(out, (0, 3, 1, 2))                        # back to NCHW


if __name__ == "__main__":
    key = jax.random.PRNGKey(0)
    # small shapes: batch=2, in-channels=4, spatial=16x16, bottleneck=32, out=24 (level=8)
    model = SpatialPyramidPoolingPallas(num_maps_in=4, num_levels=3, bt_size=32,
                                        out_size=24, grids=(8, 4, 2, 1), key=key)
    x = jax.random.normal(jax.random.fold_in(key, 123), (2, 4, 16, 16), dtype=jnp.float32)

    out = model(x, use_pallas=True)
    out = jax.block_until_ready(out)
    assert out.shape == (2, 24, 16, 16), out.shape

    ref = model(x, use_pallas=False)
    ref = jax.block_until_ready(ref)
    err = float(jnp.max(jnp.abs(out - ref)))
    assert jnp.allclose(out, ref, rtol=1e-4, atol=1e-4), err

    print("KERNEL_OK")
</pallas_src>

<mosaic_0001>
module attributes {stable_mosaic.version = 11 : i64} {
  func.func @_bn_pool_kernel(%arg0: i32, %arg1: i32, %arg2: memref<1x16x16x4xf32, #tpu.memory_space<vmem>>, %arg3: memref<4x32xf32, #tpu.memory_space<vmem>>, %arg4: memref<1x32xf32, #tpu.memory_space<vmem>>, %arg5: memref<3x16x8xf32, #tpu.memory_space<vmem>>, %arg6: memref<3x8x16xf32, #tpu.memory_space<vmem>>, %arg7: memref<1x16x16x32xf32, #tpu.memory_space<vmem>>, %arg8: memref<3x8x8x32xf32, #tpu.memory_space<vmem>>) attributes {dimension_semantics = [#tpu.dimension_semantics<parallel>, #tpu.dimension_semantics<arbitrary>], iteration_bounds = array<i64: 2, 1>, scalar_prefetch = 0 : i64, scratch_operands = 0 : i64, tpu.core_type = #tpu.core_type<tc>, window_params = [{transform_indices = @transform_0, window_bounds = array<i64: 1, 16, 16, 4>}, {pipeline_mode = #tpu.pipeline_mode<synchronous>, transform_indices = @transform_1, window_bounds = array<i64: 4, 32>}, {pipeline_mode = #tpu.pipeline_mode<synchronous>, transform_indices = @transform_2, window_bounds = array<i64: 1, 32>}, {transform_indices = @transform_3, window_bounds = array<i64: 3, 16, 8>}, {pipeline_mode = #tpu.pipeline_mode<synchronous>, transform_indices = @transform_4, window_bounds = array<i64: 3, 8, 16>}, {transform_indices = @transform_5, window_bounds = array<i64: 1, 16, 16, 32>}, {transform_indices = @transform_6, window_bounds = array<i64: 3, 8, 8, 32>}]} {
    %c0 = arith.constant 0 : index
    %c0_0 = arith.constant 0 : index
    %c0_1 = arith.constant 0 : index
    %c0_2 = arith.constant 0 : index
    %0 = vector.load %arg2[%c0, %c0_0, %c0_1, %c0_2] : memref<1x16x16x4xf32, #tpu.memory_space<vmem>>, vector<1x16x16x4xf32>
    %1 = vector.shape_cast %0 : vector<1x16x16x4xf32> to vector<16x16x4xf32>
    %cst = arith.constant 0.000000e+00 : f32
    %2 = vector.broadcast %cst : f32 to vector<16x16x4xf32>
    %3 = arith.maximumf %1, %2 : vector<16x16x4xf32>
    %4 = vector.shape_cast %3 : vector<16x16x4xf32> to vector<256x4xf32>
    %c0_3 = arith.constant 0 : index
    %c0_4 = arith.constant 0 : index
    %5 = vector.load %arg3[%c0_3, %c0_4] : memref<4x32xf32, #tpu.memory_space<vmem>>, vector<4x32xf32>
    %cst_5 = arith.constant dense<0.000000e+00> : vector<256x32xf32>
    %6 = tpu.matmul %4, %5, %cst_5 {dimension_numbers = #tpu.dot_dimension_numbers<[1], [0], [0], [1], [0, 0, 1, 1], [], []>} : vector<256x4xf32>, vector<4x32xf32>, vector<256x32xf32> -> vector<256x32xf32>
    %c0_6 = arith.constant 0 : index
    %c0_7 = arith.constant 0 : index
    %7 = vector.load %arg4[%c0_6, %c0_7] : memref<1x32xf32, #tpu.memory_space<vmem>>, vector<1x32xf32>
    %8 = vector.broadcast %7 : vector<1x32xf32> to vector<256x32xf32>
    %9 = arith.addf %6, %8 : vector<256x32xf32>
    %10 = vector.shape_cast %9 : vector<256x32xf32> to vector<16x16x32xf32>
    %c0_8 = arith.constant 0 : index
    %c0_9 = arith.constant 0 : index
    %c0_10 = arith.constant 0 : index
    %c0_11 = arith.constant 0 : index
    %11 = vector.load %arg7[%c0_8, %c0_9, %c0_10, %c0_11] : memref<1x16x16x32xf32, #tpu.memory_space<vmem>>, vector<1x16x16x32xf32>
    %12 = vector.shape_cast %11 : vector<1x16x16x32xf32> to vector<16x16x32xf32>
    %13 = vector.shape_cast %10 : vector<16x16x32xf32> to vector<1x16x16x32xf32>
    tpu.vector_store %arg7[%c0_8, %c0_9, %c0_10, %c0_11], %13 {strides = array<i32>} : memref<1x16x16x32xf32, #tpu.memory_space<vmem>>, vector<1x16x16x32xf32>,
    %c0_i32 = arith.constant 0 : i32
    %14 = arith.cmpi eq, %arg1, %c0_i32 : i32
    %15 = arith.extui %14 : i1 to i32
    %c0_i32_12 = arith.constant 0 : i32
    %16 = arith.cmpi ne, %15, %c0_i32_12 : i32
    scf.if %16 {
      %cst_59 = arith.constant 0.000000e+00 : f32
      %71 = vector.broadcast %cst_59 : f32 to vector<3x8x8x32xf32>
      %c0_60 = arith.constant 0 : index
      %c0_61 = arith.constant 0 : index
      %c0_62 = arith.constant 0 : index
      %c0_63 = arith.constant 0 : index
      %72 = vector.load %arg8[%c0_60, %c0_61, %c0_62, %c0_63] : memref<3x8x8x32xf32, #tpu.memory_space<vmem>>, vector<3x8x8x32xf32>
      tpu.vector_store %arg8[%c0_60, %c0_61, %c0_62, %c0_63], %71 {strides = array<i32>} : memref<3x8x8x32xf32, #tpu.memory_space<vmem>>, vector<3x8x8x32xf32>,
    } else {
    }
    %c0_13 = arith.constant 0 : index
    %c0_14 = arith.constant 0 : index
    %c0_15 = arith.constant 0 : index
    %17 = vector.load %arg6[%c0_13, %c0_14, %c0_15] : memref<3x8x16xf32, #tpu.memory_space<vmem>>, vector<1x8x16xf32>
    %18 = vector.shape_cast %17 : vector<1x8x16xf32> to vector<8x16xf32>
    %19 = vector.shape_cast %18 : vector<8x16xf32> to vector<1x8x16xf32>
    %20 = vector.shape_cast %19 : vector<1x8x16xf32> to vector<1x8x16xf32>
    %21 = vector.broadcast %20 : vector<1x8x16xf32> to vector<16x8x16xf32>
    "tpu.trace_start"() <{level = 10 : i32, message = "hvw,hwc->hvc"}> : () -> ()
    %cst_16 = arith.constant dense<0.000000e+00> : vector<16x8x32xf32>
    %22 = tpu.matmul %21, %10, %cst_16 {dimension_numbers = #tpu.dot_dimension_numbers<[2], [1], [1], [2], [0, 0, 0, 1, 1, 2], [0], [0]>} : vector<16x8x16xf32>, vector<16x16x32xf32>, vector<16x8x32xf32> -> vector<16x8x32xf32>
    "tpu.trace_stop"() : () -> ()
    %c0_17 = arith.constant 0 : index
    %c0_18 = arith.constant 0 : index
    %c0_19 = arith.constant 0 : index
    %23 = vector.load %arg5[%c0_17, %c0_18, %c0_19] : memref<3x16x8xf32, #tpu.memory_space<vmem>>, vector<1x16x8xf32>
    %24 = vector.shape_cast %23 : vector<1x16x8xf32> to vector<16x8xf32>
    %25 = tpu.transpose %24, [1, 0] : vector<16x8xf32> -> vector<8x16xf32>
    %26 = vector.shape_cast %22 : vector<16x8x32xf32> to vector<16x256xf32>
    %cst_20 = arith.constant dense<0.000000e+00> : vector<8x256xf32>
    %27 = tpu.matmul %25, %26, %cst_20 {dimension_numbers = #tpu.dot_dimension_numbers<[1], [0], [0], [1], [0, 0, 1, 1], [], []>} : vector<8x16xf32>, vector<16x256xf32>, vector<8x256xf32> -> vector<8x256xf32>
    %c0_21 = arith.constant 0 : index
    %c0_22 = arith.constant 0 : index
    %c0_23 = arith.constant 0 : index
    %c0_24 = arith.constant 0 : index
    %28 = vector.load %arg8[%c0_21, %c0_22, %c0_23, %c0_24] : memref<3x8x8x32xf32, #tpu.memory_space<vmem>>, vector<1x8x8x32xf32>
    %29 = vector.shape_cast %28 : vector<1x8x8x32xf32> to vector<8x8x32xf32>
    %30 = vector.shape_cast %27 : vector<8x256xf32> to vector<8x8x32xf32>
    %31 = arith.addf %29, %30 : vector<8x8x32xf32>
    %c0_25 = arith.constant 0 : index
    %c0_26 = arith.constant 0 : index
    %c0_27 = arith.constant 0 : index
    %c0_28 = arith.constant 0 : index
    %32 = vector.load %arg8[%c0_25, %c0_26, %c0_27, %c0_28] : memref<3x8x8x32xf32, #tpu.memory_space<vmem>>, vector<1x8x8x32xf32>
    %33 = vector.shape_cast %32 : vector<1x8x8x32xf32> to vector<8x8x32xf32>
    %34 = vector.shape_cast %31 : vector<8x8x32xf32> to vector<1x8x8x32xf32>
    tpu.vector_store %arg8[%c0_25, %c0_26, %c0_27, %c0_28], %34 {strides = array<i32>} : memref<3x8x8x32xf32, #tpu.memory_space<vmem>>, vector<1x8x8x32xf32>,
    %c1 = arith.constant 1 : index
    %c0_29 = arith.constant 0 : index
    %c0_30 = arith.constant 0 : index
    %35 = vector.load %arg6[%c1, %c0_29, %c0_30] : memref<3x8x16xf32, #tpu.memory_space<vmem>>, vector<1x8x16xf32>
    %36 = vector.shape_cast %35 : vector<1x8x16xf32> to vector<8x16xf32>
    %37 = vector.shape_cast %36 : vector<8x16xf32> to vector<1x8x16xf32>
    %38 = vector.shape_cast %37 : vector<1x8x16xf32> to vector<1x8x16xf32>
    %39 = vector.broadcast %38 : vector<1x8x16xf32> to vector<16x8x16xf32>
    "tpu.trace_start"() <{level = 10 : i32, message = "hvw,hwc->hvc"}> : () -> ()
    %cst_31 = arith.constant dense<0.000000e+00> : vector<16x8x32xf32>
    %40 = tpu.matmul %39, %10, %cst_31 {dimension_numbers = #tpu.dot_dimension_numbers<[2], [1], [1], [2], [0, 0, 0, 1, 1, 2], [0], [0]>} : vector<16x8x16xf32>, vector<16x16x32xf32>, vector<16x8x32xf32> -> vector<16x8x32xf32>
    "tpu.trace_stop"() : () -> ()
    %c1_32 = arith.constant 1 : index
    %c0_33 = arith.constant 0 : index
    %c0_34 = arith.constant 0 : index
    %41 = vector.load %arg5[%c1_32, %c0_33, %c0_34] : memref<3x16x8xf32, #tpu.memory_space<vmem>>, vector<1x16x8xf32>
    %42 = vector.shape_cast %41 : vector<1x16x8xf32> to vector<16x8xf32>
    %43 = tpu.transpose %42, [1, 0] : vector<16x8xf32> -> vector<8x16xf32>
    %44 = vector.shape_cast %40 : vector<16x8x32xf32> to vector<16x256xf32>
    %cst_35 = arith.constant dense<0.000000e+00> : vector<8x256xf32>
    %45 = tpu.matmul %43, %44, %cst_35 {dimension_numbers = #tpu.dot_dimension_numbers<[1], [0], [0], [1], [0, 0, 1, 1], [], []>} : vector<8x16xf32>, vector<16x256xf32>, vector<8x256xf32> -> vector<8x256xf32>
    %c1_36 = arith.constant 1 : index
    %c0_37 = arith.constant 0 : index
    %c0_38 = arith.constant 0 : index
    %c0_39 = arith.constant 0 : index
    %46 = vector.load %arg8[%c1_36, %c0_37, %c0_38, %c0_39] : memref<3x8x8x32xf32, #tpu.memory_space<vmem>>, vector<1x8x8x32xf32>
    %47 = vector.shape_cast %46 : vector<1x8x8x32xf32> to vector<8x8x32xf32>
    %48 = vector.shape_cast %45 : vector<8x256xf32> to vector<8x8x32xf32>
    %49 = arith.addf %47, %48 : vector<8x8x32xf32>
    %c1_40 = arith.constant 1 : index
    %c0_41 = arith.constant 0 : index
    %c0_42 = arith.constant 0 : index
    %c0_43 = arith.constant 0 : index
    %50 = vector.load %arg8[%c1_40, %c0_41, %c0_42, %c0_43] : memref<3x8x8x32xf32, #tpu.memory_space<vmem>>, vector<1x8x8x32xf32>
    %51 = vector.shape_cast %50 : vector<1x8x8x32xf32> to vector<8x8x32xf32>
    %52 = vector.shape_cast %49 : vector<8x8x32xf32> to vector<1x8x8x32xf32>
    tpu.vector_store %arg8[%c1_40, %c0_41, %c0_42, %c0_43], %52 {strides = array<i32>} : memref<3x8x8x32xf32, #tpu.memory_space<vmem>>, vector<1x8x8x32xf32>,
    %c2 = arith.constant 2 : index
    %c0_44 = arith.constant 0 : index
    %c0_45 = arith.constant 0 : index
    %53 = vector.load %arg6[%c2, %c0_44, %c0_45] : memref<3x8x16xf32, #tpu.memory_space<vmem>>, vector<1x8x16xf32>
    %54 = vector.shape_cast %53 : vector<1x8x16xf32> to vector<8x16xf32>
    %55 = vector.shape_cast %54 : vector<8x16xf32> to vector<1x8x16xf32>
    %56 = vector.shape_cast %55 : vector<1x8x16xf32> to vector<1x8x16xf32>
    %57 = vector.broadcast %56 : vector<1x8x16xf32> to vector<16x8x16xf32>
    "tpu.trace_start"() <{level = 10 : i32, message = "hvw,hwc->hvc"}> : () -> ()
    %cst_46 = arith.constant dense<0.000000e+00> : vector<16x8x32xf32>
    %58 = tpu.matmul %57, %10, %cst_46 {dimension_numbers = #tpu.dot_dimension_numbers<[2], [1], [1], [2], [0, 0, 0, 1, 1, 2], [0], [0]>} : vector<16x8x16xf32>, vector<16x16x32xf32>, vector<16x8x32xf32> -> vector<16x8x32xf32>
    "tpu.trace_stop"() : () -> ()
    %c2_47 = arith.constant 2 : index
    %c0_48 = arith.constant 0 : index
    %c0_49 = arith.constant 0 : index
    %59 = vector.load %arg5[%c2_47, %c0_48, %c0_49] : memref<3x16x8xf32, #tpu.memory_space<vmem>>, vector<1x16x8xf32>
    %60 = vector.shape_cast %59 : vector<1x16x8xf32> to vector<16x8xf32>
    %61 = tpu.transpose %60, [1, 0] : vector<16x8xf32> -> vector<8x16xf32>
    %62 = vector.shape_cast %58 : vector<16x8x32xf32> to vector<16x256xf32>
    %cst_50 = arith.constant dense<0.000000e+00> : vector<8x256xf32>
    %63 = tpu.matmul %61, %62, %cst_50 {dimension_numbers = #tpu.dot_dimension_numbers<[1], [0], [0], [1], [0, 0, 1, 1], [], []>} : vector<8x16xf32>, vector<16x256xf32>, vector<8x256xf32> -> vector<8x256xf32>
    %c2_51 = arith.constant 2 : index
    %c0_52 = arith.constant 0 : index
    %c0_53 = arith.constant 0 : index
    %c0_54 = arith.constant 0 : index
    %64 = vector.load %arg8[%c2_51, %c0_52, %c0_53, %c0_54] : memref<3x8x8x32xf32, #tpu.memory_space<vmem>>, vector<1x8x8x32xf32>
    %65 = vector.shape_cast %64 : vector<1x8x8x32xf32> to vector<8x8x32xf32>
    %66 = vector.shape_cast %63 : vector<8x256xf32> to vector<8x8x32xf32>
    %67 = arith.addf %65, %66 : vector<8x8x32xf32>
    %c2_55 = arith.constant 2 : index
    %c0_56 = arith.constant 0 : index
    %c0_57 = arith.constant 0 : index
    %c0_58 = arith.constant 0 : index
    %68 = vector.load %arg8[%c2_55, %c0_56, %c0_57, %c0_58] : memref<3x8x8x32xf32, #tpu.memory_space<vmem>>, vector<1x8x8x32xf32>
    %69 = vector.shape_cast %68 : vector<1x8x8x32xf32> to vector<8x8x32xf32>
    %70 = vector.shape_cast %67 : vector<8x8x32xf32> to vector<1x8x8x32xf32>
    tpu.vector_store %arg8[%c2_55, %c0_56, %c0_57, %c0_58], %70 {strides = array<i32>} : memref<3x8x8x32xf32, #tpu.memory_space<vmem>>, vector<1x8x8x32xf32>,
    return
  }
  func.func @transform_0(%arg0: i32, %arg1: i32) -> (i32, i32, i32, i32) {
    %c0_i32 = arith.constant 0 : i32
    %c0_i32_0 = arith.constant 0 : i32
    %c0_i32_1 = arith.constant 0 : i32
    return %arg0, %arg1, %c0_i32, %c0_i32_0 : i32, i32, i32, i32
  }
  func.func @transform_1(%arg0: i32, %arg1: i32) -> (i32, i32) {
    %c0_i32 = arith.constant 0 : i32
    %c0_i32_0 = arith.constant 0 : i32
    %c0_i32_1 = arith.constant 0 : i32
    return %c0_i32, %c0_i32_0 : i32, i32
  }
  func.func @transform_2(%arg0: i32, %arg1: i32) -> (i32, i32) {
    %c0_i32 = arith.constant 0 : i32
    %c0_i32_0 = arith.constant 0 : i32
    %c0_i32_1 = arith.constant 0 : i32
    return %c0_i32, %c0_i32_0 : i32, i32
  }
  func.func @transform_3(%arg0: i32, %arg1: i32) -> (i32, i32, i32) {
    %c0_i32 = arith.constant 0 : i32
    %c0_i32_0 = arith.constant 0 : i32
    %c0_i32_1 = arith.constant 0 : i32
    return %c0_i32, %arg1, %c0_i32_0 : i32, i32, i32
  }
  func.func @transform_4(%arg0: i32, %arg1: i32) -> (i32, i32, i32) {
    %c0_i32 = arith.constant 0 : i32
    %c0_i32_0 = arith.constant 0 : i32
    %c0_i32_1 = arith.constant 0 : i32
    %c0_i32_2 = arith.constant 0 : i32
    return %c0_i32, %c0_i32_0, %c0_i32_1 : i32, i32, i32
  }
  func.func @transform_5(%arg0: i32, %arg1: i32) -> (i32, i32, i32, i32) {
    %c0_i32 = arith.constant 0 : i32
    %c0_i32_0 = arith.constant 0 : i32
    %c0_i32_1 = arith.constant 0 : i32
    return %arg0, %arg1, %c0_i32, %c0_i32_0 : i32, i32, i32, i32
  }
  func.func @transform_6(%arg0: i32, %arg1: i32) -> (i32, i32, i32, i32) {
    %c0_i32 = arith.constant 0 : i32
    %c0_i32_0 = arith.constant 0 : i32
    %c0_i32_1 = arith.constant 0 : i32
    %c0_i32_2 = arith.constant 0 : i32
    return %arg0, %c0_i32, %c0_i32_0, %c0_i32_1 : i32, i32, i32, i32
  }
}

</mosaic_0001>

<llo_original>
// kernel: tpu_custom_call.1
$region0: #{tpu_custom_call.1}
  #allocation0 [shape = 'u32[]', space=smem, size = 0x4, offset = 0x4, fixed_abs, tag = 'smem constant byte address 0x4 - core index']
  #allocation1 [shape = 'u32[144,128]{1,0:T(1,128)}', space=vmem, size = 0x12000, scoped, tag = 'internal scratch']
  %s0 = inlined_call_operand.vmem [shape: f32[2,16,16,4], index: 0, kind: input, shape index: {}]
  %s1 = inlined_call_operand.vmem [shape: f32[4,32], index: 1, kind: input, shape index: {}]
  %s2 = inlined_call_operand.vmem [shape: f32[1,32], index: 2, kind: input, shape index: {}]
  %s3 = inlined_call_operand.vmem [shape: f32[3,16,8], index: 3, kind: input, shape index: {}]
  %s4 = inlined_call_operand.vmem [shape: f32[3,8,16], index: 4, kind: input, shape index: {}]
  %s5 = inlined_call_operand.hbm [shape: f32[2,16,16,32], index: 5, kind: output, shape index: {0}]
  %s6 = inlined_call_operand.hbm [shape: f32[6,8,8,32], index: 6, kind: output, shape index: {1}]
  %7 = xla_tuple %s5, %s6
  %s8 = sld [smem:[#allocation0]]
  $region65: #{tpu_custom_call.1} parent=0
    _
  %s10 = ssub.s32 1, %s8
  %s11 = scalar_select 0, %s10, %s8
  $region1: #{tpu_custom_call.1} parent=0
    #allocation2 [shape = 'u8[262144]{0}', space=vmem, size = 0x40000, scoped, tag = 'output window, operand 0']
    #allocation3 [shape = 's32[2]{0}', space=sflag, size = 0x8, scoped, tag = 'scoped memory for tpu_custom_call.1']
    #allocation4 [shape = 'u8[196608]{0}', space=vmem, size = 0x30000, scoped, tag = 'output window, operand 1']
    #allocation5 [shape = 's32[2]{0}', space=sflag, size = 0x8, scoped, tag = 'scoped memory for tpu_custom_call.1']
    %12 = vsyncpa [#allocation3], 0
    %s13 = scalar_lea.sflag [#allocation3], 1
    %14 = vsyncpa %s13, 0
    %15 = vsyncpa [#allocation5], 0
    %s16 = scalar_lea.sflag [#allocation5], 1
    %17 = vsyncpa %s16, 0
    loop: start=0, step=1, limit=4
    $region2: #{tpu_custom_call.1} parent=1 // loop_pre_header
      _
    $region3: #{tpu_custom_call.1} parent=1 // loop_header
      %s19 = sphi 0, %s23
      %p20 = scmp.ge.s32.totalorder %s19, 4
      %s26 = sphi 0, %s38
      %s27 = sphi 0, %s34
      %s28 = sphi 0, %s26
      %s29 = sphi 0, %s27
      %s30 = sphi 0, %s28
      %s31 = sphi 0, %s29
      %s43 = sphi 0, %s45
      %s46 = sphi 0, %s43
      %s47 = sphi 0, %s46
      %s63 = sphi 0, %s47
      %s67 = sphi 0, %s67
      %s69 = sphi 0, %s67
      %s70 = sphi 0, %s69
      %s84 = sphi 0, %s70
      %s88 = sphi 0, %s88
      %s90 = sphi 0, %s88
      %s91 = sphi 0, %s90
      %s105 = sphi 0, %s91
      %s111 = sphi 0, %s113
      %s114 = sphi 0, %s111
      %s115 = sphi 0, %s114
      %s131 = sphi 0, %s115
      %s135 = sphi 0, %s135
      %s137 = sphi 0, %s135
      %s138 = sphi 0, %s137
      %s152 = sphi 0, %s138
      %s160 = sphi 0, %s162
      %s163 = sphi 0, %s160
      %s164 = sphi 0, %s163
      %s180 = sphi 0, %s164
      %s186 = sphi 0, %s188
      %s189 = sphi 0, %s186
      %s190 = sphi 0, %s189
      %s206 = sphi 0, %s190
    $region4: #{tpu_custom_call.1} parent=1 // loop_header_branch
      %22 = sbr.rel (%p20) target = $region8
    $region5: #{tpu_custom_call.1} parent=1 // loop_body
      %s24 = ssub.s32 %s19, 1
      %s25 = ssub.s32 %s19, 2
      %s32 = sadd.s32 1, %s27
      %p33 = scmp.ge.s32.totalorder %s32, 1
      %s34 = scalar_select %p33, 0, %s32
      %s35 = sadd.s32 1, %s26
      %s36 = scalar_select %p33, %s35, %s26
      %p37 = scmp.ge.s32.totalorder %s36, 2
      %s38 = scalar_select %p37, 0, %s36
      %s39 = ssub.s32 %s26, %s38
      %s40 = ssub.s32 %s27, %s34
      %s41 = sor.u32 %s39, %s40
      %p42 = scmp.eq.s32.totalorder %s41, 0
      %s44 = sadd.s32 %s43, 1
      %s45 = scalar_select %p42, %s43, %s44
      %p48 = pneg %p42
      %p49 = scmp.eq.s32.totalorder %s19, 1
      %p50 = por %p48, %p49
      %p51 = scmp.ne.s32.totalorder %s43, %s46
      %p52 = scmp.eq.s32.totalorder %s19, 0
      %p53 = por %p51, %p52
      %p54 = scmp.ne.s32.totalorder %s43, %s46
      %p55 = scmp.eq.s32.totalorder %s24, 1
      %p56 = por %p54, %p55
      %p57 = scmp.ne.s32.totalorder %s46, %s47
      %p58 = scmp.eq.s32.totalorder %s24, 0
      %p59 = por %p57, %p58
      %p60 = scmp.ne.s32.totalorder %s46, %s47
      %p61 = scmp.eq.s32.totalorder %s25, 1
      %p62 = por %p60, %p61
      %p64 = scmp.ne.s32.totalorder %s47, %s63
      %p65 = scmp.eq.s32.totalorder %s25, 0
      %p66 = por %p64, %p65
      %s68 = sadd.s32 %s67, 1
      %p71 = scmp.eq.s32.totalorder %s19, 1
      %p72 = scmp.ne.s32.totalorder %s67, %s69
      %p73 = scmp.eq.s32.totalorder %s19, 0
      %p74 = por %p72, %p73
      %p75 = scmp.ne.s32.totalorder %s67, %s69
      %p76 = scmp.eq.s32.totalorder %s24, 1
      %p77 = por %p75, %p76
      %p78 = scmp.ne.s32.totalorder %s69, %s70
      %p79 = scmp.eq.s32.totalorder %s24, 0
      %p80 = por %p78, %p79
      %p81 = scmp.ne.s32.totalorder %s69, %s70
      %p82 = scmp.eq.s32.totalorder %s25, 1
      %p83 = por %p81, %p82
      %p85 = scmp.ne.s32.totalorder %s70, %s84
      %p86 = scmp.eq.s32.totalorder %s25, 0
      %p87 = por %p85, %p86
      %s89 = sadd.s32 %s88, 1
      %p92 = scmp.eq.s32.totalorder %s19, 1
      %p93 = scmp.ne.s32.totalorder %s88, %s90
      %p94 = scmp.eq.s32.totalorder %s19, 0
      %p95 = por %p93, %p94
      %p96 = scmp.ne.s32.totalorder %s88, %s90
      %p97 = scmp.eq.s32.totalorder %s24, 1
      %p98 = por %p96, %p97
      %p99 = scmp.ne.s32.totalorder %s90, %s91
      %p100 = scmp.eq.s32.totalorder %s24, 0
      %p101 = por %p99, %p100
      %p102 = scmp.ne.s32.totalorder %s90, %s91
      %p103 = scmp.eq.s32.totalorder %s25, 1
      %p104 = por %p102, %p103
      %p106 = scmp.ne.s32.totalorder %s91, %s105
      %p107 = scmp.eq.s32.totalorder %s25, 0
      %p108 = por %p106, %p107
      %s109 = ssub.s32 %s27, %s34
      %p110 = scmp.eq.s32.totalorder %s109, 0
      %s112 = sadd.s32 %s111, 1
      %s113 = scalar_select %p110, %s111, %s112
      %p116 = pneg %p110
      %p117 = scmp.eq.s32.totalorder %s19, 1
      %p118 = por %p116, %p117
      %p119 = scmp.ne.s32.totalorder %s111, %s114
      %p120 = scmp.eq.s32.totalorder %s19, 0
      %p121 = por %p119, %p120
      %p122 = scmp.ne.s32.totalorder %s111, %s114
      %p123 = scmp.eq.s32.totalorder %s24, 1
      %p124 = por %p122, %p123
      %p125 = scmp.ne.s32.totalorder %s114, %s115
      %p126 = scmp.eq.s32.totalorder %s24, 0
      %p127 = por %p125, %p126
      %p128 = scmp.ne.s32.totalorder %s114, %s115
      %p129 = scmp.eq.s32.totalorder %s25, 1
      %p130 = por %p128, %p129
      %p132 = scmp.ne.s32.totalorder %s115, %s131
      %p133 = scmp.eq.s32.totalorder %s25, 0
      %p134 = por %p132, %p133
      %s136 = sadd.s32 %s135, 1
      %p139 = scmp.eq.s32.totalorder %s19, 1
      %p140 = scmp.ne.s32.totalorder %s135, %s137
      %p141 = scmp.eq.s32.totalorder %s19, 0
      %p142 = por %p140, %p141
      %p143 = scmp.ne.s32.totalorder %s135, %s137
      %p144 = scmp.eq.s32.totalorder %s24, 1
      %p145 = por %p143, %p144
      %p146 = scmp.ne.s32.totalorder %s137, %s138
      %p147 = scmp.eq.s32.totalorder %s24, 0
      %p148 = por %p146, %p147
      %p149 = scmp.ne.s32.totalorder %s137, %s138
      %p150 = scmp.eq.s32.totalorder %s25, 1
      %p151 = por %p149, %p150
      %p153 = scmp.ne.s32.totalorder %s138, %s152
      %p154 = scmp.eq.s32.totalorder %s25, 0
      %p155 = por %p153, %p154
      %s156 = ssub.s32 %s26, %s38
      %s157 = ssub.s32 %s27, %s34
      %s158 = sor.u32 %s156, %s157
      %p159 = scmp.eq.s32.totalorder %s158, 0
      %s161 = sadd.s32 %s160, 1
      %s162 = scalar_select %p159, %s160, %s161
      %p165 = pneg %p159
      %p166 = scmp.eq.s32.totalorder %s19, 1
      %p167 = por %p165, %p166
      %p168 = scmp.ne.s32.totalorder %s160, %s163
      %p169 = scmp.eq.s32.totalorder %s19, 0
      %p170 = por %p168, %p169
      %p171 = scmp.ne.s32.totalorder %s160, %s163
      %p172 = scmp.eq.s32.totalorder %s24, 1
      %p173 = por %p171, %p172
      %p174 = scmp.ne.s32.totalorder %s163, %s164
      %p175 = scmp.eq.s32.totalorder %s24, 0
      %p176 = por %p174, %p175
      %p177 = scmp.ne.s32.totalorder %s163, %s164
      %p178 = scmp.eq.s32.totalorder %s25, 1
      %p179 = por %p177, %p178
      %p181 = scmp.ne.s32.totalorder %s164, %s180
      %p182 = scmp.eq.s32.totalorder %s25, 0
      %p183 = por %p181, %p182
      %s184 = ssub.s32 %s26, %s38
      %p185 = scmp.eq.s32.totalorder %s184, 0
      %s187 = sadd.s32 %s186, 1
      %s188 = scalar_select %p185, %s186, %s187
      %p191 = pneg %p185
      %p192 = scmp.eq.s32.totalorder %s19, 1
      %p193 = por %p191, %p192
      %p194 = scmp.ne.s32.totalorder %s186, %s189
      %p195 = scmp.eq.s32.totalorder %s19, 0
      %p196 = por %p194, %p195
      %p197 = scmp.ne.s32.totalorder %s186, %s189
      %p198 = scmp.eq.s32.totalorder %s24, 1
      %p199 = por %p197, %p198
      %p200 = scmp.ne.s32.totalorder %s189, %s190
      %p201 = scmp.eq.s32.totalorder %s24, 0
      %p202 = por %p200, %p201
      %p203 = scmp.ne.s32.totalorder %s189, %s190
      %p204 = scmp.eq.s32.totalorder %s25, 1
      %p205 = por %p203, %p204
      %p207 = scmp.ne.s32.totalorder %s190, %s206
      %p208 = scmp.eq.s32.totalorder %s25, 0
      %p209 = por %p207, %p208
      %p210 = scmp.le.s32.totalorder 1, %s19
      %p211 = scmp.lt.s32.totalorder %s19, 3
      %p212 = pnand %p210, %p211
      %p213 = pneg %p212
      // Predicated region
      $region9: #{tpu_custom_call.1} parent=5 // pred_check
        _
      $region10: #{tpu_custom_call.1} parent=5 // pred_check_branch
        %215 = sbr.rel (%p212) target = $region12
      $region11: #{tpu_custom_call.1} parent=5 // pred_region
        %s216 = ssub.s32 %s19, 1
        // Predicated region
        $region13: #{tpu_custom_call.1} parent=11 // pred_check
          %p217 = pneg %p80
        $region14: #{tpu_custom_call.1} parent=11 // pred_check_branch
          %219 = sbr.rel (%p217) target = $region16
        $region15: #{tpu_custom_call.1} parent=11 // pred_region
          _
        $region16: #{tpu_custom_call.1} parent=11 // pred_fallthru
          _
        // Predicated region
        $region17: #{tpu_custom_call.1} parent=11 // pred_check
          %p220 = pneg %p101
        $region18: #{tpu_custom_call.1} parent=11 // pred_check_branch
          %222 = sbr.rel (%p220) target = $region20
        $region19: #{tpu_custom_call.1} parent=11 // pred_region
          _
        $region20: #{tpu_custom_call.1} parent=11 // pred_fallthru
          _
        // Predicated region
        $region21: #{tpu_custom_call.1} parent=11 // pred_check
          %p223 = pneg %p127
        $region22: #{tpu_custom_call.1} parent=11 // pred_check_branch
          %225 = sbr.rel (%p223) target = $region24
        $region23: #{tpu_custom_call.1} parent=11 // pred_region
          %s226 = smul.u32 2, %s29
          %p227 = scmp.lt.s32.totalorder %s226, 1
          %s228 = scalar_select %p227, %s226, 1
          %s229 = smul.addr %s228, 8
          %s230 = scalar_lea.vmem %s3, %s229
          %s231 = smul.u32 2, %s29
        $region24: #{tpu_custom_call.1} parent=11 // pred_fallthru
          _
        // Predicated region
        $region25: #{tpu_custom_call.1} parent=11 // pred_check
          %p232 = pneg %p148
        $region26: #{tpu_custom_call.1} parent=11 // pred_check_branch
          %234 = sbr.rel (%p232) target = $region28
        $region27: #{tpu_custom_call.1} parent=11 // pred_region
          _
        $region28: #{tpu_custom_call.1} parent=11 // pred_fallthru
          _
      $region12: #{tpu_custom_call.1} parent=5 // pred_fallthru
        _
      %p235 = scmp.lt.s32.totalorder %s19, 2
      // Predicated region
      $region29: #{tpu_custom_call.1} parent=5 // pred_check
        %p236 = pneg %p235
      $region30: #{tpu_custom_call.1} parent=5 // pred_check_branch
        %238 = sbr.rel (%p236) target = $region32
      $region31: #{tpu_custom_call.1} parent=5 // pred_region
        // Predicated region
        $region33: #{tpu_custom_call.1} parent=31 // pred_check
          %p239 = pneg %p53
        $region34: #{tpu_custom_call.1} parent=31 // pred_check_branch
          %241 = sbr.rel (%p239) target = $region36
        $region35: #{tpu_custom_call.1} parent=31 // pred_region
          %s242 = smul.u32 16, %s27
          %p243 = scmp.lt.s32.totalorder %s26, 1
          %s244 = scalar_select %p243, %s26, 1
          %p245 = scmp.lt.s32.totalorder %s242, 15
          %s246 = scalar_select %p245, %s242, 15
          %s247 = smul.addr %s246, 2
          %s248 = smul.addr %s244, 32
          %s249 = sadd.s32 %s247, %s248
          %s250 = smul.addr %s249, 8
          %s251 = scalar_lea.vmem %s0, %s250
          %s252 = smul.u32 16, %s27
        $region36: #{tpu_custom_call.1} parent=31 // pred_fallthru
          _
      $region32: #{tpu_custom_call.1} parent=5 // pred_fallthru
        _
      %p253 = scmp.le.s32.totalorder 1, %s19
      %p254 = scmp.lt.s32.totalorder %s19, 3
      %p255 = pnand %p253, %p254
      %p256 = pneg %p255
      // Predicated region
      $region37: #{tpu_custom_call.1} parent=5 // pred_check
        _
      $region38: #{tpu_custom_call.1} parent=5 // pred_check_branch
        %258 = sbr.rel (%p255) target = $region40
      $region39: #{tpu_custom_call.1} parent=5 // pred_region
        %s259 = ssub.s32 %s19, 1
        %s260 = smul.u32 16, %s29
        %p261 = scmp.lt.s32.totalorder %s28, 1
        %s262 = scalar_select %p261, %s28, 1
        %p263 = scmp.lt.s32.totalorder %s260, 15
        %s264 = scalar_select %p263, %s260, 15
        %s265 = smul.addr %s264, 2
        %s266 = smul.addr %s262, 32
        %s267 = sadd.s32 %s265, %s266
        %s268 = smul.addr %s267, 8
        %s269 = scalar_lea.vmem %s0, %s268
        %p270 = pneg %p59
        %p271 = pneg %p56
        %p272 = pneg %p80
        %p273 = pneg %p77
        %p274 = pneg %p101
        %p275 = pneg %p98
        %s276 = smul.u32 2, %s29
        %p277 = scmp.lt.s32.totalorder %s276, 1
        %s278 = scalar_select %p277, %s276, 1
        %s279 = smul.addr %s278, 8
        %s280 = scalar_lea.vmem %s3, %s279
        %p281 = pneg %p127
        %p282 = pneg %p124
        %p283 = pneg %p148
        %p284 = pneg %p145
        %p285 = pneg %p176
        %p286 = pneg %p173
        %s287 = sand.u32 %s163, 1
        %s288 = scalar_lea.sflag [#allocation3], %s287
        %s289 = sand.u32 %s163, 1
        %s290 = smul.addr %s289, 256
        %s291 = scalar_lea.vmem [#allocation2], %s290
        %p292 = pneg %p202
        %p293 = pneg %p199
        %s294 = sand.u32 %s189, 1
        %s295 = scalar_lea.sflag [#allocation5], %s294
        %s296 = sand.u32 %s189, 1
        %s297 = smul.addr %s296, 192
        %s298 = scalar_lea.vmem [#allocation4], %s297
        %s299 = smul.u32 16, %s29
        %p300 = scmp.lt.s32.totalorder %s28, 1
        %s301 = scalar_select %p300, %s28, 1
        %p302 = scmp.lt.s32.totalorder %s299, 15
        %s303 = scalar_select %p302, %s299, 15
        %s304 = smul.addr %s303, 2
        %s305 = smul.addr %s301, 32
        %s306 = sadd.s32 %s304, %s305
        %s307 = smul.addr %s306, 8
        %s308 = scalar_lea.vmem %s0, %s307
        %s309 = smul.u32 16, %s29
        %s310 = smul.u32 2, %s29
        %p311 = scmp.lt.s32.totalorder %s310, 1
        %s312 = scalar_select %p311, %s310, 1
        %s313 = smul.addr %s312, 8
        %s314 = scalar_lea.vmem %s3, %s313
        %s315 = smul.u32 2, %s29
        %s316 = smul.u32 16, %s29
        %s317 = smul.u32 3, %s28
        %v318 = vld [vmem:[%s308] sm:$0xff]
        %v319 = vld [vmem:[%s308 + $0x8] sm:$0xff]
        %v320 = vld [vmem:[%s308 + $0x10] sm:$0xff]
        %v321 = vld [vmem:[%s308 + $0x18] sm:$0xff]
        %v322 = vld [vmem:[%s308 + $0x20] sm:$0xff]
        %v323 = vld [vmem:[%s308 + $0x28] sm:$0xff]
        %v324 = vld [vmem:[%s308 + $0x30] sm:$0xff]
        %v325 = vld [vmem:[%s308 + $0x38] sm:$0xff]
        %v326 = vld [vmem:[%s308 + $0x40] sm:$0xff]
        %v327 = vld [vmem:[%s308 + $0x48] sm:$0xff]
        %v328 = vld [vmem:[%s308 + $0x50] sm:$0xff]
        %v329 = vld [vmem:[%s308 + $0x58] sm:$0xff]
        %v330 = vld [vmem:[%s308 + $0x60] sm:$0xff]
        %v331 = vld [vmem:[%s308 + $0x68] sm:$0xff]
        %v332 = vld [vmem:[%s308 + $0x70] sm:$0xff]
        %v333 = vld [vmem:[%s308 + $0x78] sm:$0xff]
        %v334 = vld [vmem:[%s308 + $0x80] sm:$0xff]
        %v335 = vld [vmem:[%s308 + $0x88] sm:$0xff]
        %v336 = vld [vmem:[%s308 + $0x90] sm:$0xff]
        %v337 = vld [vmem:[%s308 + $0x98] sm:$0xff]
        %v338 = vld [vmem:[%s308 + $0xa0] sm:$0xff]
        %v339 = vld [vmem:[%s308 + $0xa8] sm:$0xff]
        %v340 = vld [vmem:[%s308 + $0xb0] sm:$0xff]
        %v341 = vld [vmem:[%s308 + $0xb8] sm:$0xff]
        %v342 = vld [vmem:[%s308 + $0xc0] sm:$0xff]
        %v343 = vld [vmem:[%s308 + $0xc8] sm:$0xff]
        %v344 = vld [vmem:[%s308 + $0xd0] sm:$0xff]
        %v345 = vld [vmem:[%s308 + $0xd8] sm:$0xff]
        %v346 = vld [vmem:[%s308 + $0xe0] sm:$0xff]
        %v347 = vld [vmem:[%s308 + $0xe8] sm:$0xff]
        %v348 = vld [vmem:[%s308 + $0xf0] sm:$0xff]
        %v349 = vld [vmem:[%s308 + $0xf8] sm:$0xff]
        %v350 = vmax.f32 %v318, 0.0
        %v351 = vmax.f32 %v319, 0.0
        %v352 = vmax.f32 %v320, 0.0
        %v353 = vmax.f32 %v321, 0.0
        %v354 = vmax.f32 %v322, 0.0
        %v355 = vmax.f32 %v323, 0.0
        %v356 = vmax.f32 %v324, 0.0
        %v357 = vmax.f32 %v325, 0.0
        %v358 = vmax.f32 %v326, 0.0
        %v359 = vmax.f32 %v327, 0.0
        %v360 = vmax.f32 %v328, 0.0
        %v361 = vmax.f32 %v329, 0.0
        %v362 = vmax.f32 %v330, 0.0
        %v363 = vmax.f32 %v331, 0.0
        %v364 = vmax.f32 %v332, 0.0
        %v365 = vmax.f32 %v333, 0.0
        %v366 = vmax.f32 %v334, 0.0
        %v367 = vmax.f32 %v335, 0.0
        %v368 = vmax.f32 %v336, 0.0
        %v369 = vmax.f32 %v337, 0.0
        %v370 = vmax.f32 %v338, 0.0
        %v371 = vmax.f32 %v339, 0.0
        %v372 = vmax.f32 %v340, 0.0
        %v373 = vmax.f32 %v341, 0.0
        %v374 = vmax.f32 %v342, 0.0
        %v375 = vmax.f32 %v343, 0.0
        %v376 = vmax.f32 %v344, 0.0
        %v377 = vmax.f32 %v345, 0.0
        %v378 = vmax.f32 %v346, 0.0
        %v379 = vmax.f32 %v347, 0.0
        %v380 = vmax.f32 %v348, 0.0
        %v381 = vmax.f32 %v349, 0.0
        %v382 = vld [vmem:[%s1] sm:$0xf]
        %v383 = vld [vmem:[%s2] sm:$0x1]
        %v385 = vlaneseq
        %v386 = vshrl.u32 %v385, 7
        %v387 = vsub.s32 0, %v386
        %v388 = vrot.slane %v383, %v387
        %vm390 = vcmask 31744
        %v392 = vsel %vm390, %v350, 0
        %v395 = vsel %vm390, %v351, 0
        %v398 = vsel %vm390, %v352, 0
        %v401 = vsel %vm390, %v353, 0
        %v404 = vsel %vm390, %v354, 0
        %v407 = vsel %vm390, %v355, 0
        %v410 = vsel %vm390, %v356, 0
        %v413 = vsel %vm390, %v357, 0
        %v416 = vsel %vm390, %v358, 0
        %v419 = vsel %vm390, %v359, 0
        %v422 = vsel %vm390, %v360, 0
        %v425 = vsel %vm390, %v361, 0
        %v428 = vsel %vm390, %v362, 0
        %v431 = vsel %vm390, %v363, 0
        %v434 = vsel %vm390, %v364, 0
        %v437 = vsel %vm390, %v365, 0
        %v440 = vsel %vm390, %v366, 0
        %v443 = vsel %vm390, %v367, 0
        %v446 = vsel %vm390, %v368, 0
        %v449 = vsel %vm390, %v369, 0
        %v452 = vsel %vm390, %v370, 0
        %v455 = vsel %vm390, %v371, 0
        %v458 = vsel %vm390, %v372, 0
        %v461 = vsel %vm390, %v373, 0
        %v464 = vsel %vm390, %v374, 0
        %v467 = vsel %vm390, %v375, 0
        %v470 = vsel %vm390, %v376, 0
        %v473 = vsel %vm390, %v377, 0
        %v476 = vsel %vm390, %v378, 0
        %v479 = vsel %vm390, %v379, 0
        %v482 = vsel %vm390, %v380, 0
        %v485 = vsel %vm390, %v381, 0
        %vm487 = vcmask 1043456
        %v489 = vsel %vm487, %v382, 0
        %491 = vmatprep.subr.mxu0 0.0
        %492 = vmatpush1.msra.mxu0 %v489
        %493 = vmatprep.subr.mxu0 0.0
        %494 = vmatpush1.msra.mxu0 0.0
        %495 = vmatprep.subr.mxu0 0.0
        %496 = vmatpush1.msra.mxu0 0.0
        %497 = vmatprep.subr.mxu0 0.0
        %498 = vmatpush1.msra.mxu0 0.0
        %499 = vmatprep.subr.mxu0 0.0
        %500 = vmatpush1.msra.mxu0 0.0
        %501 = vmatprep.subr.mxu0 0.0
        %502 = vmatpush1.msra.mxu0 0.0
        %503 = vmatprep.subr.mxu0 0.0
        %504 = vmatpush1.msra.mxu0 0.0
        %505 = vmatprep.subr.mxu0 0.0
        %506 = vmatpush1.msra.mxu0 0.0
        %507 = vmatprep.subr.mxu0 0.0
        %508 = vmatpush1.msra.mxu0 0.0
        %509 = vmatprep.subr.mxu0 0.0
        %510 = vmatpush1.msra.mxu0 0.0
        %511 = vmatprep.subr.mxu0 0.0
        %512 = vmatpush1.msra.mxu0 0.0
        %513 = vmatprep.subr.mxu0 0.0
        %514 = vmatpush1.msra.mxu0 0.0
        %515 = vmatprep.subr.mxu0 0.0
        %516 = vmatpush1.msra.mxu0 0.0
        %517 = vmatprep.subr.mxu0 0.0
        %518 = vmatpush1.msra.mxu0 0.0
        %519 = vmatprep.subr.mxu0 0.0
        %520 = vmatpush1.msra.mxu0 0.0
        %521 = vmatprep.subr.mxu0 0.0
        %522 = vmatpush1.msra.mxu0 0.0
        %523 = vmatprep.subr.mxu0 0.0
        %524 = vmatpush1.msra.mxu0 0.0
        %525 = vmatprep.subr.mxu0 0.0
        %526 = vmatpush1.msra.mxu0 0.0
        %527 = vmatprep.subr.mxu0 0.0
        %528 = vmatpush1.msra.mxu0 0.0
        %529 = vmatprep.subr.mxu0 0.0
        %530 = vmatpush1.msra.mxu0 0.0
        %531 = vmatprep.subr.mxu0 0.0
        %532 = vmatpush1.msra.mxu0 0.0
        %533 = vmatprep.subr.mxu0 0.0
        %534 = vmatpush1.msra.mxu0 0.0
        %535 = vmatprep.subr.mxu0 0.0
        %536 = vmatpush1.msra.mxu0 0.0
        %537 = vmatprep.subr.mxu0 0.0
        %538 = vmatpush1.msra.mxu0 0.0
        %539 = vmatprep.subr.mxu0 0.0
        %540 = vmatpush1.msra.mxu0 0.0
        %541 = vmatprep.subr.mxu0 0.0
        %542 = vmatpush1.msra.mxu0 0.0
        %543 = vmatprep.subr.mxu0 0.0
        %544 = vmatpush1.msra.mxu0 0.0
        %545 = vmatprep.subr.mxu0 0.0
        %546 = vmatpush1.msra.mxu0 0.0
        %547 = vmatprep.subr.mxu0 0.0
        %548 = vmatpush1.msra.mxu0 0.0
        %549 = vmatprep.subr.mxu0 0.0
        %550 = vmatpush1.msra.mxu0 0.0
        %551 = vmatprep.subr.mxu0 0.0
        %552 = vmatpush1.msra.mxu0 0.0
        %553 = vmatprep.subr.mxu0 0.0
        %554 = vmatpush1.msra.mxu0 0.0
        %555 = vmatprep.mubr.f32.mxu0 0.0
        %556 = vmatmul.mubr.f32.gmra.mrb[0].mxu0 %v392
        %v557 = vpop.f32.mrb[0].mxu0
        %v558 = vadd.f32 %v388, %v557
        %v559 = vpop.f32.mrb[0].mxu0
        %560 = vmatprep.mubr.f32.mxu0 0.0
        %561 = vmatmul.mubr.f32.gmra.mrb[0].mxu0 %v395
        %v562 = vpop.f32.mrb[0].mxu0
        %v563 = vadd.f32 %v388, %v562
        %v564 = vpop.f32.mrb[0].mxu0
        %565 = vmatprep.mubr.f32.mxu0 0.0
        %566 = vmatmul.mubr.f32.gmra.mrb[0].mxu0 %v398
        %v567 = vpop.f32.mrb[0].mxu0
        %v568 = vadd.f32 %v388, %v567
        %v569 = vpop.f32.mrb[0].mxu0
        %570 = vmatprep.mubr.f32.mxu0 0.0
        %571 = vmatmul.mubr.f32.gmra.mrb[0].mxu0 %v401
        %v572 = vpop.f32.mrb[0].mxu0
        %v573 = vadd.f32 %v388, %v572
        %v574 = vpop.f32.mrb[0].mxu0
        %575 = vmatprep.mubr.f32.mxu0 0.0
        %576 = vmatmul.mubr.f32.gmra.mrb[0].mxu0 %v404
        %v577 = vpop.f32.mrb[0].mxu0
        %v578 = vadd.f32 %v388, %v577
        %v579 = vpop.f32.mrb[0].mxu0
        %580 = vmatprep.mubr.f32.mxu0 0.0
        %581 = vmatmul.mubr.f32.gmra.mrb[0].mxu0 %v407
        %v582 = vpop.f32.mrb[0].mxu0
        %v583 = vadd.f32 %v388, %v582
        %v584 = vpop.f32.mrb[0].mxu0
        %585 = vmatprep.mubr.f32.mxu0 0.0
        %586 = vmatmul.mubr.f32.gmra.mrb[0].mxu0 %v410
        %v587 = vpop.f32.mrb[0].mxu0
        %v588 = vadd.f32 %v388, %v587
        %v589 = vpop.f32.mrb[0].mxu0
        %590 = vmatprep.mubr.f32.mxu0 0.0
        %591 = vmatmul.mubr.f32.gmra.mrb[0].mxu0 %v413
        %v592 = vpop.f32.mrb[0].mxu0
        %v593 = vadd.f32 %v388, %v592
        %v594 = vpop.f32.mrb[0].mxu0
        %595 = vmatprep.mubr.f32.mxu0 0.0
        %596 = vmatmul.mubr.f32.gmra.mrb[0].mxu0 %v416
        %v597 = vpop.f32.mrb[0].mxu0
        %v598 = vadd.f32 %v388, %v597
        %v599 = vpop.f32.mrb[0].mxu0
        %600 = vmatprep.mubr.f32.mxu0 0.0
        %601 = vmatmul.mubr.f32.gmra.mrb[0].mxu0 %v419
        %v602 = vpop.f32.mrb[0].mxu0
        %v603 = vadd.f32 %v388, %v602
        %v604 = vpop.f32.mrb[0].mxu0
        %605 = vmatprep.mubr.f32.mxu0 0.0
        %606 = vmatmul.mubr.f32.gmra.mrb[0].mxu0 %v422
        %v607 = vpop.f32.mrb[0].mxu0
        %v608 = vadd.f32 %v388, %v607
        %v609 = vpop.f32.mrb[0].mxu0
        %610 = vmatprep.mubr.f32.mxu0 0.0
        %611 = vmatmul.mubr.f32.gmra.mrb[0].mxu0 %v425
        %v612 = vpop.f32.mrb[0].mxu0
        %v613 = vadd.f32 %v388, %v612
        %v614 = vpop.f32.mrb[0].mxu0
        %615 = vmatprep.mubr.f32.mxu0 0.0
        %616 = vmatmul.mubr.f32.gmra.mrb[0].mxu0 %v428
        %v617 = vpop.f32.mrb[0].mxu0
        %v618 = vadd.f32 %v388, %v617
        %v619 = vpop.f32.mrb[0].mxu0
        %620 = vmatprep.mubr.f32.mxu0 0.0
        %621 = vmatmul.mubr.f32.gmra.mrb[0].mxu0 %v431
        %v622 = vpop.f32.mrb[0].mxu0
        %v623 = vadd.f32 %v388, %v622
        %v624 = vpop.f32.mrb[0].mxu0
        %625 = vmatprep.mubr.f32.mxu0 0.0
        %626 = vmatmul.mubr.f32.gmra.mrb[0].mxu0 %v434
        %v627 = vpop.f32.mrb[0].mxu0
        %v628 = vadd.f32 %v388, %v627
        %v629 = vpop.f32.mrb[0].mxu0
        %630 = vmatprep.mubr.f32.mxu0 0.0
        %631 = vmatmul.mubr.f32.gmra.mrb[0].mxu0 %v437
        %v632 = vpop.f32.mrb[0].mxu0
        %v633 = vadd.f32 %v388, %v632
        %v634 = vpop.f32.mrb[0].mxu0
        %635 = vmatprep.mubr.f32.mxu0 0.0
        %636 = vmatmul.mubr.f32.gmra.mrb[0].mxu0 %v440
        %v637 = vpop.f32.mrb[0].mxu0
        %v638 = vadd.f32 %v388, %v637
        %v639 = vpop.f32.mrb[0].mxu0
        %640 = vmatprep.mubr.f32.mxu0 0.0
        %641 = vmatmul.mubr.f32.gmra.mrb[0].mxu0 %v443
        %v642 = vpop.f32.mrb[0].mxu0
        %v643 = vadd.f32 %v388, %v642
        %v644 = vpop.f32.mrb[0].mxu0
        %645 = vmatprep.mubr.f32.mxu0 0.0
        %646 = vmatmul.mubr.f32.gmra.mrb[0].mxu0 %v446
        %v647 = vpop.f32.mrb[0].mxu0
        %v648 = vadd.f32 %v388, %v647
        %v649 = vpop.f32.mrb[0].mxu0
        %650 = vmatprep.mubr.f32.mxu0 0.0
        %651 = vmatmul.mubr.f32.gmra.mrb[0].mxu0 %v449
        %v652 = vpop.f32.mrb[0].mxu0
        %v653 = vadd.f32 %v388, %v652
        %v654 = vpop.f32.mrb[0].mxu0
        %655 = vmatprep.mubr.f32.mxu0 0.0
        %656 = vmatmul.mubr.f32.gmra.mrb[0].mxu0 %v452
        %v657 = vpop.f32.mrb[0].mxu0
        %v658 = vadd.f32 %v388, %v657
        %v659 = vpop.f32.mrb[0].mxu0
        %660 = vmatprep.mubr.f32.mxu0 0.0
        %661 = vmatmul.mubr.f32.gmra.mrb[0].mxu0 %v455
        %v662 = vpop.f32.mrb[0].mxu0
        %v663 = vadd.f32 %v388, %v662
        %v664 = vpop.f32.mrb[0].mxu0
        %665 = vmatprep.mubr.f32.mxu0 0.0
        %666 = vmatmul.mubr.f32.gmra.mrb[0].mxu0 %v458
        %v667 = vpop.f32.mrb[0].mxu0
        %v668 = vadd.f32 %v388, %v667
        %v669 = vpop.f32.mrb[0].mxu0
        %670 = vmatprep.mubr.f32.mxu0 0.0
        %671 = vmatmul.mubr.f32.gmra.mrb[0].mxu0 %v461
        %v672 = vpop.f32.mrb[0].mxu0
        %v673 = vadd.f32 %v388, %v672
        %v674 = vpop.f32.mrb[0].mxu0
        %675 = vmatprep.mubr.f32.mxu0 0.0
        %676 = vmatmul.mubr.f32.gmra.mrb[0].mxu0 %v464
        %v677 = vpop.f32.mrb[0].mxu0
        %v678 = vadd.f32 %v388, %v677
        %v679 = vpop.f32.mrb[0].mxu0
        %680 = vmatprep.mubr.f32.mxu0 0.0
        %681 = vmatmul.mubr.f32.gmra.mrb[0].mxu0 %v467
        %v682 = vpop.f32.mrb[0].mxu0
        %v683 = vadd.f32 %v388, %v682
        %v684 = vpop.f32.mrb[0].mxu0
        %685 = vmatprep.mubr.f32.mxu0 0.0
        %686 = vmatmul.mubr.f32.gmra.mrb[0].mxu0 %v470
        %v687 = vpop.f32.mrb[0].mxu0
        %v688 = vadd.f32 %v388, %v687
        %v689 = vpop.f32.mrb[0].mxu0
        %690 = vmatprep.mubr.f32.mxu0 0.0
        %691 = vmatmul.mubr.f32.gmra.mrb[0].mxu0 %v473
        %v692 = vpop.f32.mrb[0].mxu0
        %v693 = vadd.f32 %v388, %v692
        %v694 = vpop.f32.mrb[0].mxu0
        %695 = vmatprep.mubr.f32.mxu0 0.0
        %696 = vmatmul.mubr.f32.gmra.mrb[0].mxu0 %v476
        %v697 = vpop.f32.mrb[0].mxu0
        %v698 = vadd.f32 %v388, %v697
        %v699 = vpop.f32.mrb[0].mxu0
        %700 = vmatprep.mubr.f32.mxu0 0.0
        %701 = vmatmul.mubr.f32.gmra.mrb[0].mxu0 %v479
        %v702 = vpop.f32.mrb[0].mxu0
        %v703 = vadd.f32 %v388, %v702
        %v704 = vpop.f32.mrb[0].mxu0
        %705 = vmatprep.mubr.f32.mxu0 0.0
        %706 = vmatmul.mubr.f32.gmra.mrb[0].mxu0 %v482
        %v707 = vpop.f32.mrb[0].mxu0
        %v708 = vadd.f32 %v388, %v707
        %v709 = vpop.f32.mrb[0].mxu0
        %710 = vmatprep.mubr.f32.mxu0 0.0
        %711 = vmatmul.mubr.f32.gmra.mrb[0].mxu0 %v485
        %v712 = vpop.f32.mrb[0].mxu0
        %v713 = vadd.f32 %v388, %v712
        %v714 = vpop.f32.mrb[0].mxu0
        %715 = vdwg.mxu0
        %vm716 = vcmask 261120
        %717 = vst.msk [vmem:[%s291] sm:$0xff] %vm716, %v558
        %718 = vst.msk [vmem:[%s291 + $0x8] sm:$0xff] %vm716, %v563
        %719 = vst.msk [vmem:[%s291 + $0x10] sm:$0xff] %vm716, %v568
        %720 = vst.msk [vmem:[%s291 + $0x18] sm:$0xff] %vm716, %v573
        %721 = vst.msk [vmem:[%s291 + $0x20] sm:$0xff] %vm716, %v578
        %722 = vst.msk [vmem:[%s291 + $0x28] sm:$0xff] %vm716, %v583
        %723 = vst.msk [vmem:[%s291 + $0x30] sm:$0xff] %vm716, %v588
        %724 = vst.msk [vmem:[%s291 + $0x38] sm:$0xff] %vm716, %v593
        %725 = vst.msk [vmem:[%s291 + $0x40] sm:$0xff] %vm716, %v598
        %726 = vst.msk [vmem:[%s291 + $0x48] sm:$0xff] %vm716, %v603
        %727 = vst.msk [vmem:[%s291 + $0x50] sm:$0xff] %vm716, %v608
        %728 = vst.msk [vmem:[%s291 + $0x58] sm:$0xff] %vm716, %v613
        %729 = vst.msk [vmem:[%s291 + $0x60] sm:$0xff] %vm716, %v618
        %730 = vst.msk [vmem:[%s291 + $0x68] sm:$0xff] %vm716, %v623
        %731 = vst.msk [vmem:[%s291 + $0x70] sm:$0xff] %vm716, %v628
        %732 = vst.msk [vmem:[%s291 + $0x78] sm:$0xff] %vm716, %v633
        %733 = vst.msk [vmem:[%s291 + $0x80] sm:$0xff] %vm716, %v638
        %734 = vst.msk [vmem:[%s291 + $0x88] sm:$0xff] %vm716, %v643
        %735 = vst.msk [vmem:[%s291 + $0x90] sm:$0xff] %vm716, %v648
        %736 = vst.msk [vmem:[%s291 + $0x98] sm:$0xff] %vm716, %v653
        %737 = vst.msk [vmem:[%s291 + $0xa0] sm:$0xff] %vm716, %v658
        %738 = vst.msk [vmem:[%s291 + $0xa8] sm:$0xff] %vm716, %v663
        %739 = vst.msk [vmem:[%s291 + $0xb0] sm:$0xff] %vm716, %v668
        %740 = vst.msk [vmem:[%s291 + $0xb8] sm:$0xff] %vm716, %v673
        %741 = vst.msk [vmem:[%s291 + $0xc0] sm:$0xff] %vm716, %v678
        %742 = vst.msk [vmem:[%s291 + $0xc8] sm:$0xff] %vm716, %v683
        %743 = vst.msk [vmem:[%s291 + $0xd0] sm:$0xff] %vm716, %v688
        %744 = vst.msk [vmem:[%s291 + $0xd8] sm:$0xff] %vm716, %v693
        %745 = vst.msk [vmem:[%s291 + $0xe0] sm:$0xff] %vm716, %v698
        %746 = vst.msk [vmem:[%s291 + $0xe8] sm:$0xff] %vm716, %v703
        %747 = vst.msk [vmem:[%s291 + $0xf0] sm:$0xff] %vm716, %v708
        %748 = vst.msk [vmem:[%s291 + $0xf8] sm:$0xff] %vm716, %v713
        %p749 = scmp.eq.s32.totalorder %s29, 0
        // Predicated region
        $region41: #{tpu_custom_call.1} parent=39 // pred_check
          %p750 = pneg %p749
        $region42: #{tpu_custom_call.1} parent=39 // pred_check_branch
          %752 = sbr.rel (%p750) target = $region44
        $region43: #{tpu_custom_call.1} parent=39 // pred_region
          %753 = vst.msk [vmem:[%s298] sm:$0xff] %vm716, 0.0
          %754 = vst.msk [vmem:[%s298 + $0x8] sm:$0xff] %vm716, 0.0
          %755 = vst.msk [vmem:[%s298 + $0x10] sm:$0xff] %vm716, 0.0
          %756 = vst.msk [vmem:[%s298 + $0x18] sm:$0xff] %vm716, 0.0
          %757 = vst.msk [vmem:[%s298 + $0x20] sm:$0xff] %vm716, 0.0
          %758 = vst.msk [vmem:[%s298 + $0x28] sm:$0xff] %vm716, 0.0
          %759 = vst.msk [vmem:[%s298 + $0x30] sm:$0xff] %vm716, 0.0
          %760 = vst.msk [vmem:[%s298 + $0x38] sm:$0xff] %vm716, 0.0
          %761 = vst.msk [vmem:[%s298 + $0x40] sm:$0xff] %vm716, 0.0
          %762 = vst.msk [vmem:[%s298 + $0x48] sm:$0xff] %vm716, 0.0
          %763 = vst.msk [vmem:[%s298 + $0x50] sm:$0xff] %vm716, 0.0
          %764 = vst.msk [vmem:[%s298 + $0x58] sm:$0xff] %vm716, 0.0
          %765 = vst.msk [vmem:[%s298 + $0x60] sm:$0xff] %vm716, 0.0
          %766 = vst.msk [vmem:[%s298 + $0x68] sm:$0xff] %vm716, 0.0
          %767 = vst.msk [vmem:[%s298 + $0x70] sm:$0xff] %vm716, 0.0
          %768 = vst.msk [vmem:[%s298 + $0x78] sm:$0xff] %vm716, 0.0
          %769 = vst.msk [vmem:[%s298 + $0x80] sm:$0xff] %vm716, 0.0
          %770 = vst.msk [vmem:[%s298 + $0x88] sm:$0xff] %vm716, 0.0
          %771 = vst.msk [vmem:[%s298 + $0x90] sm:$0xff] %vm716, 0.0
          %772 = vst.msk [vmem:[%s298 + $0x98] sm:$0xff] %vm716, 0.0
          %773 = vst.msk [vmem:[%s298 + $0xa0] sm:$0xff] %vm716, 0.0
          %774 = vst.msk [vmem:[%s298 + $0xa8] sm:$0xff] %vm716, 0.0
          %775 = vst.msk [vmem:[%s298 + $0xb0] sm:$0xff] %vm716, 0.0
          %776 = vst.msk [vmem:[%s298 + $0xb8] sm:$0xff] %vm716, 0.0
        $region44: #{tpu_custom_call.1} parent=39 // pred_fallthru
          _
        %v777 = vld [vmem:[%s4] sm:$0xff]
        %vm778 = vcmask 130048
        %v780 = vsel %vm778, %v777, 0
        %782 = vmatprep.subr.mxu0 0.0
        %783 = vmatpush1.msra.mxu0 %v558
        %784 = vmatprep.subr.mxu0 0.0
        %785 = vmatpush1.msra.mxu0 %v563
        %786 = vmatprep.subr.mxu0 0.0
        %787 = vmatpush1.msra.mxu0 0.0
        %788 = vmatprep.subr.mxu0 0.0
        %789 = vmatpush1.msra.mxu0 0.0
        %790 = vmatprep.subr.mxu0 0.0
        %791 = vmatpush1.msra.mxu0 0.0
        %792 = vmatprep.subr.mxu0 0.0
        %793 = vmatpush1.msra.mxu0 0.0
        %794 = vmatprep.subr.mxu0 0.0
        %795 = vmatpush1.msra.mxu0 0.0
        %796 = vmatprep.subr.mxu0 0.0
        %797 = vmatpush1.msra.mxu0 0.0
        %798 = vmatprep.subr.mxu0 0.0
        %799 = vmatpush1.msra.mxu0 0.0
        %800 = vmatprep.subr.mxu0 0.0
        %801 = vmatpush1.msra.mxu0 0.0
        %802 = vmatprep.subr.mxu0 0.0
        %803 = vmatpush1.msra.mxu0 0.0
        %804 = vmatprep.subr.mxu0 0.0
        %805 = vmatpush1.msra.mxu0 0.0
        %806 = vmatprep.subr.mxu0 0.0
        %807 = vmatpush1.msra.mxu0 0.0
        %808 = vmatprep.subr.mxu0 0.0
        %809 = vmatpush1.msra.mxu0 0.0
        %810 = vmatprep.subr.mxu0 0.0
        %811 = vmatpush1.msra.mxu0 0.0
        %812 = vmatprep.subr.mxu0 0.0
        %813 = vmatpush1.msra.mxu0 0.0
        %814 = vmatprep.subr.mxu0 0.0
        %815 = vmatpush1.msra.mxu0 0.0
        %816 = vmatprep.subr.mxu0 0.0
        %817 = vmatpush1.msra.mxu0 0.0
        %818 = vmatprep.subr.mxu0 0.0
        %819 = vmatpush1.msra.mxu0 0.0
        %820 = vmatprep.subr.mxu0 0.0
        %821 = vmatpush1.msra.mxu0 0.0
        %822 = vmatprep.subr.mxu0 0.0
        %823 = vmatpush1.msra.mxu0 0.0
        %824 = vmatprep.subr.mxu0 0.0
        %825 = vmatpush1.msra.mxu0 0.0
        %826 = vmatprep.subr.mxu0 0.0
        %827 = vmatpush1.msra.mxu0 0.0
        %828 = vmatprep.subr.mxu0 0.0
        %829 = vmatpush1.msra.mxu0 0.0
        %830 = vmatprep.subr.mxu0 0.0
        %831 = vmatpush1.msra.mxu0 0.0
        %832 = vmatprep.subr.mxu0 0.0
        %833 = vmatpush1.msra.mxu0 0.0
        %834 = vmatprep.subr.mxu0 0.0
        %835 = vmatpush1.msra.mxu0 0.0
        %836 = vmatprep.subr.mxu0 0.0
        %837 = vmatpush1.msra.mxu0 0.0
        %838 = vmatprep.subr.mxu0 0.0
        %839 = vmatpush1.msra.mxu0 0.0
        %840 = vmatprep.subr.mxu0 0.0
        %841 = vmatpush1.msra.mxu0 0.0
        %842 = vmatprep.subr.mxu0 0.0
        %843 = vmatpush1.msra.mxu0 0.0
        %844 = vmatprep.subr.mxu0 0.0
        %845 = vmatpush1.msra.mxu0 0.0
        %846 = vmatprep.mubr.f32.mxu0 0.0
        %847 = vmatmul.mubr.f32.gmra.mrb[0].mxu0 %v780
        %v848 = vpop.f32.mrb[0].mxu0
        %v849 = vadd.f32 0.0, %v848
        %v850 = vpop.f32.mrb[0].mxu0
        %851 = vdwg.mxu0
        %852 = vmatprep.subr.mxu0 0.0
        %853 = vmatpush1.msra.mxu0 %v568
        %854 = vmatprep.subr.mxu0 0.0
        %855 = vmatpush1.msra.mxu0 %v573
        %856 = vmatprep.subr.mxu0 0.0
        %857 = vmatpush1.msra.mxu0 0.0
        %858 = vmatprep.subr.mxu0 0.0
        %859 = vmatpush1.msra.mxu0 0.0
        %860 = vmatprep.subr.mxu0 0.0
        %861 = vmatpush1.msra.mxu0 0.0
        %862 = vmatprep.subr.mxu0 0.0
        %863 = vmatpush1.msra.mxu0 0.0
        %864 = vmatprep.subr.mxu0 0.0
        %865 = vmatpush1.msra.mxu0 0.0
        %866 = vmatprep.subr.mxu0 0.0
        %867 = vmatpush1.msra.mxu0 0.0
        %868 = vmatprep.subr.mxu0 0.0
        %869 = vmatpush1.msra.mxu0 0.0
        %870 = vmatprep.subr.mxu0 0.0
        %871 = vmatpush1.msra.mxu0 0.0
        %872 = vmatprep.subr.mxu0 0.0
        %873 = vmatpush1.msra.mxu0 0.0
        %874 = vmatprep.subr.mxu0 0.0
        %875 = vmatpush1.msra.mxu0 0.0
        %876 = vmatprep.subr.mxu0 0.0
        %877 = vmatpush1.msra.mxu0 0.0
        %878 = vmatprep.subr.mxu0 0.0
        %879 = vmatpush1.msra.mxu0 0.0
        %880 = vmatprep.subr.mxu0 0.0
        %881 = vmatpush1.msra.mxu0 0.0
        %882 = vmatprep.subr.mxu0 0.0
        %883 = vmatpush1.msra.mxu0 0.0
        %884 = vmatprep.subr.mxu0 0.0
        %885 = vmatpush1.msra.mxu0 0.0
        %886 = vmatprep.subr.mxu0 0.0
        %887 = vmatpush1.msra.mxu0 0.0
        %888 = vmatprep.subr.mxu0 0.0
        %889 = vmatpush1.msra.mxu0 0.0
        %890 = vmatprep.subr.mxu0 0.0
        %891 = vmatpush1.msra.mxu0 0.0
        %892 = vmatprep.subr.mxu0 0.0
        %893 = vmatpush1.msra.mxu0 0.0
        %894 = vmatprep.subr.mxu0 0.0
        %895 = vmatpush1.msra.mxu0 0.0
        %896 = vmatprep.subr.mxu0 0.0
        %897 = vmatpush1.msra.mxu0 0.0
        %898 = vmatprep.subr.mxu0 0.0
        %899 = vmatpush1.msra.mxu0 0.0
        %900 = vmatprep.subr.mxu0 0.0
        %901 = vmatpush1.msra.mxu0 0.0
        %902 = vmatprep.subr.mxu0 0.0
        %903 = vmatpush1.msra.mxu0 0.0
        %904 = vmatprep.subr.mxu0 0.0
        %905 = vmatpush1.msra.mxu0 0.0
        %906 = vmatprep.subr.mxu0 0.0
        %907 = vmatpush1.msra.mxu0 0.0
        %908 = vmatprep.subr.mxu0 0.0
        %909 = vmatpush1.msra.mxu0 0.0
        %910 = vmatprep.subr.mxu0 0.0
        %911 = vmatpush1.msra.mxu0 0.0
        %912 = vmatprep.subr.mxu0 0.0
        %913 = vmatpush1.msra.mxu0 0.0
        %914 = vmatprep.subr.mxu0 0.0
        %915 = vmatpush1.msra.mxu0 0.0
        %916 = vmatprep.mubr.f32.mxu0 0.0
        %917 = vmatmul.mubr.f32.gmra.mrb[0].mxu0 %v780
        %v918 = vpop.f32.mrb[0].mxu0
        %v919 = vadd.f32 0.0, %v918
        %v920 = vpop.f32.mrb[0].mxu0
        %921 = vdwg.mxu0
        %922 = vmatprep.subr.mxu0 0.0
        %923 = vmatpush1.msra.mxu0 %v578
        %924 = vmatprep.subr.mxu0 0.0
        %925 = vmatpush1.msra.mxu0 %v583
        %926 = vmatprep.subr.mxu0 0.0
        %927 = vmatpush1.msra.mxu0 0.0
        %928 = vmatprep.subr.mxu0 0.0
        %929 = vmatpush1.msra.mxu0 0.0
        %930 = vmatprep.subr.mxu0 0.0
        %931 = vmatpush1.msra.mxu0 0.0
        %932 = vmatprep.subr.mxu0 0.0
        %933 = vmatpush1.msra.mxu0 0.0
        %934 = vmatprep.subr.mxu0 0.0
        %935 = vmatpush1.msra.mxu0 0.0
        %936 = vmatprep.subr.mxu0 0.0
        %937 = vmatpush1.msra.mxu0 0.0
        %938 = vmatprep.subr.mxu0 0.0
        %939 = vmatpush1.msra.mxu0 0.0
        %940 = vmatprep.subr.mxu0 0.0
        %941 = vmatpush1.msra.mxu0 0.0
        %942 = vmatprep.subr.mxu0 0.0
        %943 = vmatpush1.msra.mxu0 0.0
        %944 = vmatprep.subr.mxu0 0.0
        %945 = vmatpush1.msra.mxu0 0.0
        %946 = vmatprep.subr.mxu0 0.0
        %947 = vmatpush1.msra.mxu0 0.0
        %948 = vmatprep.subr.mxu0 0.0
        %949 = vmatpush1.msra.mxu0 0.0
        %950 = vmatprep.subr.mxu0 0.0
        %951 = vmatpush1.msra.mxu0 0.0
        %952 = vmatprep.subr.mxu0 0.0
        %953 = vmatpush1.msra.mxu0 0.0
        %954 = vmatprep.subr.mxu0 0.0
        %955 = vmatpush1.msra.mxu0 0.0
        %956 = vmatprep.subr.mxu0 0.0
        %957 = vmatpush1.msra.mxu0 0.0
        %958 = vmatprep.subr.mxu0 0.0
        %959 = vmatpush1.msra.mxu0 0.0
        %960 = vmatprep.subr.mxu0 0.0
        %961 = vmatpush1.msra.mxu0 0.0
        %962 = vmatprep.subr.mxu0 0.0
        %963 = vmatpush1.msra.mxu0 0.0
        %964 = vmatprep.subr.mxu0 0.0
        %965 = vmatpush1.msra.mxu0 0.0
        %966 = vmatprep.subr.mxu0 0.0
        %967 = vmatpush1.msra.mxu0 0.0
        %968 = vmatprep.subr.mxu0 0.0
        %969 = vmatpush1.msra.mxu0 0.0
        %970 = vmatprep.subr.mxu0 0.0
        %971 = vmatpush1.msra.mxu0 0.0
        %972 = vmatprep.subr.mxu0 0.0
        %973 = vmatpush1.msra.mxu0 0.0
        %974 = vmatprep.subr.mxu0 0.0
        %975 = vmatpush1.msra.mxu0 0.0
        %976 = vmatprep.subr.mxu0 0.0
        %977 = vmatpush1.msra.mxu0 0.0
        %978 = vmatprep.subr.mxu0 0.0
        %979 = vmatpush1.msra.mxu0 0.0
        %980 = vmatprep.subr.mxu0 0.0
        %981 = vmatpush1.msra.mxu0 0.0
        %982 = vmatprep.subr.mxu0 0.0
        %983 = vmatpush1.msra.mxu0 0.0
        %984 = vmatprep.subr.mxu0 0.0
        %985 = vmatpush1.msra.mxu0 0.0
        %986 = vmatprep.mubr.f32.mxu0 0.0
        %987 = vmatmul.mubr.f32.gmra.mrb[0].mxu0 %v780
        %v988 = vpop.f32.mrb[0].mxu0
        %v989 = vadd.f32 0.0, %v988
        %v990 = vpop.f32.mrb[0].mxu0
        %991 = vdwg.mxu0
        %992 = vmatprep.subr.mxu0 0.0
        %993 = vmatpush1.msra.mxu0 %v588
        %994 = vmatprep.subr.mxu0 0.0
        %995 = vmatpush1.msra.mxu0 %v593
        %996 = vmatprep.subr.mxu0 0.0
        %997 = vmatpush1.msra.mxu0 0.0
        %998 = vmatprep.subr.mxu0 0.0
        %999 = vmatpush1.msra.mxu0 0.0
        %1000 = vmatprep.subr.mxu0 0.0
        %1001 = vmatpush1.msra.mxu0 0.0
        %1002 = vmatprep.subr.mxu0 0.0
        %1003 = vmatpush1.msra.mxu0 0.0
        %1004 = vmatprep.subr.mxu0 0.0
        %1005 = vmatpush1.msra.mxu0 0.0
        %1006 = vmatprep.subr.mxu0 0.0
        %1007 = vmatpush1.msra.mxu0 0.0
        %1008 = vmatprep.subr.mxu0 0.0
        %1009 = vmatpush1.msra.mxu0 0.0
        %1010 = vmatprep.subr.mxu0 0.0
        %1011 = vmatpush1.msra.mxu0 0.0
        %1012 = vmatprep.subr.mxu0 0.0
        %1013 = vmatpush1.msra.mxu0 0.0
        %1014 = vmatprep.subr.mxu0 0.0
        %1015 = vmatpush1.msra.mxu0 0.0
        %1016 = vmatprep.subr.mxu0 0.0
        %1017 = vmatpush1.msra.mxu0 0.0
        %1018 = vmatprep.subr.mxu0 0.0
        %1019 = vmatpush1.msra.mxu0 0.0
        %1020 = vmatprep.subr.mxu0 0.0
        %1021 = vmatpush1.msra.mxu0 0.0
        %1022 = vmatprep.subr.mxu0 0.0
        %1023 = vmatpush1.msra.mxu0 0.0
        %1024 = vmatprep.subr.mxu0 0.0
        %1025 = vmatpush1.msra.mxu0 0.0
        %1026 = vmatprep.subr.mxu0 0.0
        %1027 = vmatpush1.msra.mxu0 0.0
        %1028 = vmatprep.subr.mxu0 0.0
        %1029 = vmatpush1.msra.mxu0 0.0
        %1030 = vmatprep.subr.mxu0 0.0
        %1031 = vmatpush1.msra.mxu0 0.0
        %1032 = vmatprep.subr.mxu0 0.0
        %1033 = vmatpush1.msra.mxu0 0.0
        %1034 = vmatprep.subr.mxu0 0.0
        %1035 = vmatpush1.msra.mxu0 0.0
        %1036 = vmatprep.subr.mxu0 0.0
        %1037 = vmatpush1.msra.mxu0 0.0
        %1038 = vmatprep.subr.mxu0 0.0
        %1039 = vmatpush1.msra.mxu0 0.0
        %1040 = vmatprep.subr.mxu0 0.0
        %1041 = vmatpush1.msra.mxu0 0.0
        %1042 = vmatprep.subr.mxu0 0.0
        %1043 = vmatpush1.msra.mxu0 0.0
        %1044 = vmatprep.subr.mxu0 0.0
        %1045 = vmatpush1.msra.mxu0 0.0
        %1046 = vmatprep.subr.mxu0 0.0
        %1047 = vmatpush1.msra.mxu0 0.0
        %1048 = vmatprep.subr.mxu0 0.0
        %1049 = vmatpush1.msra.mxu0 0.0
        %1050 = vmatprep.subr.mxu0 0.0
        %1051 = vmatpush1.msra.mxu0 0.0
        %1052 = vmatprep.subr.mxu0 0.0
        %1053 = vmatpush1.msra.mxu0 0.0
        %1054 = vmatprep.subr.mxu0 0.0
        %1055 = vmatpush1.msra.mxu0 0.0
        %1056 = vmatprep.mubr.f32.mxu0 0.0
        %1057 = vmatmul.mubr.f32.gmra.mrb[0].mxu0 %v780
        %v1058 = vpop.f32.mrb[0].mxu0
        %v1059 = vadd.f32 0.0, %v1058
        %v1060 = vpop.f32.mrb[0].mxu0
        %1061 = vdwg.mxu0
        %1062 = vmatprep.subr.mxu0 0.0
        %1063 = vmatpush1.msra.mxu0 %v598
        %1064 = vmatprep.subr.mxu0 0.0
        %1065 = vmatpush1.msra.mxu0 %v603
        %1066 = vmatprep.subr.mxu0 0.0
        %1067 = vmatpush1.msra.mxu0 0.0
        %1068 = vmatprep.subr.mxu0 0.0
        %1069 = vmatpush1.msra.mxu0 0.0
        %1070 = vmatprep.subr.mxu0 0.0
        %1071 = vmatpush1.msra.mxu0 0.0
        %1072 = vmatprep.subr.mxu0 0.0
        %1073 = vmatpush1.msra.mxu0 0.0
        %1074 = vmatprep.subr.mxu0 0.0
        %1075 = vmatpush1.msra.mxu0 0.0
        %1076 = vmatprep.subr.mxu0 0.0
        %1077 = vmatpush1.msra.mxu0 0.0
        %1078 = vmatprep.subr.mxu0 0.0
        %1079 = vmatpush1.msra.mxu0 0.0
        %1080 = vmatprep.subr.mxu0 0.0
        %1081 = vmatpush1.msra.mxu0 0.0
        %1082 = vmatprep.subr.mxu0 0.0
        %1083 = vmatpush1.msra.mxu0 0.0
        %1084 = vmatprep.subr.mxu0 0.0
        %1085 = vmatpush1.msra.mxu0 0.0
        %1086 = vmatprep.subr.mxu0 0.0
        %1087 = vmatpush1.msra.mxu0 0.0
        %1088 = vmatprep.subr.mxu0 0.0
        %1089 = vmatpush1.msra.mxu0 0.0
        %1090 = vmatprep.subr.mxu0 0.0
        %1091 = vmatpush1.msra.mxu0 0.0
        %1092 = vmatprep.subr.mxu0 0.0
        %1093 = vmatpush1.msra.mxu0 0.0
        %1094 = vmatprep.subr.mxu0 0.0
        %1095 = vmatpush1.msra.mxu0 0.0
        %1096 = vmatprep.subr.mxu0 0.0
        %1097 = vmatpush1.msra.mxu0 0.0
        %1098 = vmatprep.subr.mxu0 0.0
        %1099 = vmatpush1.msra.mxu0 0.0
        %1100 = vmatprep.subr.mxu0 0.0
        %1101 = vmatpush1.msra.mxu0 0.0
        %1102 = vmatprep.subr.mxu0 0.0
        %1103 = vmatpush1.msra.mxu0 0.0
        %1104 = vmatprep.subr.mxu0 0.0
        %1105 = vmatpush1.msra.mxu0 0.0
        %1106 = vmatprep.subr.mxu0 0.0
        %1107 = vmatpush1.msra.mxu0 0.0
        %1108 = vmatprep.subr.mxu0 0.0
        %1109 = vmatpush1.msra.mxu0 0.0
        %1110 = vmatprep.subr.mxu0 0.0
        %1111 = vmatpush1.msra.mxu0 0.0
        %1112 = vmatprep.subr.mxu0 0.0
        %1113 = vmatpush1.msra.mxu0 0.0
        %1114 = vmatprep.subr.mxu0 0.0
        %1115 = vmatpush1.msra.mxu0 0.0
        %1116 = vmatprep.subr.mxu0 0.0
        %1117 = vmatpush1.msra.mxu0 0.0
        %1118 = vmatprep.subr.mxu0 0.0
        %1119 = vmatpush1.msra.mxu0 0.0
        %1120 = vmatprep.subr.mxu0 0.0
        %1121 = vmatpush1.msra.mxu0 0.0
        %1122 = vmatprep.subr.mxu0 0.0
        %1123 = vmatpush1.msra.mxu0 0.0
        %1124 = vmatprep.subr.mxu0 0.0
        %1125 = vmatpush1.msra.mxu0 0.0
        %1126 = vmatprep.mubr.f32.mxu0 0.0
        %1127 = vmatmul.mubr.f32.gmra.mrb[0].mxu0 %v780
        %v1128 = vpop.f32.mrb[0].mxu0
        %v1129 = vadd.f32 0.0, %v1128
        %v1130 = vpop.f32.mrb[0].mxu0
        %1131 = vdwg.mxu0
        %1132 = vmatprep.subr.mxu0 0.0
        %1133 = vmatpush1.msra.mxu0 %v608
        %1134 = vmatprep.subr.mxu0 0.0
        %1135 = vmatpush1.msra.mxu0 %v613
        %1136 = vmatprep.subr.mxu0 0.0
        %1137 = vmatpush1.msra.mxu0 0.0
        %1138 = vmatprep.subr.mxu0 0.0
        %1139 = vmatpush1.msra.mxu0 0.0
        %1140 = vmatprep.subr.mxu0 0.0
        %1141 = vmatpush1.msra.mxu0 0.0
        %1142 = vmatprep.subr.mxu0 0.0
        %1143 = vmatpush1.msra.mxu0 0.0
        %1144 = vmatprep.subr.mxu0 0.0
        %1145 = vmatpush1.msra.mxu0 0.0
        %1146 = vmatprep.subr.mxu0 0.0
        %1147 = vmatpush1.msra.mxu0 0.0
        %1148 = vmatprep.subr.mxu0 0.0
        %1149 = vmatpush1.msra.mxu0 0.0
        %1150 = vmatprep.subr.mxu0 0.0
        %1151 = vmatpush1.msra.mxu0 0.0
        %1152 = vmatprep.subr.mxu0 0.0
        %1153 = vmatpush1.msra.mxu0 0.0
        %1154 = vmatprep.subr.mxu0 0.0
        %1155 = vmatpush1.msra.mxu0 0.0
        %1156 = vmatprep.subr.mxu0 0.0
        %1157 = vmatpush1.msra.mxu0 0.0
        %1158 = vmatprep.subr.mxu0 0.0
        %1159 = vmatpush1.msra.mxu0 0.0
        %1160 = vmatprep.subr.mxu0 0.0
        %1161 = vmatpush1.msra.mxu0 0.0
        %1162 = vmatprep.subr.mxu0 0.0
        %1163 = vmatpush1.msra.mxu0 0.0
        %1164 = vmatprep.subr.mxu0 0.0
        %1165 = vmatpush1.msra.mxu0 0.0
        %1166 = vmatprep.subr.mxu0 0.0
        %1167 = vmatpush1.msra.mxu0 0.0
        %1168 = vmatprep.subr.mxu0 0.0
        %1169 = vmatpush1.msra.mxu0 0.0
        %1170 = vmatprep.subr.mxu0 0.0
        %1171 = vmatpush1.msra.mxu0 0.0
        %1172 = vmatprep.subr.mxu0 0.0
        %1173 = vmatpush1.msra.mxu0 0.0
        %1174 = vmatprep.subr.mxu0 0.0
        %1175 = vmatpush1.msra.mxu0 0.0
        %1176 = vmatprep.subr.mxu0 0.0
        %1177 = vmatpush1.msra.mxu0 0.0
        %1178 = vmatprep.subr.mxu0 0.0
        %1179 = vmatpush1.msra.mxu0 0.0
        %1180 = vmatprep.subr.mxu0 0.0
        %1181 = vmatpush1.msra.mxu0 0.0
        %1182 = vmatprep.subr.mxu0 0.0
        %1183 = vmatpush1.msra.mxu0 0.0
        %1184 = vmatprep.subr.mxu0 0.0
        %1185 = vmatpush1.msra.mxu0 0.0
        %1186 = vmatprep.subr.mxu0 0.0
        %1187 = vmatpush1.msra.mxu0 0.0
        %1188 = vmatprep.subr.mxu0 0.0
        %1189 = vmatpush1.msra.mxu0 0.0
        %1190 = vmatprep.subr.mxu0 0.0
        %1191 = vmatpush1.msra.mxu0 0.0
        %1192 = vmatprep.subr.mxu0 0.0
        %1193 = vmatpush1.msra.mxu0 0.0
        %1194 = vmatprep.subr.mxu0 0.0
        %1195 = vmatpush1.msra.mxu0 0.0
        %1196 = vmatprep.mubr.f32.mxu0 0.0
        %1197 = vmatmul.mubr.f32.gmra.mrb[0].mxu0 %v780
        %v1198 = vpop.f32.mrb[0].mxu0
        %v1199 = vadd.f32 0.0, %v1198
        %v1200 = vpop.f32.mrb[0].mxu0
        %1201 = vdwg.mxu0
        %1202 = vmatprep.subr.mxu0 0.0
        %1203 = vmatpush1.msra.mxu0 %v618
        %1204 = vmatprep.subr.mxu0 0.0
        %1205 = vmatpush1.msra.mxu0 %v623
        %1206 = vmatprep.subr.mxu0 0.0
        %1207 = vmatpush1.msra.mxu0 0.0
        %1208 = vmatprep.subr.mxu0 0.0
        %1209 = vmatpush1.msra.mxu0 0.0
        %1210 = vmatprep.subr.mxu0 0.0
        %1211 = vmatpush1.msra.mxu0 0.0
        %1212 = vmatprep.subr.mxu0 0.0
        %1213 = vmatpush1.msra.mxu0 0.0
        %1214 = vmatprep.subr.mxu0 0.0
        %1215 = vmatpush1.msra.mxu0 0.0
        %1216 = vmatprep.subr.mxu0 0.0
        %1217 = vmatpush1.msra.mxu0 0.0
        %1218 = vmatprep.subr.mxu0 0.0
        %1219 = vmatpush1.msra.mxu0 0.0
        %1220 = vmatprep.subr.mxu0 0.0
        %1221 = vmatpush1.msra.mxu0 0.0
        %1222 = vmatprep.subr.mxu0 0.0
        %1223 = vmatpush1.msra.mxu0 0.0
        %1224 = vmatprep.subr.mxu0 0.0
        %1225 = vmatpush1.msra.mxu0 0.0
        %1226 = vmatprep.subr.mxu0 0.0
        %1227 = vmatpush1.msra.mxu0 0.0
        %1228 = vmatprep.subr.mxu0 0.0
        %1229 = vmatpush1.msra.mxu0 0.0
        %1230 = vmatprep.subr.mxu0 0.0
        %1231 = vmatpush1.msra.mxu0 0.0
        %1232 = vmatprep.subr.mxu0 0.0
        %1233 = vmatpush1.msra.mxu0 0.0
        %1234 = vmatprep.subr.mxu0 0.0
        %1235 = vmatpush1.msra.mxu0 0.0
        %1236 = vmatprep.subr.mxu0 0.0
        %1237 = vmatpush1.msra.mxu0 0.0
        %1238 = vmatprep.subr.mxu0 0.0
        %1239 = vmatpush1.msra.mxu0 0.0
        %1240 = vmatprep.subr.mxu0 0.0
        %1241 = vmatpush1.msra.mxu0 0.0
        %1242 = vmatprep.subr.mxu0 0.0
        %1243 = vmatpush1.msra.mxu0 0.0
        %1244 = vmatprep.subr.mxu0 0.0
        %1245 = vmatpush1.msra.mxu0 0.0
        %1246 = vmatprep.subr.mxu0 0.0
        %1247 = vmatpush1.msra.mxu0 0.0
        %1248 = vmatprep.subr.mxu0 0.0
        %1249 = vmatpush1.msra.mxu0 0.0
        %1250 = vmatprep.subr.mxu0 0.0
        %1251 = vmatpush1.msra.mxu0 0.0
        %1252 = vmatprep.subr.mxu0 0.0
        %1253 = vmatpush1.msra.mxu0 0.0
        %1254 = vmatprep.subr.mxu0 0.0
        %1255 = vmatpush1.msra.mxu0 0.0
        %1256 = vmatprep.subr.mxu0 0.0
        %1257 = vmatpush1.msra.mxu0 0.0
        %1258 = vmatprep.subr.mxu0 0.0
        %1259 = vmatpush1.msra.mxu0 0.0
        %1260 = vmatprep.subr.mxu0 0.0
        %1261 = vmatpush1.msra.mxu0 0.0
        %1262 = vmatprep.subr.mxu0 0.0
        %1263 = vmatpush1.msra.mxu0 0.0
        %1264 = vmatprep.subr.mxu0 0.0
        %1265 = vmatpush1.msra.mxu0 0.0
        %1266 = vmatprep.mubr.f32.mxu0 0.0
        %1267 = vmatmul.mubr.f32.gmra.mrb[0].mxu0 %v780
        %v1268 = vpop.f32.mrb[0].mxu0
        %v1269 = vadd.f32 0.0, %v1268
        %v1270 = vpop.f32.mrb[0].mxu0
        %1271 = vdwg.mxu0
        %1272 = vmatprep.subr.mxu0 0.0
        %1273 = vmatpush1.msra.mxu0 %v628
        %1274 = vmatprep.subr.mxu0 0.0
        %1275 = vmatpush1.msra.mxu0 %v633
        %1276 = vmatprep.subr.mxu0 0.0
        %1277 = vmatpush1.msra.mxu0 0.0
        %1278 = vmatprep.subr.mxu0 0.0
        %1279 = vmatpush1.msra.mxu0 0.0
        %1280 = vmatprep.subr.mxu0 0.0
        %1281 = vmatpush1.msra.mxu0 0.0
        %1282 = vmatprep.subr.mxu0 0.0
        %1283 = vmatpush1.msra.mxu0 0.0
        %1284 = vmatprep.subr.mxu0 0.0
        %1285 = vmatpush1.msra.mxu0 0.0
        %1286 = vmatprep.subr.mxu0 0.0
        %1287 = vmatpush1.msra.mxu0 0.0
        %1288 = vmatprep.subr.mxu0 0.0
        %1289 = vmatpush1.msra.mxu0 0.0
        %1290 = vmatprep.subr.mxu0 0.0
        %1291 = vmatpush1.msra.mxu0 0.0
        %1292 = vmatprep.subr.mxu0 0.0
        %1293 = vmatpush1.msra.mxu0 0.0
        %1294 = vmatprep.subr.mxu0 0.0
        %1295 = vmatpush1.msra.mxu0 0.0
        %1296 = vmatprep.subr.mxu0 0.0
        %1297 = vmatpush1.msra.mxu0 0.0
        %1298 = vmatprep.subr.mxu0 0.0
        %1299 = vmatpush1.msra.mxu0 0.0
        %1300 = vmatprep.subr.mxu0 0.0
        %1301 = vmatpush1.msra.mxu0 0.0
        %1302 = vmatprep.subr.mxu0 0.0
        %1303 = vmatpush1.msra.mxu0 0.0
        %1304 = vmatprep.subr.mxu0 0.0
        %1305 = vmatpush1.msra.mxu0 0.0
        %1306 = vmatprep.subr.mxu0 0.0
        %1307 = vmatpush1.msra.mxu0 0.0
        %1308 = vmatprep.subr.mxu0 0.0
        %1309 = vmatpush1.msra.mxu0 0.0
        %1310 = vmatprep.subr.mxu0 0.0
        %1311 = vmatpush1.msra.mxu0 0.0
        %1312 = vmatprep.subr.mxu0 0.0
        %1313 = vmatpush1.msra.mxu0 0.0
        %1314 = vmatprep.subr.mxu0 0.0
        %1315 = vmatpush1.msra.mxu0 0.0
        %1316 = vmatprep.subr.mxu0 0.0
        %1317 = vmatpush1.msra.mxu0 0.0
        %1318 = vmatprep.subr.mxu0 0.0
        %1319 = vmatpush1.msra.mxu0 0.0
        %1320 = vmatprep.subr.mxu0 0.0
        %1321 = vmatpush1.msra.mxu0 0.0
        %1322 = vmatprep.subr.mxu0 0.0
        %1323 = vmatpush1.msra.mxu0 0.0
        %1324 = vmatprep.subr.mxu0 0.0
        %1325 = vmatpush1.msra.mxu0 0.0
        %1326 = vmatprep.subr.mxu0 0.0
        %1327 = vmatpush1.msra.mxu0 0.0
        %1328 = vmatprep.subr.mxu0 0.0
        %1329 = vmatpush1.msra.mxu0 0.0
        %1330 = vmatprep.subr.mxu0 0.0
        %1331 = vmatpush1.msra.mxu0 0.0
        %1332 = vmatprep.subr.mxu0 0.0
        %1333 = vmatpush1.msra.mxu0 0.0
        %1334 = vmatprep.subr.mxu0 0.0
        %1335 = vmatpush1.msra.mxu0 0.0
        %1336 = vmatprep.mubr.f32.mxu0 0.0
        %1337 = vmatmul.mubr.f32.gmra.mrb[0].mxu0 %v780
        %v1338 = vpop.f32.mrb[0].mxu0
        %v1339 = vadd.f32 0.0, %v1338
        %v1340 = vpop.f32.mrb[0].mxu0
        %1341 = vdwg.mxu0
        %1342 = vmatprep.subr.mxu0 0.0
        %1343 = vmatpush1.msra.mxu0 %v638
        %1344 = vmatprep.subr.mxu0 0.0
        %1345 = vmatpush1.msra.mxu0 %v643
        %1346 = vmatprep.subr.mxu0 0.0
        %1347 = vmatpush1.msra.mxu0 0.0
        %1348 = vmatprep.subr.mxu0 0.0
        %1349 = vmatpush1.msra.mxu0 0.0
        %1350 = vmatprep.subr.mxu0 0.0
        %1351 = vmatpush1.msra.mxu0 0.0
        %1352 = vmatprep.subr.mxu0 0.0
        %1353 = vmatpush1.msra.mxu0 0.0
        %1354 = vmatprep.subr.mxu0 0.0
        %1355 = vmatpush1.msra.mxu0 0.0
        %1356 = vmatprep.subr.mxu0 0.0
        %1357 = vmatpush1.msra.mxu0 0.0
        %1358 = vmatprep.subr.mxu0 0.0
        %1359 = vmatpush1.msra.mxu0 0.0
        %1360 = vmatprep.subr.mxu0 0.0
        %1361 = vmatpush1.msra.mxu0 0.0
        %1362 = vmatprep.subr.mxu0 0.0
        %1363 = vmatpush1.msra.mxu0 0.0
        %1364 = vmatprep.subr.mxu0 0.0
        %1365 = vmatpush1.msra.mxu0 0.0
        %1366 = vmatprep.subr.mxu0 0.0
        %1367 = vmatpush1.msra.mxu0 0.0
        %1368 = vmatprep.subr.mxu0 0.0
        %1369 = vmatpush1.msra.mxu0 0.0
        %1370 = vmatprep.subr.mxu0 0.0
        %1371 = vmatpush1.msra.mxu0 0.0
        %1372 = vmatprep.subr.mxu0 0.0
        %1373 = vmatpush1.msra.mxu0 0.0
        %1374 = vmatprep.subr.mxu0 0.0
        %1375 = vmatpush1.msra.mxu0 0.0
        %1376 = vmatprep.subr.mxu0 0.0
        %1377 = vmatpush1.msra.mxu0 0.0
        %1378 = vmatprep.subr.mxu0 0.0
        %1379 = vmatpush1.msra.mxu0 0.0
        %1380 = vmatprep.subr.mxu0 0.0
        %1381 = vmatpush1.msra.mxu0 0.0
        %1382 = vmatprep.subr.mxu0 0.0
        %1383 = vmatpush1.msra.mxu0 0.0
        %1384 = vmatprep.subr.mxu0 0.0
        %1385 = vmatpush1.msra.mxu0 0.0
        %1386 = vmatprep.subr.mxu0 0.0
        %1387 = vmatpush1.msra.mxu0 0.0
        %1388 = vmatprep.subr.mxu0 0.0
        %1389 = vmatpush1.msra.mxu0 0.0
        %1390 = vmatprep.subr.mxu0 0.0
        %1391 = vmatpush1.msra.mxu0 0.0
        %1392 = vmatprep.subr.mxu0 0.0
        %1393 = vmatpush1.msra.mxu0 0.0
        %1394 = vmatprep.subr.mxu0 0.0
        %1395 = vmatpush1.msra.mxu0 0.0
        %1396 = vmatprep.subr.mxu0 0.0
        %1397 = vmatpush1.msra.mxu0 0.0
        %1398 = vmatprep.subr.mxu0 0.0
        %1399 = vmatpush1.msra.mxu0 0.0
        %1400 = vmatprep.subr.mxu0 0.0
        %1401 = vmatpush1.msra.mxu0 0.0
        %1402 = vmatprep.subr.mxu0 0.0
        %1403 = vmatpush1.msra.mxu0 0.0
        %1404 = vmatprep.subr.mxu0 0.0
        %1405 = vmatpush1.msra.mxu0 0.0
        %1406 = vmatprep.mubr.f32.mxu0 0.0
        %1407 = vmatmul.mubr.f32.gmra.mrb[0].mxu0 %v780
        %v1408 = vpop.f32.mrb[0].mxu0
        %v1409 = vadd.f32 0.0, %v1408
        %v1410 = vpop.f32.mrb[0].mxu0
        %1411 = vdwg.mxu0
        %1412 = vmatprep.subr.mxu0 0.0
        %1413 = vmatpush1.msra.mxu0 %v648
        %1414 = vmatprep.subr.mxu0 0.0
        %1415 = vmatpush1.msra.mxu0 %v653
        %1416 = vmatprep.subr.mxu0 0.0
        %1417 = vmatpush1.msra.mxu0 0.0
        %1418 = vmatprep.subr.mxu0 0.0
        %1419 = vmatpush1.msra.mxu0 0.0
        %1420 = vmatprep.subr.mxu0 0.0
        %1421 = vmatpush1.msra.mxu0 0.0
        %1422 = vmatprep.subr.mxu0 0.0
        %1423 = vmatpush1.msra.mxu0 0.0
        %1424 = vmatprep.subr.mxu0 0.0
        %1425 = vmatpush1.msra.mxu0 0.0
        %1426 = vmatprep.subr.mxu0 0.0
        %1427 = vmatpush1.msra.mxu0 0.0
        %1428 = vmatprep.subr.mxu0 0.0
        %1429 = vmatpush1.msra.mxu0 0.0
        %1430 = vmatprep.subr.mxu0 0.0
        %1431 = vmatpush1.msra.mxu0 0.0
        %1432 = vmatprep.subr.mxu0 0.0
        %1433 = vmatpush1.msra.mxu0 0.0
        %1434 = vmatprep.subr.mxu0 0.0
        %1435 = vmatpush1.msra.mxu0 0.0
        %1436 = vmatprep.subr.mxu0 0.0
        %1437 = vmatpush1.msra.mxu0 0.0
        %1438 = vmatprep.subr.mxu0 0.0
        %1439 = vmatpush1.msra.mxu0 0.0
        %1440 = vmatprep.subr.mxu0 0.0
        %1441 = vmatpush1.msra.mxu0 0.0
        %1442 = vmatprep.subr.mxu0 0.0
        %1443 = vmatpush1.msra.mxu0 0.0
        %1444 = vmatprep.subr.mxu0 0.0
        %1445 = vmatpush1.msra.mxu0 0.0
        %1446 = vmatprep.subr.mxu0 0.0
        %1447 = vmatpush1.msra.mxu0 0.0
        %1448 = vmatprep.subr.mxu0 0.0
        %1449 = vmatpush1.msra.mxu0 0.0
        %1450 = vmatprep.subr.mxu0 0.0
        %1451 = vmatpush1.msra.mxu0 0.0
        %1452 = vmatprep.subr.mxu0 0.0
        %1453 = vmatpush1.msra.mxu0 0.0
        %1454 = vmatprep.subr.mxu0 0.0
        %1455 = vmatpush1.msra.mxu0 0.0
        %1456 = vmatprep.subr.mxu0 0.0
        %1457 = vmatpush1.msra.mxu0 0.0
        %1458 = vmatprep.subr.mxu0 0.0
        %1459 = vmatpush1.msra.mxu0 0.0
        %1460 = vmatprep.subr.mxu0 0.0
        %1461 = vmatpush1.msra.mxu0 0.0
        %1462 = vmatprep.subr.mxu0 0.0
        %1463 = vmatpush1.msra.mxu0 0.0
        %1464 = vmatprep.subr.mxu0 0.0
        %1465 = vmatpush1.msra.mxu0 0.0
        %1466 = vmatprep.subr.mxu0 0.0
        %1467 = vmatpush1.msra.mxu0 0.0
        %1468 = vmatprep.subr.mxu0 0.0
        %1469 = vmatpush1.msra.mxu0 0.0
        %1470 = vmatprep.subr.mxu0 0.0
        %1471 = vmatpush1.msra.mxu0 0.0
        %1472 = vmatprep.subr.mxu0 0.0
        %1473 = vmatpush1.msra.mxu0 0.0
        %1474 = vmatprep.subr.mxu0 0.0
        %1475 = vmatpush1.msra.mxu0 0.0
        %1476 = vmatprep.mubr.f32.mxu0 0.0
        %1477 = vmatmul.mubr.f32.gmra.mrb[0].mxu0 %v780
        %v1478 = vpop.f32.mrb[0].mxu0
        %v1479 = vadd.f32 0.0, %v1478
        %v1480 = vpop.f32.mrb[0].mxu0
        %1481 = vdwg.mxu0
        %1482 = vmatprep.subr.mxu0 0.0
        %1483 = vmatpush1.msra.mxu0 %v658
        %1484 = vmatprep.subr.mxu0 0.0
        %1485 = vmatpush1.msra.mxu0 %v663
        %1486 = vmatprep.subr.mxu0 0.0
        %1487 = vmatpush1.msra.mxu0 0.0
        %1488 = vmatprep.subr.mxu0 0.0
        %1489 = vmatpush1.msra.mxu0 0.0
        %1490 = vmatprep.subr.mxu0 0.0
        %1491 = vmatpush1.msra.mxu0 0.0
        %1492 = vmatprep.subr.mxu0 0.0
        %1493 = vmatpush1.msra.mxu0 0.0
        %1494 = vmatprep.subr.mxu0 0.0
        %1495 = vmatpush1.msra.mxu0 0.0
        %1496 = vmatprep.subr.mxu0 0.0
        %1497 = vmatpush1.msra.mxu0 0.0
        %1498 = vmatprep.subr.mxu0 0.0
        %1499 = vmatpush1.msra.mxu0 0.0
        %1500 = vmatprep.subr.mxu0 0.0
        %1501 = vmatpush1.msra.mxu0 0.0
        %1502 = vmatprep.subr.mxu0 0.0
        %1503 = vmatpush1.msra.mxu0 0.0
        %1504 = vmatprep.subr.mxu0 0.0
        %1505 = vmatpush1.msra.mxu0 0.0
        %1506 = vmatprep.subr.mxu0 0.0
        %1507 = vmatpush1.msra.mxu0 0.0
        %1508 = vmatprep.subr.mxu0 0.0
        %1509 = vmatpush1.msra.mxu0 0.0
        %1510 = vmatprep.subr.mxu0 0.0
        %1511 = vmatpush1.msra.mxu0 0.0
        %1512 = vmatprep.subr.mxu0 0.0
        %1513 = vmatpush1.msra.mxu0 0.0
        %1514 = vmatprep.subr.mxu0 0.0
        %1515 = vmatpush1.msra.mxu0 0.0
        %1516 = vmatprep.subr.mxu0 0.0
        %1517 = vmatpush1.msra.mxu0 0.0
        %1518 = vmatprep.subr.mxu0 0.0
        %1519 = vmatpush1.msra.mxu0 0.0
        %1520 = vmatprep.subr.mxu0 0.0
        %1521 = vmatpush1.msra.mxu0 0.0
        %1522 = vmatprep.subr.mxu0 0.0
        %1523 = vmatpush1.msra.mxu0 0.0
        %1524 = vmatprep.subr.mxu0 0.0
        %1525 = vmatpush1.msra.mxu0 0.0
        %1526 = vmatprep.subr.mxu0 0.0
        %1527 = vmatpush1.msra.mxu0 0.0
        %1528 = vmatprep.subr.mxu0 0.0
        %1529 = vmatpush1.msra.mxu0 0.0
        %1530 = vmatprep.subr.mxu0 0.0
        %1531 = vmatpush1.msra.mxu0 0.0
        %1532 = vmatprep.subr.mxu0 0.0
        %1533 = vmatpush1.msra.mxu0 0.0
        %1534 = vmatprep.subr.mxu0 0.0
        %1535 = vmatpush1.msra.mxu0 0.0
        %1536 = vmatprep.subr.mxu0 0.0
        %1537 = vmatpush1.msra.mxu0 0.0
        %1538 = vmatprep.subr.mxu0 0.0
        %1539 = vmatpush1.msra.mxu0 0.0
        %1540 = vmatprep.subr.mxu0 0.0
        %1541 = vmatpush1.msra.mxu0 0.0
        %1542 = vmatprep.subr.mxu0 0.0
        %1543 = vmatpush1.msra.mxu0 0.0
        %1544 = vmatprep.subr.mxu0 0.0
        %1545 = vmatpush1.msra.mxu0 0.0
        %1546 = vmatprep.mubr.f32.mxu0 0.0
        %1547 = vmatmul.mubr.f32.gmra.mrb[0].mxu0 %v780
        %v1548 = vpop.f32.mrb[0].mxu0
        %v1549 = vadd.f32 0.0, %v1548
        %v1550 = vpop.f32.mrb[0].mxu0
        %1551 = vdwg.mxu0
        %1552 = vmatprep.subr.mxu0 0.0
        %1553 = vmatpush1.msra.mxu0 %v668
        %1554 = vmatprep.subr.mxu0 0.0
        %1555 = vmatpush1.msra.mxu0 %v673
        %1556 = vmatprep.subr.mxu0 0.0
        %1557 = vmatpush1.msra.mxu0 0.0
        %1558 = vmatprep.subr.mxu0 0.0
        %1559 = vmatpush1.msra.mxu0 0.0
        %1560 = vmatprep.subr.mxu0 0.0
        %1561 = vmatpush1.msra.mxu0 0.0
        %1562 = vmatprep.subr.mxu0 0.0
        %1563 = vmatpush1.msra.mxu0 0.0
        %1564 = vmatprep.subr.mxu0 0.0
        %1565 = vmatpush1.msra.mxu0 0.0
        %1566 = vmatprep.subr.mxu0 0.0
        %1567 = vmatpush1.msra.mxu0 0.0
        %1568 = vmatprep.subr.mxu0 0.0
        %1569 = vmatpush1.msra.mxu0 0.0
        %1570 = vmatprep.subr.mxu0 0.0
        %1571 = vmatpush1.msra.mxu0 0.0
        %1572 = vmatprep.subr.mxu0 0.0
        %1573 = vmatpush1.msra.mxu0 0.0
        %1574 = vmatprep.subr.mxu0 0.0
        %1575 = vmatpush1.msra.mxu0 0.0
        %1576 = vmatprep.subr.mxu0 0.0
        %1577 = vmatpush1.msra.mxu0 0.0
        %1578 = vmatprep.subr.mxu0 0.0
        %1579 = vmatpush1.msra.mxu0 0.0
        %1580 = vmatprep.subr.mxu0 0.0
        %1581 = vmatpush1.msra.mxu0 0.0
        %1582 = vmatprep.subr.mxu0 0.0
        %1583 = vmatpush1.msra.mxu0 0.0
        %1584 = vmatprep.subr.mxu0 0.0
        %1585 = vmatpush1.msra.mxu0 0.0
        %1586 = vmatprep.subr.mxu0 0.0
        %1587 = vmatpush1.msra.mxu0 0.0
        %1588 = vmatprep.subr.mxu0 0.0
        %1589 = vmatpush1.msra.mxu0 0.0
        %1590 = vmatprep.subr.mxu0 0.0
        %1591 = vmatpush1.msra.mxu0 0.0
        %1592 = vmatprep.subr.mxu0 0.0
        %1593 = vmatpush1.msra.mxu0 0.0
        %1594 = vmatprep.subr.mxu0 0.0
        %1595 = vmatpush1.msra.mxu0 0.0
        %1596 = vmatprep.subr.mxu0 0.0
        %1597 = vmatpush1.msra.mxu0 0.0
        %1598 = vmatprep.subr.mxu0 0.0
        %1599 = vmatpush1.msra.mxu0 0.0
        %1600 = vmatprep.subr.mxu0 0.0
        %1601 = vmatpush1.msra.mxu0 0.0
        %1602 = vmatprep.subr.mxu0 0.0
        %1603 = vmatpush1.msra.mxu0 0.0
        %1604 = vmatprep.subr.mxu0 0.0
        %1605 = vmatpush1.msra.mxu0 0.0
        %1606 = vmatprep.subr.mxu0 0.0
        %1607 = vmatpush1.msra.mxu0 0.0
        %1608 = vmatprep.subr.mxu0 0.0
        %1609 = vmatpush1.msra.mxu0 0.0
        %1610 = vmatprep.subr.mxu0 0.0
        %1611 = vmatpush1.msra.mxu0 0.0
        %1612 = vmatprep.subr.mxu0 0.0
        %1613 = vmatpush1.msra.mxu0 0.0
        %1614 = vmatprep.subr.mxu0 0.0
        %1615 = vmatpush1.msra.mxu0 0.0
        %1616 = vmatprep.mubr.f32.mxu0 0.0
        %1617 = vmatmul.mubr.f32.gmra.mrb[0].mxu0 %v780
        %v1618 = vpop.f32.mrb[0].mxu0
        %v1619 = vadd.f32 0.0, %v1618
        %v1620 = vpop.f32.mrb[0].mxu0
        %1621 = vdwg.mxu0
        %1622 = vmatprep.subr.mxu0 0.0
        %1623 = vmatpush1.msra.mxu0 %v678
        %1624 = vmatprep.subr.mxu0 0.0
        %1625 = vmatpush1.msra.mxu0 %v683
        %1626 = vmatprep.subr.mxu0 0.0
        %1627 = vmatpush1.msra.mxu0 0.0
        %1628 = vmatprep.subr.mxu0 0.0
        %1629 = vmatpush1.msra.mxu0 0.0
        %1630 = vmatprep.subr.mxu0 0.0
        %1631 = vmatpush1.msra.mxu0 0.0
        %1632 = vmatprep.subr.mxu0 0.0
        %1633 = vmatpush1.msra.mxu0 0.0
        %1634 = vmatprep.subr.mxu0 0.0
        %1635 = vmatpush1.msra.mxu0 0.0
        %1636 = vmatprep.subr.mxu0 0.0
        %1637 = vmatpush1.msra.mxu0 0.0
        %1638 = vmatprep.subr.mxu0 0.0
        %1639 = vmatpush1.msra.mxu0 0.0
        %1640 = vmatprep.subr.mxu0 0.0
        %1641 = vmatpush1.msra.mxu0 0.0
        %1642 = vmatprep.subr.mxu0 0.0
        %1643 = vmatpush1.msra.mxu0 0.0
        %1644 = vmatprep.subr.mxu0 0.0
        %1645 = vmatpush1.msra.mxu0 0.0
        %1646 = vmatprep.subr.mxu0 0.0
        %1647 = vmatpush1.msra.mxu0 0.0
        %1648 = vmatprep.subr.mxu0 0.0
        %1649 = vmatpush1.msra.mxu0 0.0
        %1650 = vmatprep.subr.mxu0 0.0
        %1651 = vmatpush1.msra.mxu0 0.0
        %1652 = vmatprep.subr.mxu0 0.0
        %1653 = vmatpush1.msra.mxu0 0.0
        %1654 = vmatprep.subr.mxu0 0.0
        %1655 = vmatpush1.msra.mxu0 0.0
        %1656 = vmatprep.subr.mxu0 0.0
        %1657 = vmatpush1.msra.mxu0 0.0
        %1658 = vmatprep.subr.mxu0 0.0
        %1659 = vmatpush1.msra.mxu0 0.0
        %1660 = vmatprep.subr.mxu0 0.0
        %1661 = vmatpush1.msra.mxu0 0.0
        %1662 = vmatprep.subr.mxu0 0.0
        %1663 = vmatpush1.msra.mxu0 0.0
        %1664 = vmatprep.subr.mxu0 0.0
        %1665 = vmatpush1.msra.mxu0 0.0
        %1666 = vmatprep.subr.mxu0 0.0
        %1667 = vmatpush1.msra.mxu0 0.0
        %1668 = vmatprep.subr.mxu0 0.0
        %1669 = vmatpush1.msra.mxu0 0.0
        %1670 = vmatprep.subr.mxu0 0.0
        %1671 = vmatpush1.msra.mxu0 0.0
        %1672 = vmatprep.subr.mxu0 0.0
        %1673 = vmatpush1.msra.mxu0 0.0
        %1674 = vmatprep.subr.mxu0 0.0
        %1675 = vmatpush1.msra.mxu0 0.0
        %1676 = vmatprep.subr.mxu0 0.0
        %1677 = vmatpush1.msra.mxu0 0.0
        %1678 = vmatprep.subr.mxu0 0.0
        %1679 = vmatpush1.msra.mxu0 0.0
        %1680 = vmatprep.subr.mxu0 0.0
        %1681 = vmatpush1.msra.mxu0 0.0
        %1682 = vmatprep.subr.mxu0 0.0
        %1683 = vmatpush1.msra.mxu0 0.0
        %1684 = vmatprep.subr.mxu0 0.0
        %1685 = vmatpush1.msra.mxu0 0.0
        %1686 = vmatprep.mubr.f32.mxu0 0.0
        %1687 = vmatmul.mubr.f32.gmra.mrb[0].mxu0 %v780
        %v1688 = vpop.f32.mrb[0].mxu0
        %v1689 = vadd.f32 0.0, %v1688
        %v1690 = vpop.f32.mrb[0].mxu0
        %1691 = vdwg.mxu0
        %1692 = vmatprep.subr.mxu0 0.0
        %1693 = vmatpush1.msra.mxu0 %v688
        %1694 = vmatprep.subr.mxu0 0.0
        %1695 = vmatpush1.msra.mxu0 %v693
        %1696 = vmatprep.subr.mxu0 0.0
        %1697 = vmatpush1.msra.mxu0 0.0
        %1698 = vmatprep.subr.mxu0 0.0
        %1699 = vmatpush1.msra.mxu0 0.0
        %1700 = vmatprep.subr.mxu0 0.0
        %1701 = vmatpush1.msra.mxu0 0.0
        %1702 = vmatprep.subr.mxu0 0.0
        %1703 = vmatpush1.msra.mxu0 0.0
        %1704 = vmatprep.subr.mxu0 0.0
        %1705 = vmatpush1.msra.mxu0 0.0
        %1706 = vmatprep.subr.mxu0 0.0
        %1707 = vmatpush1.msra.mxu0 0.0
        %1708 = vmatprep.subr.mxu0 0.0
        %1709 = vmatpush1.msra.mxu0 0.0
        %1710 = vmatprep.subr.mxu0 0.0
        %1711 = vmatpush1.msra.mxu0 0.0
        %1712 = vmatprep.subr.mxu0 0.0
        %1713 = vmatpush1.msra.mxu0 0.0
        %1714 = vmatprep.subr.mxu0 0.0
        %1715 = vmatpush1.msra.mxu0 0.0
        %1716 = vmatprep.subr.mxu0 0.0
        %1717 = vmatpush1.msra.mxu0 0.0
        %1718 = vmatprep.subr.mxu0 0.0
        %1719 = vmatpush1.msra.mxu0 0.0
        %1720 = vmatprep.subr.mxu0 0.0
        %1721 = vmatpush1.msra.mxu0 0.0
        %1722 = vmatprep.subr.mxu0 0.0
        %1723 = vmatpush1.msra.mxu0 0.0
        %1724 = vmatprep.subr.mxu0 0.0
        %1725 = vmatpush1.msra.mxu0 0.0
        %1726 = vmatprep.subr.mxu0 0.0
        %1727 = vmatpush1.msra.mxu0 0.0
        %1728 = vmatprep.subr.mxu0 0.0
        %1729 = vmatpush1.msra.mxu0 0.0
        %1730 = vmatprep.subr.mxu0 0.0
        %1731 = vmatpush1.msra.mxu0 0.0
        %1732 = vmatprep.subr.mxu0 0.0
        %1733 = vmatpush1.msra.mxu0 0.0
        %1734 = vmatprep.subr.mxu0 0.0
        %1735 = vmatpush1.msra.mxu0 0.0
        %1736 = vmatprep.subr.mxu0 0.0
        %1737 = vmatpush1.msra.mxu0 0.0
        %1738 = vmatprep.subr.mxu0 0.0
        %1739 = vmatpush1.msra.mxu0 0.0
        %1740 = vmatprep.subr.mxu0 0.0
        %1741 = vmatpush1.msra.mxu0 0.0
        %1742 = vmatprep.subr.mxu0 0.0
        %1743 = vmatpush1.msra.mxu0 0.0
        %1744 = vmatprep.subr.mxu0 0.0
        %1745 = vmatpush1.msra.mxu0 0.0
        %1746 = vmatprep.subr.mxu0 0.0
        %1747 = vmatpush1.msra.mxu0 0.0
        %1748 = vmatprep.subr.mxu0 0.0
        %1749 = vmatpush1.msra.mxu0 0.0
        %1750 = vmatprep.subr.mxu0 0.0
        %1751 = vmatpush1.msra.mxu0 0.0
        %1752 = vmatprep.subr.mxu0 0.0
        %1753 = vmatpush1.msra.mxu0 0.0
        %1754 = vmatprep.subr.mxu0 0.0
        %1755 = vmatpush1.msra.mxu0 0.0
        %1756 = vmatprep.mubr.f32.mxu0 0.0
        %1757 = vmatmul.mubr.f32.gmra.mrb[0].mxu0 %v780
        %v1758 = vpop.f32.mrb[0].mxu0
        %v1759 = vadd.f32 0.0, %v1758
        %v1760 = vpop.f32.mrb[0].mxu0
        %1761 = vdwg.mxu0
        %1762 = vmatprep.subr.mxu0 0.0
        %1763 = vmatpush1.msra.mxu0 %v698
        %1764 = vmatprep.subr.mxu0 0.0
        %1765 = vmatpush1.msra.mxu0 %v703
        %1766 = vmatprep.subr.mxu0 0.0
        %1767 = vmatpush1.msra.mxu0 0.0
        %1768 = vmatprep.subr.mxu0 0.0
        %1769 = vmatpush1.msra.mxu0 0.0
        %1770 = vmatprep.subr.mxu0 0.0
        %1771 = vmatpush1.msra.mxu0 0.0
        %1772 = vmatprep.subr.mxu0 0.0
        %1773 = vmatpush1.msra.mxu0 0.0
        %1774 = vmatprep.subr.mxu0 0.0
        %1775 = vmatpush1.msra.mxu0 0.0
        %1776 = vmatprep.subr.mxu0 0.0
        %1777 = vmatpush1.msra.mxu0 0.0
        %1778 = vmatprep.subr.mxu0 0.0
        %1779 = vmatpush1.msra.mxu0 0.0
        %1780 = vmatprep.subr.mxu0 0.0
        %1781 = vmatpush1.msra.mxu0 0.0
        %1782 = vmatprep.subr.mxu0 0.0
        %1783 = vmatpush1.msra.mxu0 0.0
        %1784 = vmatprep.subr.mxu0 0.0
        %1785 = vmatpush1.msra.mxu0 0.0
        %1786 = vmatprep.subr.mxu0 0.0
        %1787 = vmatpush1.msra.mxu0 0.0
        %1788 = vmatprep.subr.mxu0 0.0
        %1789 = vmatpush1.msra.mxu0 0.0
        %1790 = vmatprep.subr.mxu0 0.0
        %1791 = vmatpush1.msra.mxu0 0.0
        %1792 = vmatprep.subr.mxu0 0.0
        %1793 = vmatpush1.msra.mxu0 0.0
        %1794 = vmatprep.subr.mxu0 0.0
        %1795 = vmatpush1.msra.mxu0 0.0
        %1796 = vmatprep.subr.mxu0 0.0
        %1797 = vmatpush1.msra.mxu0 0.0
        %1798 = vmatprep.subr.mxu0 0.0
        %1799 = vmatpush1.msra.mxu0 0.0
        %1800 = vmatprep.subr.mxu0 0.0
        %1801 = vmatpush1.msra.mxu0 0.0
        %1802 = vmatprep.subr.mxu0 0.0
        %1803 = vmatpush1.msra.mxu0 0.0
        %1804 = vmatprep.subr.mxu0 0.0
        %1805 = vmatpush1.msra.mxu0 0.0
        %1806 = vmatprep.subr.mxu0 0.0
        %1807 = vmatpush1.msra.mxu0 0.0
        %1808 = vmatprep.subr.mxu0 0.0
        %1809 = vmatpush1.msra.mxu0 0.0
        %1810 = vmatprep.subr.mxu0 0.0
        %1811 = vmatpush1.msra.mxu0 0.0
        %1812 = vmatprep.subr.mxu0 0.0
        %1813 = vmatpush1.msra.mxu0 0.0
        %1814 = vmatprep.subr.mxu0 0.0
        %1815 = vmatpush1.msra.mxu0 0.0
        %1816 = vmatprep.subr.mxu0 0.0
        %1817 = vmatpush1.msra.mxu0 0.0
        %1818 = vmatprep.subr.mxu0 0.0
        %1819 = vmatpush1.msra.mxu0 0.0
        %1820 = vmatprep.subr.mxu0 0.0
        %1821 = vmatpush1.msra.mxu0 0.0
        %1822 = vmatprep.subr.mxu0 0.0
        %1823 = vmatpush1.msra.mxu0 0.0
        %1824 = vmatprep.subr.mxu0 0.0
        %1825 = vmatpush1.msra.mxu0 0.0
        %1826 = vmatprep.mubr.f32.mxu0 0.0
        %1827 = vmatmul.mubr.f32.gmra.mrb[0].mxu0 %v780
        %v1828 = vpop.f32.mrb[0].mxu0
        %v1829 = vadd.f32 0.0, %v1828
        %v1830 = vpop.f32.mrb[0].mxu0
        %1831 = vdwg.mxu0
        %1832 = vmatprep.subr.mxu0 0.0
        %1833 = vmatpush1.msra.mxu0 %v708
        %1834 = vmatprep.subr.mxu0 0.0
        %1835 = vmatpush1.msra.mxu0 %v713
        %1836 = vmatprep.subr.mxu0 0.0
        %1837 = vmatpush1.msra.mxu0 0.0
        %1838 = vmatprep.subr.mxu0 0.0
        %1839 = vmatpush1.msra.mxu0 0.0
        %1840 = vmatprep.subr.mxu0 0.0
        %1841 = vmatpush1.msra.mxu0 0.0
        %1842 = vmatprep.subr.mxu0 0.0
        %1843 = vmatpush1.msra.mxu0 0.0
        %1844 = vmatprep.subr.mxu0 0.0
        %1845 = vmatpush1.msra.mxu0 0.0
        %1846 = vmatprep.subr.mxu0 0.0
        %1847 = vmatpush1.msra.mxu0 0.0
        %1848 = vmatprep.subr.mxu0 0.0
        %1849 = vmatpush1.msra.mxu0 0.0
        %1850 = vmatprep.subr.mxu0 0.0
        %1851 = vmatpush1.msra.mxu0 0.0
        %1852 = vmatprep.subr.mxu0 0.0
        %1853 = vmatpush1.msra.mxu0 0.0
        %1854 = vmatprep.subr.mxu0 0.0
        %1855 = vmatpush1.msra.mxu0 0.0
        %1856 = vmatprep.subr.mxu0 0.0
        %1857 = vmatpush1.msra.mxu0 0.0
        %1858 = vmatprep.subr.mxu0 0.0
        %1859 = vmatpush1.msra.mxu0 0.0
        %1860 = vmatprep.subr.mxu0 0.0
        %1861 = vmatpush1.msra.mxu0 0.0
        %1862 = vmatprep.subr.mxu0 0.0
        %1863 = vmatpush1.msra.mxu0 0.0
        %1864 = vmatprep.subr.mxu0 0.0
        %1865 = vmatpush1.msra.mxu0 0.0
        %1866 = vmatprep.subr.mxu0 0.0
        %1867 = vmatpush1.msra.mxu0 0.0
        %1868 = vmatprep.subr.mxu0 0.0
        %1869 = vmatpush1.msra.mxu0 0.0
        %1870 = vmatprep.subr.mxu0 0.0
        %1871 = vmatpush1.msra.mxu0 0.0
        %1872 = vmatprep.subr.mxu0 0.0
        %1873 = vmatpush1.msra.mxu0 0.0
        %1874 = vmatprep.subr.mxu0 0.0
        %1875 = vmatpush1.msra.mxu0 0.0
        %1876 = vmatprep.subr.mxu0 0.0
        %1877 = vmatpush1.msra.mxu0 0.0
        %1878 = vmatprep.subr.mxu0 0.0
        %1879 = vmatpush1.msra.mxu0 0.0
        %1880 = vmatprep.subr.mxu0 0.0
        %1881 = vmatpush1.msra.mxu0 0.0
        %1882 = vmatprep.subr.mxu0 0.0
        %1883 = vmatpush1.msra.mxu0 0.0
        %1884 = vmatprep.subr.mxu0 0.0
        %1885 = vmatpush1.msra.mxu0 0.0
        %1886 = vmatprep.subr.mxu0 0.0
        %1887 = vmatpush1.msra.mxu0 0.0
        %1888 = vmatprep.subr.mxu0 0.0
        %1889 = vmatpush1.msra.mxu0 0.0
        %1890 = vmatprep.subr.mxu0 0.0
        %1891 = vmatpush1.msra.mxu0 0.0
        %1892 = vmatprep.subr.mxu0 0.0
        %1893 = vmatpush1.msra.mxu0 0.0
        %1894 = vmatprep.subr.mxu0 0.0
        %1895 = vmatpush1.msra.mxu0 0.0
        %1896 = vmatprep.mubr.f32.mxu0 0.0
        %1897 = vmatmul.mubr.f32.gmra.mrb[0].mxu0 %v780
        %v1898 = vpop.f32.mrb[0].mxu0
        %v1899 = vadd.f32 0.0, %v1898
        %v1900 = vpop.f32.mrb[0].mxu0
        %1901 = vdwg.mxu0
        %v1902 = vld [vmem:[%s314] sm:$0xff]
        %v1903 = vld [vmem:[%s314 + $0x8] sm:$0xff]
        %1904 = vxpose.xlu0.b32.start [1/16] %v1902, 128
        %1905 = vxpose.xlu0.b32.cont [2/16] %v1903, 128
        %1906 = vxpose.xlu0.b32.cont [3/16] 0.0, 128
        %1907 = vxpose.xlu0.b32.cont [4/16] 0.0, 128
        %1908 = vxpose.xlu0.b32.cont [5/16] 0.0, 128
        %1909 = vxpose.xlu0.b32.cont [6/16] 0.0, 128
        %1910 = vxpose.xlu0.b32.cont [7/16] 0.0, 128
        %1911 = vxpose.xlu0.b32.cont [8/16] 0.0, 128
        %1912 = vxpose.xlu0.b32.cont [9/16] 0.0, 128
        %1913 = vxpose.xlu0.b32.cont [10/16] 0.0, 128
        %1914 = vxpose.xlu0.b32.cont [11/16] 0.0, 128
        %1915 = vxpose.xlu0.b32.cont [12/16] 0.0, 128
        %1916 = vxpose.xlu0.b32.cont [13/16] 0.0, 128
        %1917 = vxpose.xlu0.b32.cont [14/16] 0.0, 128
        %1918 = vxpose.xlu0.b32.cont [15/16] 0.0, 128
        %1919 = vxpose.xlu0.b32.end [16/16] 0.0, 128
        %v1920 = vpop.trf.xlu0
        %v1921 = vpop.trf.xlu0
        %v1922 = vpop.trf.xlu0
        %v1923 = vpop.trf.xlu0
        %v1924 = vpop.trf.xlu0
        %v1925 = vpop.trf.xlu0
        %v1926 = vpop.trf.xlu0
        %v1927 = vpop.trf.xlu0
        %v1928 = vpop.trf.xlu0
        %v1929 = vpop.trf.xlu0
        %v1930 = vpop.trf.xlu0
        %v1931 = vpop.trf.xlu0
        %v1932 = vpop.trf.xlu0
        %v1933 = vpop.trf.xlu0
        %v1934 = vpop.trf.xlu0
        %v1935 = vpop.trf.xlu0
        %v1936 = vcombine.low %v849, %v989
        %v1937 = vcombine.high %v849, %v989
        %v1939 = vunpack.c.l.s4 1983009808
        %v1940 = vunpack.c.0.s8 %v1939
        %v1941 = vlaneseq
        %v1942 = vshrl.u32 %v1941, 7
        %v1943 = vsub.s32 %v1940, %v1942
        %v1944 = vrot.slane %v1936, %v1943
        %v1946 = vunpack.c.l.s4 1983009808
        %v1947 = vunpack.c.0.s8 %v1946
        %v1948 = vlaneseq
        %v1949 = vshrl.u32 %v1948, 7
        %v1950 = vsub.s32 %v1947, %v1949
        %v1951 = vrot.slane %v1937, %v1950
        %v1952 = vcombine.low %v919, %v1059
        %v1953 = vcombine.high %v919, %v1059
        %v1955 = vunpack.c.l.s4 1983009808
        %v1956 = vunpack.c.0.s8 %v1955
        %v1957 = vlaneseq
        %v1958 = vshrl.u32 %v1957, 7
        %v1959 = vsub.s32 %v1956, %v1958
        %v1960 = vrot.slane %v1952, %v1959
        %v1962 = vunpack.c.l.s4 1983009808
        %v1963 = vunpack.c.0.s8 %v1962
        %v1964 = vlaneseq
        %v1965 = vshrl.u32 %v1964, 7
        %v1966 = vsub.s32 %v1963, %v1965
        %v1967 = vrot.slane %v1953, %v1966
        %v1968 = vcombine.low %v1129, %v1269
        %v1969 = vcombine.high %v1129, %v1269
        %v1971 = vunpack.c.l.s4 1983009808
        %v1972 = vunpack.c.0.s8 %v1971
        %v1973 = vlaneseq
        %v1974 = vshrl.u32 %v1973, 7
        %v1975 = vsub.s32 %v1972, %v1974
        %v1976 = vrot.slane %v1968, %v1975
        %v1978 = vunpack.c.l.s4 1983009808
        %v1979 = vunpack.c.0.s8 %v1978
        %v1980 = vlaneseq
        %v1981 = vshrl.u32 %v1980, 7
        %v1982 = vsub.s32 %v1979, %v1981
        %v1983 = vrot.slane %v1969, %v1982
        %v1984 = vcombine.low %v1199, %v1339
        %v1985 = vcombine.high %v1199, %v1339
        %v1987 = vunpack.c.l.s4 1983009808
        %v1988 = vunpack.c.0.s8 %v1987
        %v1989 = vlaneseq
        %v1990 = vshrl.u32 %v1989, 7
        %v1991 = vsub.s32 %v1988, %v1990
        %v1992 = vrot.slane %v1984, %v1991
        %v1994 = vunpack.c.l.s4 1983009808
        %v1995 = vunpack.c.0.s8 %v1994
        %v1996 = vlaneseq
        %v1997 = vshrl.u32 %v1996, 7
        %v1998 = vsub.s32 %v1995, %v1997
        %v1999 = vrot.slane %v1985, %v1998
        %v2000 = vcombine.low %v1944, %v1960
        %v2001 = vcombine.high %v1944, %v1960
        %v2003 = vunpack.c.l.s4 1934713408
        %v2004 = vunpack.c.0.s8 %v2003
        %v2005 = vlaneseq
        %v2006 = vshrl.u32 %v2005, 7
        %v2007 = vsub.s32 %v2004, %v2006
        %v2008 = vrot.slane %v2000, %v2007
        %v2010 = vunpack.c.l.s4 1934713408
        %v2011 = vunpack.c.0.s8 %v2010
        %v2012 = vlaneseq
        %v2013 = vshrl.u32 %v2012, 7
        %v2014 = vsub.s32 %v2011, %v2013
        %v2015 = vrot.slane %v2001, %v2014
        %v2016 = vcombine.low %v1951, %v1967
        %v2017 = vcombine.high %v1951, %v1967
        %v2019 = vunpack.c.l.s4 1934713408
        %v2020 = vunpack.c.0.s8 %v2019
        %v2021 = vlaneseq
        %v2022 = vshrl.u32 %v2021, 7
        %v2023 = vsub.s32 %v2020, %v2022
        %v2024 = vrot.slane %v2016, %v2023
        %v2026 = vunpack.c.l.s4 1934713408
        %v2027 = vunpack.c.0.s8 %v2026
        %v2028 = vlaneseq
        %v2029 = vshrl.u32 %v2028, 7
        %v2030 = vsub.s32 %v2027, %v2029
        %v2031 = vrot.slane %v2017, %v2030
        %v2032 = vcombine.low %v1976, %v1992
        %v2033 = vcombine.high %v1976, %v1992
        %v2035 = vunpack.c.l.s4 1934713408
        %v2036 = vunpack.c.0.s8 %v2035
        %v2037 = vlaneseq
        %v2038 = vshrl.u32 %v2037, 7
        %v2039 = vsub.s32 %v2036, %v2038
        %v2040 = vrot.slane %v2032, %v2039
        %v2042 = vunpack.c.l.s4 1934713408
        %v2043 = vunpack.c.0.s8 %v2042
        %v2044 = vlaneseq
        %v2045 = vshrl.u32 %v2044, 7
        %v2046 = vsub.s32 %v2043, %v2045
        %v2047 = vrot.slane %v2033, %v2046
        %v2048 = vcombine.low %v1983, %v1999
        %v2049 = vcombine.high %v1983, %v1999
        %v2051 = vunpack.c.l.s4 1934713408
        %v2052 = vunpack.c.0.s8 %v2051
        %v2053 = vlaneseq
        %v2054 = vshrl.u32 %v2053, 7
        %v2055 = vsub.s32 %v2052, %v2054
        %v2056 = vrot.slane %v2048, %v2055
        %v2058 = vunpack.c.l.s4 1934713408
        %v2059 = vunpack.c.0.s8 %v2058
        %v2060 = vlaneseq
        %v2061 = vshrl.u32 %v2060, 7
        %v2062 = vsub.s32 %v2059, %v2061
        %v2063 = vrot.slane %v2049, %v2062
        %v2064 = vcombine.low %v2008, %v2040
        %v2065 = vcombine.high %v2008, %v2040
        %v2066 = vcombine.low %v2015, %v2047
        %v2067 = vcombine.high %v2015, %v2047
        %v2068 = vcombine.low %v2024, %v2056
        %v2069 = vcombine.high %v2024, %v2056
        %v2070 = vcombine.low %v2031, %v2063
        %v2071 = vcombine.high %v2031, %v2063
        %v2072 = vcombine.low %v1409, %v1549
        %v2073 = vcombine.high %v1409, %v1549
        %v2075 = vunpack.c.l.s4 1983009808
        %v2076 = vunpack.c.0.s8 %v2075
        %v2077 = vlaneseq
        %v2078 = vshrl.u32 %v2077, 7
        %v2079 = vsub.s32 %v2076, %v2078
        %v2080 = vrot.slane %v2072, %v2079
        %v2082 = vunpack.c.l.s4 1983009808
        %v2083 = vunpack.c.0.s8 %v2082
        %v2084 = vlaneseq
        %v2085 = vshrl.u32 %v2084, 7
        %v2086 = vsub.s32 %v2083, %v2085
        %v2087 = vrot.slane %v2073, %v2086
        %v2088 = vcombine.low %v1479, %v1619
        %v2089 = vcombine.high %v1479, %v1619
        %v2091 = vunpack.c.l.s4 1983009808
        %v2092 = vunpack.c.0.s8 %v2091
        %v2093 = vlaneseq
        %v2094 = vshrl.u32 %v2093, 7
        %v2095 = vsub.s32 %v2092, %v2094
        %v2096 = vrot.slane %v2088, %v2095
        %v2098 = vunpack.c.l.s4 1983009808
        %v2099 = vunpack.c.0.s8 %v2098
        %v2100 = vlaneseq
        %v2101 = vshrl.u32 %v2100, 7
        %v2102 = vsub.s32 %v2099, %v2101
        %v2103 = vrot.slane %v2089, %v2102
        %v2104 = vcombine.low %v1689, %v1829
        %v2105 = vcombine.high %v1689, %v1829
        %v2107 = vunpack.c.l.s4 1983009808
        %v2108 = vunpack.c.0.s8 %v2107
        %v2109 = vlaneseq
        %v2110 = vshrl.u32 %v2109, 7
        %v2111 = vsub.s32 %v2108, %v2110
        %v2112 = vrot.slane %v2104, %v2111
        %v2114 = vunpack.c.l.s4 1983009808
        %v2115 = vunpack.c.0.s8 %v2114
        %v2116 = vlaneseq
        %v2117 = vshrl.u32 %v2116, 7
        %v2118 = vsub.s32 %v2115, %v2117
        %v2119 = vrot.slane %v2105, %v2118
        %v2120 = vcombine.low %v1759, %v1899
        %v2121 = vcombine.high %v1759, %v1899
        %v2123 = vunpack.c.l.s4 1983009808
        %v2124 = vunpack.c.0.s8 %v2123
        %v2125 = vlaneseq
        %v2126 = vshrl.u32 %v2125, 7
        %v2127 = vsub.s32 %v2124, %v2126
        %v2128 = vrot.slane %v2120, %v2127
        %v2130 = vunpack.c.l.s4 1983009808
        %v2131 = vunpack.c.0.s8 %v2130
        %v2132 = vlaneseq
        %v2133 = vshrl.u32 %v2132, 7
        %v2134 = vsub.s32 %v2131, %v2133
        %v2135 = vrot.slane %v2121, %v2134
        %v2136 = vcombine.low %v2080, %v2096
        %v2137 = vcombine.high %v2080, %v2096
        %v2139 = vunpack.c.l.s4 1934713408
        %v2140 = vunpack.c.0.s8 %v2139
        %v2141 = vlaneseq
        %v2142 = vshrl.u32 %v2141, 7
        %v2143 = vsub.s32 %v2140, %v2142
        %v2144 = vrot.slane %v2136, %v2143
        %v2146 = vunpack.c.l.s4 1934713408
        %v2147 = vunpack.c.0.s8 %v2146
        %v2148 = vlaneseq
        %v2149 = vshrl.u32 %v2148, 7
        %v2150 = vsub.s32 %v2147, %v2149
        %v2151 = vrot.slane %v2137, %v2150
        %v2152 = vcombine.low %v2087, %v2103
        %v2153 = vcombine.high %v2087, %v2103
        %v2155 = vunpack.c.l.s4 1934713408
        %v2156 = vunpack.c.0.s8 %v2155
        %v2157 = vlaneseq
        %v2158 = vshrl.u32 %v2157, 7
        %v2159 = vsub.s32 %v2156, %v2158
        %v2160 = vrot.slane %v2152, %v2159
        %v2162 = vunpack.c.l.s4 1934713408
        %v2163 = vunpack.c.0.s8 %v2162
        %v2164 = vlaneseq
        %v2165 = vshrl.u32 %v2164, 7
        %v2166 = vsub.s32 %v2163, %v2165
        %v2167 = vrot.slane %v2153, %v2166
        %v2168 = vcombine.low %v2112, %v2128
        %v2169 = vcombine.high %v2112, %v2128
        %v2171 = vunpack.c.l.s4 1934713408
        %v2172 = vunpack.c.0.s8 %v2171
        %v2173 = vlaneseq
        %v2174 = vshrl.u32 %v2173, 7
        %v2175 = vsub.s32 %v2172, %v2174
        %v2176 = vrot.slane %v2168, %v2175
        %v2178 = vunpack.c.l.s4 1934713408
        %v2179 = vunpack.c.0.s8 %v2178
        %v2180 = vlaneseq
        %v2181 = vshrl.u32 %v2180, 7
        %v2182 = vsub.s32 %v2179, %v2181
        %v2183 = vrot.slane %v2169, %v2182
        %v2184 = vcombine.low %v2119, %v2135
        %v2185 = vcombine.high %v2119, %v2135
        %v2187 = vunpack.c.l.s4 1934713408
        %v2188 = vunpack.c.0.s8 %v2187
        %v2189 = vlaneseq
        %v2190 = vshrl.u32 %v2189, 7
        %v2191 = vsub.s32 %v2188, %v2190
        %v2192 = vrot.slane %v2184, %v2191
        %v2194 = vunpack.c.l.s4 1934713408
        %v2195 = vunpack.c.0.s8 %v2194
        %v2196 = vlaneseq
        %v2197 = vshrl.u32 %v2196, 7
        %v2198 = vsub.s32 %v2195, %v2197
        %v2199 = vrot.slane %v2185, %v2198
        %v2200 = vcombine.low %v2144, %v2176
        %v2201 = vcombine.high %v2144, %v2176
        %v2202 = vcombine.low %v2151, %v2183
        %v2203 = vcombine.high %v2151, %v2183
        %v2204 = vcombine.low %v2160, %v2192
        %v2205 = vcombine.high %v2160, %v2192
        %v2206 = vcombine.low %v2167, %v2199
        %v2207 = vcombine.high %v2167, %v2199
        %2210 = vrot.lane.b32.xlu0 %v2065, 32
        %v2211 = vpop.permute.xlu0 %2210
        %2212 = vrot.lane.b32.xlu0 %v2201, 32
        %v2213 = vpop.permute.xlu0 %2212
        %2218 = vrot.lane.b32.xlu0 %v2066, 64
        %v2219 = vpop.permute.xlu0 %2218
        %2220 = vrot.lane.b32.xlu0 %v2202, 64
        %v2221 = vpop.permute.xlu0 %2220
        %2226 = vrot.lane.b32.xlu0 %v2067, 96
        %v2227 = vpop.permute.xlu0 %2226
        %2228 = vrot.lane.b32.xlu0 %v2203, 96
        %v2229 = vpop.permute.xlu0 %2228
        %2234 = vrot.lane.b32.xlu0 %v2069, 32
        %v2235 = vpop.permute.xlu0 %2234
        %2236 = vrot.lane.b32.xlu0 %v2205, 32
        %v2237 = vpop.permute.xlu0 %2236
        %2242 = vrot.lane.b32.xlu0 %v2070, 64
        %v2243 = vpop.permute.xlu0 %2242
        %2244 = vrot.lane.b32.xlu0 %v2206, 64
        %v2245 = vpop.permute.xlu0 %2244
        %2250 = vrot.lane.b32.xlu0 %v2071, 96
        %v2251 = vpop.permute.xlu0 %2250
        %2252 = vrot.lane.b32.xlu0 %v2207, 96
        %v2253 = vpop.permute.xlu0 %2252
        %v2256 = vsel %vm716, %v2064, %v2211
        %v2257 = vsel %vm716, %v2200, %v2213
        %vm2258 = vcmask 523264
        %v2259 = vsel %vm2258, %v2256, %v2219
        %v2260 = vsel %vm2258, %v2257, %v2221
        %vm2261 = vcmask 785408
        %v2262 = vsel %vm2261, %v2259, %v2227
        %v2263 = vsel %vm2261, %v2260, %v2229
        %v2264 = vsel %vm716, %v2068, %v2235
        %v2265 = vsel %vm716, %v2204, %v2237
        %v2266 = vsel %vm2258, %v2264, %v2243
        %v2267 = vsel %vm2258, %v2265, %v2245
        %v2268 = vsel %vm2261, %v2266, %v2251
        %v2269 = vsel %vm2261, %v2267, %v2253
        %v2271 = vsel %vm778, %v1920, 0
        %2273 = vmatprep.subr.mxu0 %v2268
        %2274 = vmatpush1.msra.mxu0 %v2262
        %2275 = vmatprep.subr.mxu0 %v2269
        %2276 = vmatpush1.msra.mxu0 %v2263
        %2277 = vmatprep.subr.mxu0 0.0
        %2278 = vmatpush1.msra.mxu0 0.0
        %2279 = vmatprep.subr.mxu0 0.0
        %2280 = vmatpush1.msra.mxu0 0.0
        %2281 = vmatprep.subr.mxu0 0.0
        %2282 = vmatpush1.msra.mxu0 0.0
        %2283 = vmatprep.subr.mxu0 0.0
        %2284 = vmatpush1.msra.mxu0 0.0
        %2285 = vmatprep.subr.mxu0 0.0
        %2286 = vmatpush1.msra.mxu0 0.0
        %2287 = vmatprep.subr.mxu0 0.0
        %2288 = vmatpush1.msra.mxu0 0.0
        %2289 = vmatprep.subr.mxu0 0.0
        %2290 = vmatpush1.msra.mxu0 0.0
        %2291 = vmatprep.subr.mxu0 0.0
        %2292 = vmatpush1.msra.mxu0 0.0
        %2293 = vmatprep.subr.mxu0 0.0
        %2294 = vmatpush1.msra.mxu0 0.0
        %2295 = vmatprep.subr.mxu0 0.0
        %2296 = vmatpush1.msra.mxu0 0.0
        %2297 = vmatprep.subr.mxu0 0.0
        %2298 = vmatpush1.msra.mxu0 0.0
        %2299 = vmatprep.subr.mxu0 0.0
        %2300 = vmatpush1.msra.mxu0 0.0
        %2301 = vmatprep.subr.mxu0 0.0
        %2302 = vmatpush1.msra.mxu0 0.0
        %2303 = vmatprep.subr.mxu0 0.0
        %2304 = vmatpush1.msra.mxu0 0.0
        %2305 = vmatprep.subr.mxu0 0.0
        %2306 = vmatpush1.msra.mxu0 0.0
        %2307 = vmatprep.subr.mxu0 0.0
        %2308 = vmatpush1.msra.mxu0 0.0
        %2309 = vmatprep.subr.mxu0 0.0
        %2310 = vmatpush1.msra.mxu0 0.0
        %2311 = vmatprep.subr.mxu0 0.0
        %2312 = vmatpush1.msra.mxu0 0.0
        %2313 = vmatprep.subr.mxu0 0.0
        %2314 = vmatpush1.msra.mxu0 0.0
        %2315 = vmatprep.subr.mxu0 0.0
        %2316 = vmatpush1.msra.mxu0 0.0
        %2317 = vmatprep.subr.mxu0 0.0
        %2318 = vmatpush1.msra.mxu0 0.0
        %2319 = vmatprep.subr.mxu0 0.0
        %2320 = vmatpush1.msra.mxu0 0.0
        %2321 = vmatprep.subr.mxu0 0.0
        %2322 = vmatpush1.msra.mxu0 0.0
        %2323 = vmatprep.subr.mxu0 0.0
        %2324 = vmatpush1.msra.mxu0 0.0
        %2325 = vmatprep.subr.mxu0 0.0
        %2326 = vmatpush1.msra.mxu0 0.0
        %2327 = vmatprep.subr.mxu0 0.0
        %2328 = vmatpush1.msra.mxu0 0.0
        %2329 = vmatprep.subr.mxu0 0.0
        %2330 = vmatpush1.msra.mxu0 0.0
        %2331 = vmatprep.subr.mxu0 0.0
        %2332 = vmatpush1.msra.mxu0 0.0
        %2333 = vmatprep.subr.mxu0 0.0
        %2334 = vmatpush1.msra.mxu0 0.0
        %2335 = vmatprep.subr.mxu0 0.0
        %2336 = vmatpush1.msra.mxu0 0.0
        %2337 = vmatprep.mubr.f32.mxu0 0.0
        %2338 = vmatmul.mubr.f32.gmra.mrb[0].mxu0 %v2271
        %v2339 = vpop.f32.mrb[0].mxu0
        %v2340 = vadd.f32 0.0, %v2339
        %v2341 = vpop.f32.mrb[0].mxu0
        %v2342 = vadd.f32 0.0, %v2341
        %2343 = vdwg.mxu0
        %v2344 = vld [vmem:[%s298] sm:$0xff]
        %v2345 = vld [vmem:[%s298 + $0x8] sm:$0xff]
        %v2346 = vld [vmem:[%s298 + $0x10] sm:$0xff]
        %v2347 = vld [vmem:[%s298 + $0x18] sm:$0xff]
        %v2348 = vld [vmem:[%s298 + $0x20] sm:$0xff]
        %v2349 = vld [vmem:[%s298 + $0x28] sm:$0xff]
        %v2350 = vld [vmem:[%s298 + $0x30] sm:$0xff]
        %v2351 = vld [vmem:[%s298 + $0x38] sm:$0xff]
        %2353 = vrot.lane.b32.xlu0 %v2340, 96
        %v2354 = vpop.permute.xlu0 %2353
        %2356 = vrot.lane.b32.xlu0 %v2340, 64
        %v2357 = vpop.permute.xlu0 %2356
        %2359 = vrot.lane.b32.xlu0 %v2340, 32
        %v2360 = vpop.permute.xlu0 %2359
        %2363 = vrot.lane.b32.xlu0 %v2342, 96
        %v2364 = vpop.permute.xlu0 %2363
        %2366 = vrot.lane.b32.xlu0 %v2342, 64
        %v2367 = vpop.permute.xlu0 %2366
        %2369 = vrot.lane.b32.xlu0 %v2342, 32
        %v2370 = vpop.permute.xlu0 %2369
        %v2372 = vcombine.low %v2340, %v2357
        %v2373 = vcombine.high %v2340, %v2357
        %v2375 = vunpack.c.l.s4 1983009808
        %v2376 = vunpack.c.0.s8 %v2375
        %v2377 = vlaneseq
        %v2378 = vshrl.u32 %v2377, 7
        %v2379 = vsub.s32 %v2376, %v2378
        %v2380 = vrot.slane %v2372, %v2379
        %v2382 = vunpack.c.l.s4 1983009808
        %v2383 = vunpack.c.0.s8 %v2382
        %v2384 = vlaneseq
        %v2385 = vshrl.u32 %v2384, 7
        %v2386 = vsub.s32 %v2383, %v2385
        %v2387 = vrot.slane %v2373, %v2386
        %v2388 = vcombine.low %v2354, %v2360
        %v2389 = vcombine.high %v2354, %v2360
        %v2391 = vunpack.c.l.s4 1983009808
        %v2392 = vunpack.c.0.s8 %v2391
        %v2393 = vlaneseq
        %v2394 = vshrl.u32 %v2393, 7
        %v2395 = vsub.s32 %v2392, %v2394
        %v2396 = vrot.slane %v2388, %v2395
        %v2398 = vunpack.c.l.s4 1983009808
        %v2399 = vunpack.c.0.s8 %v2398
        %v2400 = vlaneseq
        %v2401 = vshrl.u32 %v2400, 7
        %v2402 = vsub.s32 %v2399, %v2401
        %v2403 = vrot.slane %v2389, %v2402
        %v2404 = vcombine.low %v2342, %v2367
        %v2405 = vcombine.high %v2342, %v2367
        %v2407 = vunpack.c.l.s4 1983009808
        %v2408 = vunpack.c.0.s8 %v2407
        %v2409 = vlaneseq
        %v2410 = vshrl.u32 %v2409, 7
        %v2411 = vsub.s32 %v2408, %v2410
        %v2412 = vrot.slane %v2404, %v2411
        %v2414 = vunpack.c.l.s4 1983009808
        %v2415 = vunpack.c.0.s8 %v2414
        %v2416 = vlaneseq
        %v2417 = vshrl.u32 %v2416, 7
        %v2418 = vsub.s32 %v2415, %v2417
        %v2419 = vrot.slane %v2405, %v2418
        %v2420 = vcombine.low %v2364, %v2370
        %v2421 = vcombine.high %v2364, %v2370
        %v2423 = vunpack.c.l.s4 1983009808
        %v2424 = vunpack.c.0.s8 %v2423
        %v2425 = vlaneseq
        %v2426 = vshrl.u32 %v2425, 7
        %v2427 = vsub.s32 %v2424, %v2426
        %v2428 = vrot.slane %v2420, %v2427
        %v2430 = vunpack.c.l.s4 1983009808
        %v2431 = vunpack.c.0.s8 %v2430
        %v2432 = vlaneseq
        %v2433 = vshrl.u32 %v2432, 7
        %v2434 = vsub.s32 %v2431, %v2433
        %v2435 = vrot.slane %v2421, %v2434
        %v2436 = vcombine.low %v2380, %v2396
        %v2437 = vcombine.high %v2380, %v2396
        %v2439 = vunpack.c.l.s4 1934713408
        %v2440 = vunpack.c.0.s8 %v2439
        %v2441 = vlaneseq
        %v2442 = vshrl.u32 %v2441, 7
        %v2443 = vsub.s32 %v2440, %v2442
        %v2444 = vrot.slane %v2436, %v2443
        %v2446 = vunpack.c.l.s4 1934713408
        %v2447 = vunpack.c.0.s8 %v2446
        %v2448 = vlaneseq
        %v2449 = vshrl.u32 %v2448, 7
        %v2450 = vsub.s32 %v2447, %v2449
        %v2451 = vrot.slane %v2437, %v2450
        %v2452 = vcombine.low %v2387, %v2403
        %v2453 = vcombine.high %v2387, %v2403
        %v2455 = vunpack.c.l.s4 1934713408
        %v2456 = vunpack.c.0.s8 %v2455
        %v2457 = vlaneseq
        %v2458 = vshrl.u32 %v2457, 7
        %v2459 = vsub.s32 %v2456, %v2458
        %v2460 = vrot.slane %v2452, %v2459
        %v2462 = vunpack.c.l.s4 1934713408
        %v2463 = vunpack.c.0.s8 %v2462
        %v2464 = vlaneseq
        %v2465 = vshrl.u32 %v2464, 7
        %v2466 = vsub.s32 %v2463, %v2465
        %v2467 = vrot.slane %v2453, %v2466
        %v2468 = vcombine.low %v2412, %v2428
        %v2469 = vcombine.high %v2412, %v2428
        %v2471 = vunpack.c.l.s4 1934713408
        %v2472 = vunpack.c.0.s8 %v2471
        %v2473 = vlaneseq
        %v2474 = vshrl.u32 %v2473, 7
        %v2475 = vsub.s32 %v2472, %v2474
        %v2476 = vrot.slane %v2468, %v2475
        %v2478 = vunpack.c.l.s4 1934713408
        %v2479 = vunpack.c.0.s8 %v2478
        %v2480 = vlaneseq
        %v2481 = vshrl.u32 %v2480, 7
        %v2482 = vsub.s32 %v2479, %v2481
        %v2483 = vrot.slane %v2469, %v2482
        %v2484 = vcombine.low %v2419, %v2435
        %v2485 = vcombine.high %v2419, %v2435
        %v2487 = vunpack.c.l.s4 1934713408
        %v2488 = vunpack.c.0.s8 %v2487
        %v2489 = vlaneseq
        %v2490 = vshrl.u32 %v2489, 7
        %v2491 = vsub.s32 %v2488, %v2490
        %v2492 = vrot.slane %v2484, %v2491
        %v2494 = vunpack.c.l.s4 1934713408
        %v2495 = vunpack.c.0.s8 %v2494
        %v2496 = vlaneseq
        %v2497 = vshrl.u32 %v2496, 7
        %v2498 = vsub.s32 %v2495, %v2497
        %v2499 = vrot.slane %v2485, %v2498
        %v2500 = vcombine.low %v2444, %v2476
        %v2501 = vcombine.high %v2444, %v2476
        %v2502 = vcombine.low %v2451, %v2483
        %v2503 = vcombine.high %v2451, %v2483
        %v2504 = vcombine.low %v2460, %v2492
        %v2505 = vcombine.high %v2460, %v2492
        %v2506 = vcombine.low %v2467, %v2499
        %v2507 = vcombine.high %v2467, %v2499
        %v2508 = vadd.f32 %v2344, %v2500
        %v2509 = vadd.f32 %v2345, %v2501
        %v2510 = vadd.f32 %v2346, %v2502
        %v2511 = vadd.f32 %v2347, %v2503
        %v2512 = vadd.f32 %v2348, %v2504
        %v2513 = vadd.f32 %v2349, %v2505
        %v2514 = vadd.f32 %v2350, %v2506
        %v2515 = vadd.f32 %v2351, %v2507
        %2516 = vst.msk [vmem:[%s298] sm:$0xff] %vm716, %v2508
        %2517 = vst.msk [vmem:[%s298 + $0x8] sm:$0xff] %vm716, %v2509
        %2518 = vst.msk [vmem:[%s298 + $0x10] sm:$0xff] %vm716, %v2510
        %2519 = vst.msk [vmem:[%s298 + $0x18] sm:$0xff] %vm716, %v2511
        %2520 = vst.msk [vmem:[%s298 + $0x20] sm:$0xff] %vm716, %v2512
        %2521 = vst.msk [vmem:[%s298 + $0x28] sm:$0xff] %vm716, %v2513
        %2522 = vst.msk [vmem:[%s298 + $0x30] sm:$0xff] %vm716, %v2514
        %2523 = vst.msk [vmem:[%s298 + $0x38] sm:$0xff] %vm716, %v2515
        %s2524 = scalar_lea.vmem %s4, 8
        %v2525 = vld [vmem:[%s2524] sm:$0xff]
        %v2527 = vsel %vm778, %v2525, 0
        %2529 = vmatprep.subr.mxu0 0.0
        %2530 = vmatpush1.msra.mxu0 %v558
        %2531 = vmatprep.subr.mxu0 0.0
        %2532 = vmatpush1.msra.mxu0 %v563
        %2533 = vmatprep.subr.mxu0 0.0
        %2534 = vmatpush1.msra.mxu0 0.0
        %2535 = vmatprep.subr.mxu0 0.0
        %2536 = vmatpush1.msra.mxu0 0.0
        %2537 = vmatprep.subr.mxu0 0.0
        %2538 = vmatpush1.msra.mxu0 0.0
        %2539 = vmatprep.subr.mxu0 0.0
        %2540 = vmatpush1.msra.mxu0 0.0
        %2541 = vmatprep.subr.mxu0 0.0
        %2542 = vmatpush1.msra.mxu0 0.0
        %2543 = vmatprep.subr.mxu0 0.0
        %2544 = vmatpush1.msra.mxu0 0.0
        %2545 = vmatprep.subr.mxu0 0.0
        %2546 = vmatpush1.msra.mxu0 0.0
        %2547 = vmatprep.subr.mxu0 0.0
        %2548 = vmatpush1.msra.mxu0 0.0
        %2549 = vmatprep.subr.mxu0 0.0
        %2550 = vmatpush1.msra.mxu0 0.0
        %2551 = vmatprep.subr.mxu0 0.0
        %2552 = vmatpush1.msra.mxu0 0.0
        %2553 = vmatprep.subr.mxu0 0.0
        %2554 = vmatpush1.msra.mxu0 0.0
        %2555 = vmatprep.subr.mxu0 0.0
        %2556 = vmatpush1.msra.mxu0 0.0
        %2557 = vmatprep.subr.mxu0 0.0
        %2558 = vmatpush1.msra.mxu0 0.0
        %2559 = vmatprep.subr.mxu0 0.0
        %2560 = vmatpush1.msra.mxu0 0.0
        %2561 = vmatprep.subr.mxu0 0.0
        %2562 = vmatpush1.msra.mxu0 0.0
        %2563 = vmatprep.subr.mxu0 0.0
        %2564 = vmatpush1.msra.mxu0 0.0
        %2565 = vmatprep.subr.mxu0 0.0
        %2566 = vmatpush1.msra.mxu0 0.0
        %2567 = vmatprep.subr.mxu0 0.0
        %2568 = vmatpush1.msra.mxu0 0.0
        %2569 = vmatprep.subr.mxu0 0.0
        %2570 = vmatpush1.msra.mxu0 0.0
        %2571 = vmatprep.subr.mxu0 0.0
        %2572 = vmatpush1.msra.mxu0 0.0
        %2573 = vmatprep.subr.mxu0 0.0
        %2574 = vmatpush1.msra.mxu0 0.0
        %2575 = vmatprep.subr.mxu0 0.0
        %2576 = vmatpush1.msra.mxu0 0.0
        %2577 = vmatprep.subr.mxu0 0.0
        %2578 = vmatpush1.msra.mxu0 0.0
        %2579 = vmatprep.subr.mxu0 0.0
        %2580 = vmatpush1.msra.mxu0 0.0
        %2581 = vmatprep.subr.mxu0 0.0
        %2582 = vmatpush1.msra.mxu0 0.0
        %2583 = vmatprep.subr.mxu0 0.0
        %2584 = vmatpush1.msra.mxu0 0.0
        %2585 = vmatprep.subr.mxu0 0.0
        %2586 = vmatpush1.msra.mxu0 0.0
        %2587 = vmatprep.subr.mxu0 0.0
        %2588 = vmatpush1.msra.mxu0 0.0
        %2589 = vmatprep.subr.mxu0 0.0
        %2590 = vmatpush1.msra.mxu0 0.0
        %2591 = vmatprep.subr.mxu0 0.0
        %2592 = vmatpush1.msra.mxu0 0.0
        %2593 = vmatprep.mubr.f32.mxu0 0.0
        %2594 = vmatmul.mubr.f32.gmra.mrb[0].mxu0 %v2527
        %v2595 = vpop.f32.mrb[0].mxu0
        %v2596 = vadd.f32 0.0, %v2595
        %v2597 = vpop.f32.mrb[0].mxu0
        %2598 = vdwg.mxu0
        %2599 = vmatprep.subr.mxu0 0.0
        %2600 = vmatpush1.msra.mxu0 %v568
        %2601 = vmatprep.subr.mxu0 0.0
        %2602 = vmatpush1.msra.mxu0 %v573
        %2603 = vmatprep.subr.mxu0 0.0
        %2604 = vmatpush1.msra.mxu0 0.0
        %2605 = vmatprep.subr.mxu0 0.0
        %2606 = vmatpush1.msra.mxu0 0.0
        %2607 = vmatprep.subr.mxu0 0.0
        %2608 = vmatpush1.msra.mxu0 0.0
        %2609 = vmatprep.subr.mxu0 0.0
        %2610 = vmatpush1.msra.mxu0 0.0
        %2611 = vmatprep.subr.mxu0 0.0
        %2612 = vmatpush1.msra.mxu0 0.0
        %2613 = vmatprep.subr.mxu0 0.0
        %2614 = vmatpush1.msra.mxu0 0.0
        %2615 = vmatprep.subr.mxu0 0.0
        %2616 = vmatpush1.msra.mxu0 0.0
        %2617 = vmatprep.subr.mxu0 0.0
        %2618 = vmatpush1.msra.mxu0 0.0
        %2619 = vmatprep.subr.mxu0 0.0
        %2620 = vmatpush1.msra.mxu0 0.0
        %2621 = vmatprep.subr.mxu0 0.0
        %2622 = vmatpush1.msra.mxu0 0.0
        %2623 = vmatprep.subr.mxu0 0.0
        %2624 = vmatpush1.msra.mxu0 0.0
        %2625 = vmatprep.subr.mxu0 0.0
        %2626 = vmatpush1.msra.mxu0 0.0
        %2627 = vmatprep.subr.mxu0 0.0
        %2628 = vmatpush1.msra.mxu0 0.0
        %2629 = vmatprep.subr.mxu0 0.0
        %2630 = vmatpush1.msra.mxu0 0.0
        %2631 = vmatprep.subr.mxu0 0.0
        %2632 = vmatpush1.msra.mxu0 0.0
        %2633 = vmatprep.subr.mxu0 0.0
        %2634 = vmatpush1.msra.mxu0 0.0
        %2635 = vmatprep.subr.mxu0 0.0
        %2636 = vmatpush1.msra.mxu0 0.0
        %2637 = vmatprep.subr.mxu0 0.0
        %2638 = vmatpush1.msra.mxu0 0.0
        %2639 = vmatprep.subr.mxu0 0.0
        %2640 = vmatpush1.msra.mxu0 0.0
        %2641 = vmatprep.subr.mxu0 0.0
        %2642 = vmatpush1.msra.mxu0 0.0
        %2643 = vmatprep.subr.mxu0 0.0
        %2644 = vmatpush1.msra.mxu0 0.0
        %2645 = vmatprep.subr.mxu0 0.0
        %2646 = vmatpush1.msra.mxu0 0.0
        %2647 = vmatprep.subr.mxu0 0.0
        %2648 = vmatpush1.msra.mxu0 0.0
        %2649 = vmatprep.subr.mxu0 0.0
        %2650 = vmatpush1.msra.mxu0 0.0
        %2651 = vmatprep.subr.mxu0 0.0
        %2652 = vmatpush1.msra.mxu0 0.0
        %2653 = vmatprep.subr.mxu0 0.0
        %2654 = vmatpush1.msra.mxu0 0.0
        %2655 = vmatprep.subr.mxu0 0.0
        %2656 = vmatpush1.msra.mxu0 0.0
        %2657 = vmatprep.subr.mxu0 0.0
        %2658 = vmatpush1.msra.mxu0 0.0
        %2659 = vmatprep.subr.mxu0 0.0
        %2660 = vmatpush1.msra.mxu0 0.0
        %2661 = vmatprep.subr.mxu0 0.0
        %2662 = vmatpush1.msra.mxu0 0.0
        %2663 = vmatprep.mubr.f32.mxu0 0.0
        %2664 = vmatmul.mubr.f32.gmra.mrb[0].mxu0 %v2527
        %v2665 = vpop.f32.mrb[0].mxu0
        %v2666 = vadd.f32 0.0, %v2665
        %v2667 = vpop.f32.mrb[0].mxu0
        %2668 = vdwg.mxu0
        %2669 = vmatprep.subr.mxu0 0.0
        %2670 = vmatpush1.msra.mxu0 %v578
        %2671 = vmatprep.subr.mxu0 0.0
        %2672 = vmatpush1.msra.mxu0 %v583
        %2673 = vmatprep.subr.mxu0 0.0
        %2674 = vmatpush1.msra.mxu0 0.0
        %2675 = vmatprep.subr.mxu0 0.0
        %2676 = vmatpush1.msra.mxu0 0.0
        %2677 = vmatprep.subr.mxu0 0.0
        %2678 = vmatpush1.msra.mxu0 0.0
        %2679 = vmatprep.subr.mxu0 0.0
        %2680 = vmatpush1.msra.mxu0 0.0
        %2681 = vmatprep.subr.mxu0 0.0
        %2682 = vmatpush1.msra.mxu0 0.0
        %2683 = vmatprep.subr.mxu0 0.0
        %2684 = vmatpush1.msra.mxu0 0.0
        %2685 = vmatprep.subr.mxu0 0.0
        %2686 = vmatpush1.msra.mxu0 0.0
        %2687 = vmatprep.subr.mxu0 0.0
        %2688 = vmatpush1.msra.mxu0 0.0
        %2689 = vmatprep.subr.mxu0 0.0
        %2690 = vmatpush1.msra.mxu0 0.0
        %2691 = vmatprep.subr.mxu0 0.0
        %2692 = vmatpush1.msra.mxu0 0.0
        %2693 = vmatprep.subr.mxu0 0.0
        %2694 = vmatpush1.msra.mxu0 0.0
        %2695 = vmatprep.subr.mxu0 0.0
        %2696 = vmatpush1.msra.mxu0 0.0
        %2697 = vmatprep.subr.mxu0 0.0
        %2698 = vmatpush1.msra.mxu0 0.0
        %2699 = vmatprep.subr.mxu0 0.0
        %2700 = vmatpush1.msra.mxu0 0.0
        %2701 = vmatprep.subr.mxu0 0.0
        %2702 = vmatpush1.msra.mxu0 0.0
        %2703 = vmatprep.subr.mxu0 0.0
        %2704 = vmatpush1.msra.mxu0 0.0
        %2705 = vmatprep.subr.mxu0 0.0
        %2706 = vmatpush1.msra.mxu0 0.0
        %2707 = vmatprep.subr.mxu0 0.0
        %2708 = vmatpush1.msra.mxu0 0.0
        %2709 = vmatprep.subr.mxu0 0.0
        %2710 = vmatpush1.msra.mxu0 0.0
        %2711 = vmatprep.subr.mxu0 0.0
        %2712 = vmatpush1.msra.mxu0 0.0
        %2713 = vmatprep.subr.mxu0 0.0
        %2714 = vmatpush1.msra.mxu0 0.0
        %2715 = vmatprep.subr.mxu0 0.0
        %2716 = vmatpush1.msra.mxu0 0.0
        %2717 = vmatprep.subr.mxu0 0.0
        %2718 = vmatpush1.msra.mxu0 0.0
        %2719 = vmatprep.subr.mxu0 0.0
        %2720 = vmatpush1.msra.mxu0 0.0
        %2721 = vmatprep.subr.mxu0 0.0
        %2722 = vmatpush1.msra.mxu0 0.0
        %2723 = vmatprep.subr.mxu0 0.0
        %2724 = vmatpush1.msra.mxu0 0.0
        %2725 = vmatprep.subr.mxu0 0.0
        %2726 = vmatpush1.msra.mxu0 0.0
        %2727 = vmatprep.subr.mxu0 0.0
        %2728 = vmatpush1.msra.mxu0 0.0
        %2729 = vmatprep.subr.mxu0 0.0
        %2730 = vmatpush1.msra.mxu0 0.0
        %2731 = vmatprep.subr.mxu0 0.0
        %2732 = vmatpush1.msra.mxu0 0.0
        %2733 = vmatprep.mubr.f32.mxu0 0.0
        %2734 = vmatmul.mubr.f32.gmra.mrb[0].mxu0 %v2527
        %v2735 = vpop.f32.mrb[0].mxu0
        %v2736 = vadd.f32 0.0, %v2735
        %v2737 = vpop.f32.mrb[0].mxu0
        %2738 = vdwg.mxu0
        %2739 = vmatprep.subr.mxu0 0.0
        %2740 = vmatpush1.msra.mxu0 %v588
        %2741 = vmatprep.subr.mxu0 0.0
        %2742 = vmatpush1.msra.mxu0 %v593
        %2743 = vmatprep.subr.mxu0 0.0
        %2744 = vmatpush1.msra.mxu0 0.0
        %2745 = vmatprep.subr.mxu0 0.0
        %2746 = vmatpush1.msra.mxu0 0.0
        %2747 = vmatprep.subr.mxu0 0.0
        %2748 = vmatpush1.msra.mxu0 0.0
        %2749 = vmatprep.subr.mxu0 0.0
        %2750 = vmatpush1.msra.mxu0 0.0
        %2751 = vmatprep.subr.mxu0 0.0
        %2752 = vmatpush1.msra.mxu0 0.0
        %2753 = vmatprep.subr.mxu0 0.0
        %2754 = vmatpush1.msra.mxu0 0.0
        %2755 = vmatprep.subr.mxu0 0.0
        %2756 = vmatpush1.msra.mxu0 0.0
        %2757 = vmatprep.subr.mxu0 0.0
        %2758 = vmatpush1.msra.mxu0 0.0
        %2759 = vmatprep.subr.mxu0 0.0
        %2760 = vmatpush1.msra.mxu0 0.0
        %2761 = vmatprep.subr.mxu0 0.0
        %2762 = vmatpush1.msra.mxu0 0.0
        %2763 = vmatprep.subr.mxu0 0.0
        %2764 = vmatpush1.msra.mxu0 0.0
        %2765 = vmatprep.subr.mxu0 0.0
        %2766 = vmatpush1.msra.mxu0 0.0
        %2767 = vmatprep.subr.mxu0 0.0
        %2768 = vmatpush1.msra.mxu0 0.0
        %2769 = vmatprep.subr.mxu0 0.0
        %2770 = vmatpush1.msra.mxu0 0.0
        %2771 = vmatprep.subr.mxu0 0.0
        %2772 = vmatpush1.msra.mxu0 0.0
        %2773 = vmatprep.subr.mxu0 0.0
        %2774 = vmatpush1.msra.mxu0 0.0
        %2775 = vmatprep.subr.mxu0 0.0
        %2776 = vmatpush1.msra.mxu0 0.0
        %2777 = vmatprep.subr.mxu0 0.0
        %2778 = vmatpush1.msra.mxu0 0.0
        %2779 = vmatprep.subr.mxu0 0.0
        %2780 = vmatpush1.msra.mxu0 0.0
        %2781 = vmatprep.subr.mxu0 0.0
        %2782 = vmatpush1.msra.mxu0 0.0
        %2783 = vmatprep.subr.mxu0 0.0
        %2784 = vmatpush1.msra.mxu0 0.0
        %2785 = vmatprep.subr.mxu0 0.0
        %2786 = vmatpush1.msra.mxu0 0.0
        %2787 = vmatprep.subr.mxu0 0.0
        %2788 = vmatpush1.msra.mxu0 0.0
        %2789 = vmatprep.subr.mxu0 0.0
        %2790 = vmatpush1.msra.mxu0 0.0
        %2791 = vmatprep.subr.mxu0 0.0
        %2792 = vmatpush1.msra.mxu0 0.0
        %2793 = vmatprep.subr.mxu0 0.0
        %2794 = vmatpush1.msra.mxu0 0.0
        %2795 = vmatprep.subr.mxu0 0.0
        %2796 = vmatpush1.msra.mxu0 0.0
        %2797 = vmatprep.subr.mxu0 0.0
        %2798 = vmatpush1.msra.mxu0 0.0
        %2799 = vmatprep.subr.mxu0 0.0
        %2800 = vmatpush1.msra.mxu0 0.0
        %2801 = vmatprep.subr.mxu0 0.0
        %2802 = vmatpush1.msra.mxu0 0.0
        %2803 = vmatprep.mubr.f32.mxu0 0.0
        %2804 = vmatmul.mubr.f32.gmra.mrb[0].mxu0 %v2527
        %v2805 = vpop.f32.mrb[0].mxu0
        %v2806 = vadd.f32 0.0, %v2805
        %v2807 = vpop.f32.mrb[0].mxu0
        %2808 = vdwg.mxu0
        %2809 = vmatprep.subr.mxu0 0.0
        %2810 = vmatpush1.msra.mxu0 %v598
        %2811 = vmatprep.subr.mxu0 0.0
        %2812 = vmatpush1.msra.mxu0 %v603
        %2813 = vmatprep.subr.mxu0 0.0
        %2814 = vmatpush1.msra.mxu0 0.0
        %2815 = vmatprep.subr.mxu0 0.0
        %2816 = vmatpush1.msra.mxu0 0.0
        %2817 = vmatprep.subr.mxu0 0.0
        %2818 = vmatpush1.msra.mxu0 0.0
        %2819 = vmatprep.subr.mxu0 0.0
        %2820 = vmatpush1.msra.mxu0 0.0
        %2821 = vmatprep.subr.mxu0 0.0
        %2822 = vmatpush1.msra.mxu0 0.0
        %2823 = vmatprep.subr.mxu0 0.0
        %2824 = vmatpush1.msra.mxu0 0.0
        %2825 = vmatprep.subr.mxu0 0.0
        %2826 = vmatpush1.msra.mxu0 0.0
        %2827 = vmatprep.subr.mxu0 0.0
        %2828 = vmatpush1.msra.mxu0 0.0
        %2829 = vmatprep.subr.mxu0 0.0
        %2830 = vmatpush1.msra.mxu0 0.0
        %2831 = vmatprep.subr.mxu0 0.0
        %2832 = vmatpush1.msra.mxu0 0.0
        %2833 = vmatprep.subr.mxu0 0.0
        %2834 = vmatpush1.msra.mxu0 0.0
        %2835 = vmatprep.subr.mxu0 0.0
        %2836 = vmatpush1.msra.mxu0 0.0
        %2837 = vmatprep.subr.mxu0 0.0
        %2838 = vmatpush1.msra.mxu0 0.0
        %2839 = vmatprep.subr.mxu0 0.0
        %2840 = vmatpush1.msra.mxu0 0.0
        %2841 = vmatprep.subr.mxu0 0.0
        %2842 = vmatpush1.msra.mxu0 0.0
        %2843 = vmatprep.subr.mxu0 0.0
        %2844 = vmatpush1.msra.mxu0 0.0
        %2845 = vmatprep.subr.mxu0 0.0
        %2846 = vmatpush1.msra.mxu0 0.0
        %2847 = vmatprep.subr.mxu0 0.0
        %2848 = vmatpush1.msra.mxu0 0.0
        %2849 = vmatprep.subr.mxu0 0.0
        %2850 = vmatpush1.msra.mxu0 0.0
        %2851 = vmatprep.subr.mxu0 0.0
        %2852 = vmatpush1.msra.mxu0 0.0
        %2853 = vmatprep.subr.mxu0 0.0
        %2854 = vmatpush1.msra.mxu0 0.0
        %2855 = vmatprep.subr.mxu0 0.0
        %2856 = vmatpush1.msra.mxu0 0.0
        %2857 = vmatprep.subr.mxu0 0.0
        %2858 = vmatpush1.msra.mxu0 0.0
        %2859 = vmatprep.subr.mxu0 0.0
        %2860 = vmatpush1.msra.mxu0 0.0
        %2861 = vmatprep.subr.mxu0 0.0
        %2862 = vmatpush1.msra.mxu0 0.0
        %2863 = vmatprep.subr.mxu0 0.0
        %2864 = vmatpush1.msra.mxu0 0.0
        %2865 = vmatprep.subr.mxu0 0.0
        %2866 = vmatpush1.msra.mxu0 0.0
        %2867 = vmatprep.subr.mxu0 0.0
        %2868 = vmatpush1.msra.mxu0 0.0
        %2869 = vmatprep.subr.mxu0 0.0
        %2870 = vmatpush1.msra.mxu0 0.0
        %2871 = vmatprep.subr.mxu0 0.0
        %2872 = vmatpush1.msra.mxu0 0.0
        %2873 = vmatprep.mubr.f32.mxu0 0.0
        %2874 = vmatmul.mubr.f32.gmra.mrb[0].mxu0 %v2527
        %v2875 = vpop.f32.mrb[0].mxu0
        %v2876 = vadd.f32 0.0, %v2875
        %v2877 = vpop.f32.mrb[0].mxu0
        %2878 = vdwg.mxu0
        %2879 = vmatprep.subr.mxu0 0.0
        %2880 = vmatpush1.msra.mxu0 %v608
        %2881 = vmatprep.subr.mxu0 0.0
        %2882 = vmatpush1.msra.mxu0 %v613
        %2883 = vmatprep.subr.mxu0 0.0
        %2884 = vmatpush1.msra.mxu0 0.0
        %2885 = vmatprep.subr.mxu0 0.0
        %2886 = vmatpush1.msra.mxu0 0.0
        %2887 = vmatprep.subr.mxu0 0.0
        %2888 = vmatpush1.msra.mxu0 0.0
        %2889 = vmatprep.subr.mxu0 0.0
        %2890 = vmatpush1.msra.mxu0 0.0
        %2891 = vmatprep.subr.mxu0 0.0
        %2892 = vmatpush1.msra.mxu0 0.0
        %2893 = vmatprep.subr.mxu0 0.0
        %2894 = vmatpush1.msra.mxu0 0.0
        %2895 = vmatprep.subr.mxu0 0.0
        %2896 = vmatpush1.msra.mxu0 0.0
        %2897 = vmatprep.subr.mxu0 0.0
        %2898 = vmatpush1.msra.mxu0 0.0
        %2899 = vmatprep.subr.mxu0 0.0
        %2900 = vmatpush1.msra.mxu0 0.0
        %2901 = vmatprep.subr.mxu0 0.0
        %2902 = vmatpush1.msra.mxu0 0.0
        %2903 = vmatprep.subr.mxu0 0.0
        %2904 = vmatpush1.msra.mxu0 0.0
        %2905 = vmatprep.subr.mxu0 0.0
        %2906 = vmatpush1.msra.mxu0 0.0
        %2907 = vmatprep.subr.mxu0 0.0
        %2908 = vmatpush1.msra.mxu0 0.0
        %2909 = vmatprep.subr.mxu0 0.0
        %2910 = vmatpush1.msra.mxu0 0.0
        %2911 = vmatprep.subr.mxu0 0.0
        %2912 = vmatpush1.msra.mxu0 0.0
        %2913 = vmatprep.subr.mxu0 0.0
        %2914 = vmatpush1.msra.mxu0 0.0
        %2915 = vmatprep.subr.mxu0 0.0
        %2916 = vmatpush1.msra.mxu0 0.0
        %2917 = vmatprep.subr.mxu0 0.0
        %2918 = vmatpush1.msra.mxu0 0.0
        %2919 = vmatprep.subr.mxu0 0.0
        %2920 = vmatpush1.msra.mxu0 0.0
        %2921 = vmatprep.subr.mxu0 0.0
        %2922 = vmatpush1.msra.mxu0 0.0
        %2923 = vmatprep.subr.mxu0 0.0
        %2924 = vmatpush1.msra.mxu0 0.0
        %2925 = vmatprep.subr.mxu0 0.0
        %2926 = vmatpush1.msra.mxu0 0.0
        %2927 = vmatprep.subr.mxu0 0.0
        %2928 = vmatpush1.msra.mxu0 0.0
        %2929 = vmatprep.subr.mxu0 0.0
        %2930 = vmatpush1.msra.mxu0 0.0
        %2931 = vmatprep.subr.mxu0 0.0
        %2932 = vmatpush1.msra.mxu0 0.0
        %2933 = vmatprep.subr.mxu0 0.0
        %2934 = vmatpush1.msra.mxu0 0.0
        %2935 = vmatprep.subr.mxu0 0.0
        %2936 = vmatpush1.msra.mxu0 0.0
        %2937 = vmatprep.subr.mxu0 0.0
        %2938 = vmatpush1.msra.mxu0 0.0
        %2939 = vmatprep.subr.mxu0 0.0
        %2940 = vmatpush1.msra.mxu0 0.0
        %2941 = vmatprep.subr.mxu0 0.0
        %2942 = vmatpush1.msra.mxu0 0.0
        %2943 = vmatprep.mubr.f32.mxu0 0.0
        %2944 = vmatmul.mubr.f32.gmra.mrb[0].mxu0 %v2527
        %v2945 = vpop.f32.mrb[0].mxu0
        %v2946 = vadd.f32 0.0, %v2945
        %v2947 = vpop.f32.mrb[0].mxu0
        %2948 = vdwg.mxu0
        %2949 = vmatprep.subr.mxu0 0.0
        %2950 = vmatpush1.msra.mxu0 %v618
        %2951 = vmatprep.subr.mxu0 0.0
        %2952 = vmatpush1.msra.mxu0 %v623
        %2953 = vmatprep.subr.mxu0 0.0
        %2954 = vmatpush1.msra.mxu0 0.0
        %2955 = vmatprep.subr.mxu0 0.0
        %2956 = vmatpush1.msra.mxu0 0.0
        %2957 = vmatprep.subr.mxu0 0.0
        %2958 = vmatpush1.msra.mxu0 0.0
        %2959 = vmatprep.subr.mxu0 0.0
        %2960 = vmatpush1.msra.mxu0 0.0
        %2961 = vmatprep.subr.mxu0 0.0
        %2962 = vmatpush1.msra.mxu0 0.0
        %2963 = vmatprep.subr.mxu0 0.0
        %2964 = vmatpush1.msra.mxu0 0.0
        %2965 = vmatprep.subr.mxu0 0.0
        %2966 = vmatpush1.msra.mxu0 0.0
        %2967 = vmatprep.subr.mxu0 0.0
        %2968 = vmatpush1.msra.mxu0 0.0
        %2969 = vmatprep.subr.mxu0 0.0
        %2970 = vmatpush1.msra.mxu0 0.0
        %2971 = vmatprep.subr.mxu0 0.0
        %2972 = vmatpush1.msra.mxu0 0.0
        %2973 = vmatprep.subr.mxu0 0.0
        %2974 = vmatpush1.msra.mxu0 0.0
        %2975 = vmatprep.subr.mxu0 0.0
        %2976 = vmatpush1.msra.mxu0 0.0
        %2977 = vmatprep.subr.mxu0 0.0
        %2978 = vmatpush1.msra.mxu0 0.0
        %2979 = vmatprep.subr.mxu0 0.0
        %2980 = vmatpush1.msra.mxu0 0.0
        %2981 = vmatprep.subr.mxu0 0.0
        %2982 = vmatpush1.msra.mxu0 0.0
        %2983 = vmatprep.subr.mxu0 0.0
        %2984 = vmatpush1.msra.mxu0 0.0
        %2985 = vmatprep.subr.mxu0 0.0
        %2986 = vmatpush1.msra.mxu0 0.0
        %2987 = vmatprep.subr.mxu0 0.0
        %2988 = vmatpush1.msra.mxu0 0.0
        %2989 = vmatprep.subr.mxu0 0.0
        %2990 = vmatpush1.msra.mxu0 0.0
        %2991 = vmatprep.subr.mxu0 0.0
        %2992 = vmatpush1.msra.mxu0 0.0
        %2993 = vmatprep.subr.mxu0 0.0
        %2994 = vmatpush1.msra.mxu0 0.0
        %2995 = vmatprep.subr.mxu0 0.0
        %2996 = vmatpush1.msra.mxu0 0.0
        %2997 = vmatprep.subr.mxu0 0.0
        %2998 = vmatpush1.msra.mxu0 0.0
        %2999 = vmatprep.subr.mxu0 0.0
        %3000 = vmatpush1.msra.mxu0 0.0
        %3001 = vmatprep.subr.mxu0 0.0
        %3002 = vmatpush1.msra.mxu0 0.0
        %3003 = vmatprep.subr.mxu0 0.0
        %3004 = vmatpush1.msra.mxu0 0.0
        %3005 = vmatprep.subr.mxu0 0.0
        %3006 = vmatpush1.msra.mxu0 0.0
        %3007 = vmatprep.subr.mxu0 0.0
        %3008 = vmatpush1.msra.mxu0 0.0
        %3009 = vmatprep.subr.mxu0 0.0
        %3010 = vmatpush1.msra.mxu0 0.0
        %3011 = vmatprep.subr.mxu0 0.0
        %3012 = vmatpush1.msra.mxu0 0.0
        %3013 = vmatprep.mubr.f32.mxu0 0.0
        %3014 = vmatmul.mubr.f32.gmra.mrb[0].mxu0 %v2527
        %v3015 = vpop.f32.mrb[0].mxu0
        %v3016 = vadd.f32 0.0, %v3015
        %v3017 = vpop.f32.mrb[0].mxu0
        %3018 = vdwg.mxu0
        %3019 = vmatprep.subr.mxu0 0.0
        %3020 = vmatpush1.msra.mxu0 %v628
        %3021 = vmatprep.subr.mxu0 0.0
        %3022 = vmatpush1.msra.mxu0 %v633
        %3023 = vmatprep.subr.mxu0 0.0
        %3024 = vmatpush1.msra.mxu0 0.0
        %3025 = vmatprep.subr.mxu0 0.0
        %3026 = vmatpush1.msra.mxu0 0.0
        %3027 = vmatprep.subr.mxu0 0.0
        %3028 = vmatpush1.msra.mxu0 0.0
        %3029 = vmatprep.subr.mxu0 0.0
        %3030 = vmatpush1.msra.mxu0 0.0
        %3031 = vmatprep.subr.mxu0 0.0
        %3032 = vmatpush1.msra.mxu0 0.0
        %3033 = vmatprep.subr.mxu0 0.0
        %3034 = vmatpush1.msra.mxu0 0.0
        %3035 = vmatprep.subr.mxu0 0.0
        %3036 = vmatpush1.msra.mxu0 0.0
        %3037 = vmatprep.subr.mxu0 0.0
        %3038 = vmatpush1.msra.mxu0 0.0
        %3039 = vmatprep.subr.mxu0 0.0
        %3040 = vmatpush1.msra.mxu0 0.0
        %3041 = vmatprep.subr.mxu0 0.0
        %3042 = vmatpush1.msra.mxu0 0.0
        %3043 = vmatprep.subr.mxu0 0.0
        %3044 = vmatpush1.msra.mxu0 0.0
        %3045 = vmatprep.subr.mxu0 0.0
        %3046 = vmatpush1.msra.mxu0 0.0
        %3047 = vmatprep.subr.mxu0 0.0
        %3048 = vmatpush1.msra.mxu0 0.0
        %3049 = vmatprep.subr.mxu0 0.0
        %3050 = vmatpush1.msra.mxu0 0.0
        %3051 = vmatprep.subr.mxu0 0.0
        %3052 = vmatpush1.msra.mxu0 0.0
        %3053 = vmatprep.subr.mxu0 0.0
        %3054 = vmatpush1.msra.mxu0 0.0
        %3055 = vmatprep.subr.mxu0 0.0
        %3056 = vmatpush1.msra.mxu0 0.0
        %3057 = vmatprep.subr.mxu0 0.0
        %3058 = vmatpush1.msra.mxu0 0.0
        %3059 = vmatprep.subr.mxu0 0.0
        %3060 = vmatpush1.msra.mxu0 0.0
        %3061 = vmatprep.subr.mxu0 0.0
        %3062 = vmatpush1.msra.mxu0 0.0
        %3063 = vmatprep.subr.mxu0 0.0
        %3064 = vmatpush1.msra.mxu0 0.0
        %3065 = vmatprep.subr.mxu0 0.0
        %3066 = vmatpush1.msra.mxu0 0.0
        %3067 = vmatprep.subr.mxu0 0.0
        %3068 = vmatpush1.msra.mxu0 0.0
        %3069 = vmatprep.subr.mxu0 0.0
        %3070 = vmatpush1.msra.mxu0 0.0
        %3071 = vmatprep.subr.mxu0 0.0
        %3072 = vmatpush1.msra.mxu0 0.0
        %3073 = vmatprep.subr.mxu0 0.0
        %3074 = vmatpush1.msra.mxu0 0.0
        %3075 = vmatprep.subr.mxu0 0.0
        %3076 = vmatpush1.msra.mxu0 0.0
        %3077 = vmatprep.subr.mxu0 0.0
        %3078 = vmatpush1.msra.mxu0 0.0
        %3079 = vmatprep.subr.mxu0 0.0
        %3080 = vmatpush1.msra.mxu0 0.0
        %3081 = vmatprep.subr.mxu0 0.0
        %3082 = vmatpush1.msra.mxu0 0.0
        %3083 = vmatprep.mubr.f32.mxu0 0.0
        %3084 = vmatmul.mubr.f32.gmra.mrb[0].mxu0 %v2527
        %v3085 = vpop.f32.mrb[0].mxu0
        %v3086 = vadd.f32 0.0, %v3085
        %v3087 = vpop.f32.mrb[0].mxu0
        %3088 = vdwg.mxu0
        %3089 = vmatprep.subr.mxu0 0.0
        %3090 = vmatpush1.msra.mxu0 %v638
        %3091 = vmatprep.subr.mxu0 0.0
        %3092 = vmatpush1.msra.mxu0 %v643
        %3093 = vmatprep.subr.mxu0 0.0
        %3094 = vmatpush1.msra.mxu0 0.0
        %3095 = vmatprep.subr.mxu0 0.0
        %3096 = vmatpush1.msra.mxu0 0.0
        %3097 = vmatprep.subr.mxu0 0.0
        %3098 = vmatpush1.msra.mxu0 0.0
        %3099 = vmatprep.subr.mxu0 0.0
        %3100 = vmatpush1.msra.mxu0 0.0
        %3101 = vmatprep.subr.mxu0 0.0
        %3102 = vmatpush1.msra.mxu0 0.0
        %3103 = vmatprep.subr.mxu0 0.0
        %3104 = vmatpush1.msra.mxu0 0.0
        %3105 = vmatprep.subr.mxu0 0.0
        %3106 = vmatpush1.msra.mxu0 0.0
        %3107 = vmatprep.subr.mxu0 0.0
        %3108 = vmatpush1.msra.mxu0 0.0
        %3109 = vmatprep.subr.mxu0 0.0
        %3110 = vmatpush1.msra.mxu0 0.0
        %3111 = vmatprep.subr.mxu0 0.0
        %3112 = vmatpush1.msra.mxu0 0.0
        %3113 = vmatprep.subr.mxu0 0.0
        %3114 = vmatpush1.msra.mxu0 0.0
        %3115 = vmatprep.subr.mxu0 0.0
        %3116 = vmatpush1.msra.mxu0 0.0
        %3117 = vmatprep.subr.mxu0 0.0
        %3118 = vmatpush1.msra.mxu0 0.0
        %3119 = vmatprep.subr.mxu0 0.0
        %3120 = vmatpush1.msra.mxu0 0.0
        %3121 = vmatprep.subr.mxu0 0.0
        %3122 = vmatpush1.msra.mxu0 0.0
        %3123 = vmatprep.subr.mxu0 0.0
        %3124 = vmatpush1.msra.mxu0 0.0
        %3125 = vmatprep.subr.mxu0 0.0
        %3126 = vmatpush1.msra.mxu0 0.0
        %3127 = vmatprep.subr.mxu0 0.0
        %3128 = vmatpush1.msra.mxu0 0.0
        %3129 = vmatprep.subr.mxu0 0.0
        %3130 = vmatpush1.msra.mxu0 0.0
        %3131 = vmatprep.subr.mxu0 0.0
        %3132 = vmatpush1.msra.mxu0 0.0
        %3133 = vmatprep.subr.mxu0 0.0
        %3134 = vmatpush1.msra.mxu0 0.0
        %3135 = vmatprep.subr.mxu0 0.0
        %3136 = vmatpush1.msra.mxu0 0.0
        %3137 = vmatprep.subr.mxu0 0.0
        %3138 = vmatpush1.msra.mxu0 0.0
        %3139 = vmatprep.subr.mxu0 0.0
        %3140 = vmatpush1.msra.mxu0 0.0
        %3141 = vmatprep.subr.mxu0 0.0
        %3142 = vmatpush1.msra.mxu0 0.0
        %3143 = vmatprep.subr.mxu0 0.0
        %3144 = vmatpush1.msra.mxu0 0.0
        %3145 = vmatprep.subr.mxu0 0.0
        %3146 = vmatpush1.msra.mxu0 0.0
        %3147 = vmatprep.subr.mxu0 0.0
        %3148 = vmatpush1.msra.mxu0 0.0
        %3149 = vmatprep.subr.mxu0 0.0
        %3150 = vmatpush1.msra.mxu0 0.0
        %3151 = vmatprep.subr.mxu0 0.0
        %3152 = vmatpush1.msra.mxu0 0.0
        %3153 = vmatprep.mubr.f32.mxu0 0.0
        %3154 = vmatmul.mubr.f32.gmra.mrb[0].mxu0 %v2527
        %v3155 = vpop.f32.mrb[0].mxu0
        %v3156 = vadd.f32 0.0, %v3155
        %v3157 = vpop.f32.mrb[0].mxu0
        %3158 = vdwg.mxu0
        %3159 = vmatprep.subr.mxu0 0.0
        %3160 = vmatpush1.msra.mxu0 %v648
        %3161 = vmatprep.subr.mxu0 0.0
        %3162 = vmatpush1.msra.mxu0 %v653
        %3163 = vmatprep.subr.mxu0 0.0
        %3164 = vmatpush1.msra.mxu0 0.0
        %3165 = vmatprep.subr.mxu0 0.0
        %3166 = vmatpush1.msra.mxu0 0.0
        %3167 = vmatprep.subr.mxu0 0.0
        %3168 = vmatpush1.msra.mxu0 0.0
        %3169 = vmatprep.subr.mxu0 0.0
        %3170 = vmatpush1.msra.mxu0 0.0
        %3171 = vmatprep.subr.mxu0 0.0
        %3172 = vmatpush1.msra.mxu0 0.0
        %3173 = vmatprep.subr.mxu0 0.0
        %3174 = vmatpush1.msra.mxu0 0.0
        %3175 = vmatprep.subr.mxu0 0.0
        %3176 = vmatpush1.msra.mxu0 0.0
        %3177 = vmatprep.subr.mxu0 0.0
        %3178 = vmatpush1.msra.mxu0 0.0
        %3179 = vmatprep.subr.mxu0 0.0
        %3180 = vmatpush1.msra.mxu0 0.0
        %3181 = vmatprep.subr.mxu0 0.0
        %3182 = vmatpush1.msra.mxu0 0.0
        %3183 = vmatprep.subr.mxu0 0.0
        %3184 = vmatpush1.msra.mxu0 0.0
        %3185 = vmatprep.subr.mxu0 0.0
        %3186 = vmatpush1.msra.mxu0 0.0
        %3187 = vmatprep.subr.mxu0 0.0
        %3188 = vmatpush1.msra.mxu0 0.0
        %3189 = vmatprep.subr.mxu0 0.0
        %3190 = vmatpush1.msra.mxu0 0.0
        %3191 = vmatprep.subr.mxu0 0.0
        %3192 = vmatpush1.msra.mxu0 0.0
        %3193 = vmatprep.subr.mxu0 0.0
        %3194 = vmatpush1.msra.mxu0 0.0
        %3195 = vmatprep.subr.mxu0 0.0
        %3196 = vmatpush1.msra.mxu0 0.0
        %3197 = vmatprep.subr.mxu0 0.0
        %3198 = vmatpush1.msra.mxu0 0.0
        %3199 = vmatprep.subr.mxu0 0.0
        %3200 = vmatpush1.msra.mxu0 0.0
        %3201 = vmatprep.subr.mxu0 0.0
        %3202 = vmatpush1.msra.mxu0 0.0
        %3203 = vmatprep.subr.mxu0 0.0
        %3204 = vmatpush1.msra.mxu0 0.0
        %3205 = vmatprep.subr.mxu0 0.0
        %3206 = vmatpush1.msra.mxu0 0.0
        %3207 = vmatprep.subr.mxu0 0.0
        %3208 = vmatpush1.msra.mxu0 0.0
        %3209 = vmatprep.subr.mxu0 0.0
        %3210 = vmatpush1.msra.mxu0 0.0
        %3211 = vmatprep.subr.mxu0 0.0
        %3212 = vmatpush1.msra.mxu0 0.0
        %3213 = vmatprep.subr.mxu0 0.0
        %3214 = vmatpush1.msra.mxu0 0.0
        %3215 = vmatprep.subr.mxu0 0.0
        %3216 = vmatpush1.msra.mxu0 0.0
        %3217 = vmatprep.subr.mxu0 0.0
        %3218 = vmatpush1.msra.mxu0 0.0
        %3219 = vmatprep.subr.mxu0 0.0
        %3220 = vmatpush1.msra.mxu0 0.0
        %3221 = vmatprep.subr.mxu0 0.0
        %3222 = vmatpush1.msra.mxu0 0.0
        %3223 = vmatprep.mubr.f32.mxu0 0.0
        %3224 = vmatmul.mubr.f32.gmra.mrb[0].mxu0 %v2527
        %v3225 = vpop.f32.mrb[0].mxu0
        %v3226 = vadd.f32 0.0, %v3225
        %v3227 = vpop.f32.mrb[0].mxu0
        %3228 = vdwg.mxu0
        %3229 = vmatprep.subr.mxu0 0.0
        %3230 = vmatpush1.msra.mxu0 %v658
        %3231 = vmatprep.subr.mxu0 0.0
        %3232 = vmatpush1.msra.mxu0 %v663
        %3233 = vmatprep.subr.mxu0 0.0
        %3234 = vmatpush1.msra.mxu0 0.0
        %3235 = vmatprep.subr.mxu0 0.0
        %3236 = vmatpush1.msra.mxu0 0.0
        %3237 = vmatprep.subr.mxu0 0.0
        %3238 = vmatpush1.msra.mxu0 0.0
        %3239 = vmatprep.subr.mxu0 0.0
        %3240 = vmatpush1.msra.mxu0 0.0
        %3241 = vmatprep.subr.mxu0 0.0
        %3242 = vmatpush1.msra.mxu0 0.0
        %3243 = vmatprep.subr.mxu0 0.0
        %3244 = vmatpush1.msra.mxu0 0.0
        %3245 = vmatprep.subr.mxu0 0.0
        %3246 = vmatpush1.msra.mxu0 0.0
        %3247 = vmatprep.subr.mxu0 0.0
        %3248 = vmatpush1.msra.mxu0 0.0
        %3249 = vmatprep.subr.mxu0 0.0
        %3250 = vmatpush1.msra.mxu0 0.0
        %3251 = vmatprep.subr.mxu0 0.0
        %3252 = vmatpush1.msra.mxu0 0.0
        %3253 = vmatprep.subr.mxu0 0.0
        %3254 = vmatpush1.msra.mxu0 0.0
        %3255 = vmatprep.subr.mxu0 0.0
        %3256 = vmatpush1.msra.mxu0 0.0
        %3257 = vmatprep.subr.mxu0 0.0
        %3258 = vmatpush1.msra.mxu0 0.0
        %3259 = vmatprep.subr.mxu0 0.0
        %3260 = vmatpush1.msra.mxu0 0.0
        %3261 = vmatprep.subr.mxu0 0.0
        %3262 = vmatpush1.msra.mxu0 0.0
        %3263 = vmatprep.subr.mxu0 0.0
        %3264 = vmatpush1.msra.mxu0 0.0
        %3265 = vmatprep.subr.mxu0 0.0
        %3266 = vmatpush1.msra.mxu0 0.0
        %3267 = vmatprep.subr.mxu0 0.0
        %3268 = vmatpush1.msra.mxu0 0.0
        %3269 = vmatprep.subr.mxu0 0.0
        %3270 = vmatpush1.msra.mxu0 0.0
        %3271 = vmatprep.subr.mxu0 0.0
        %3272 = vmatpush1.msra.mxu0 0.0
        %3273 = vmatprep.subr.mxu0 0.0
        %3274 = vmatpush1.msra.mxu0 0.0
        %3275 = vmatprep.subr.mxu0 0.0
        %3276 = vmatpush1.msra.mxu0 0.0
        %3277 = vmatprep.subr.mxu0 0.0
        %3278 = vmatpush1.msra.mxu0 0.0
        %3279 = vmatprep.subr.mxu0 0.0
        %3280 = vmatpush1.msra.mxu0 0.0
        %3281 = vmatprep.subr.mxu0 0.0
        %3282 = vmatpush1.msra.mxu0 0.0
        %3283 = vmatprep.subr.mxu0 0.0
        %3284 = vmatpush1.msra.mxu0 0.0
        %3285 = vmatprep.subr.mxu0 0.0
        %3286 = vmatpush1.msra.mxu0 0.0
        %3287 = vmatprep.subr.mxu0 0.0
        %3288 = vmatpush1.msra.mxu0 0.0
        %3289 = vmatprep.subr.mxu0 0.0
        %3290 = vmatpush1.msra.mxu0 0.0
        %3291 = vmatprep.subr.mxu0 0.0
        %3292 = vmatpush1.msra.mxu0 0.0
        %3293 = vmatprep.mubr.f32.mxu0 0.0
        %3294 = vmatmul.mubr.f32.gmra.mrb[0].mxu0 %v2527
        %v3295 = vpop.f32.mrb[0].mxu0
        %v3296 = vadd.f32 0.0, %v3295
        %v3297 = vpop.f32.mrb[0].mxu0
        %3298 = vdwg.mxu0
        %3299 = vmatprep.subr.mxu0 0.0
        %3300 = vmatpush1.msra.mxu0 %v668
        %3301 = vmatprep.subr.mxu0 0.0
        %3302 = vmatpush1.msra.mxu0 %v673
        %3303 = vmatprep.subr.mxu0 0.0
        %3304 = vmatpush1.msra.mxu0 0.0
        %3305 = vmatprep.subr.mxu0 0.0
        %3306 = vmatpush1.msra.mxu0 0.0
        %3307 = vmatprep.subr.mxu0 0.0
        %3308 = vmatpush1.msra.mxu0 0.0
        %3309 = vmatprep.subr.mxu0 0.0
        %3310 = vmatpush1.msra.mxu0 0.0
        %3311 = vmatprep.subr.mxu0 0.0
        %3312 = vmatpush1.msra.mxu0 0.0
        %3313 = vmatprep.subr.mxu0 0.0
        %3314 = vmatpush1.msra.mxu0 0.0
        %3315 = vmatprep.subr.mxu0 0.0
        %3316 = vmatpush1.msra.mxu0 0.0
        %3317 = vmatprep.subr.mxu0 0.0
        %3318 = vmatpush1.msra.mxu0 0.0
        %3319 = vmatprep.subr.mxu0 0.0
        %3320 = vmatpush1.msra.mxu0 0.0
        %3321 = vmatprep.subr.mxu0 0.0
        %3322 = vmatpush1.msra.mxu0 0.0
        %3323 = vmatprep.subr.mxu0 0.0
        %3324 = vmatpush1.msra.mxu0 0.0
        %3325 = vmatprep.subr.mxu0 0.0
        %3326 = vmatpush1.msra.mxu0 0.0
        %3327 = vmatprep.subr.mxu0 0.0
        %3328 = vmatpush1.msra.mxu0 0.0
        %3329 = vmatprep.subr.mxu0 0.0
        %3330 = vmatpush1.msra.mxu0 0.0
        %3331 = vmatprep.subr.mxu0 0.0
        %3332 = vmatpush1.msra.mxu0 0.0
        %3333 = vmatprep.subr.mxu0 0.0
        %3334 = vmatpush1.msra.mxu0 0.0
        %3335 = vmatprep.subr.mxu0 0.0
        %3336 = vmatpush1.msra.mxu0 0.0
        %3337 = vmatprep.subr.mxu0 0.0
        %3338 = vmatpush1.msra.mxu0 0.0
        %3339 = vmatprep.subr.mxu0 0.0
        %3340 = vmatpush1.msra.mxu0 0.0
        %3341 = vmatprep.subr.mxu0 0.0
        %3342 = vmatpush1.msra.mxu0 0.0
        %3343 = vmatprep.subr.mxu0 0.0
        %3344 = vmatpush1.msra.mxu0 0.0
        %3345 = vmatprep.subr.mxu0 0.0
        %3346 = vmatpush1.msra.mxu0 0.0
        %3347 = vmatprep.subr.mxu0 0.0
        %3348 = vmatpush1.msra.mxu0 0.0
        %3349 = vmatprep.subr.mxu0 0.0
        %3350 = vmatpush1.msra.mxu0 0.0
        %3351 = vmatprep.subr.mxu0 0.0
        %3352 = vmatpush1.msra.mxu0 0.0
        %3353 = vmatprep.subr.mxu0 0.0
        %3354 = vmatpush1.msra.mxu0 0.0
        %3355 = vmatprep.subr.mxu0 0.0
        %3356 = vmatpush1.msra.mxu0 0.0
        %3357 = vmatprep.subr.mxu0 0.0
        %3358 = vmatpush1.msra.mxu0 0.0
        %3359 = vmatprep.subr.mxu0 0.0
        %3360 = vmatpush1.msra.mxu0 0.0
        %3361 = vmatprep.subr.mxu0 0.0
        %3362 = vmatpush1.msra.mxu0 0.0
        %3363 = vmatprep.mubr.f32.mxu0 0.0
        %3364 = vmatmul.mubr.f32.gmra.mrb[0].mxu0 %v2527
        %v3365 = vpop.f32.mrb[0].mxu0
        %v3366 = vadd.f32 0.0, %v3365
        %v3367 = vpop.f32.mrb[0].mxu0
        %3368 = vdwg.mxu0
        %3369 = vmatprep.subr.mxu0 0.0
        %3370 = vmatpush1.msra.mxu0 %v678
        %3371 = vmatprep.subr.mxu0 0.0
        %3372 = vmatpush1.msra.mxu0 %v683
        %3373 = vmatprep.subr.mxu0 0.0
        %3374 = vmatpush1.msra.mxu0 0.0
        %3375 = vmatprep.subr.mxu0 0.0
        %3376 = vmatpush1.msra.mxu0 0.0
        %3377 = vmatprep.subr.mxu0 0.0
        %3378 = vmatpush1.msra.mxu0 0.0
        %3379 = vmatprep.subr.mxu0 0.0
        %3380 = vmatpush1.msra.mxu0 0.0
        %3381 = vmatprep.subr.mxu0 0.0
        %3382 = vmatpush1.msra.mxu0 0.0
        %3383 = vmatprep.subr.mxu0 0.0
        %3384 = vmatpush1.msra.mxu0 0.0
        %3385 = vmatprep.subr.mxu0 0.0
        %3386 = vmatpush1.msra.mxu0 0.0
        %3387 = vmatprep.subr.mxu0 0.0
        %3388 = vmatpush1.msra.mxu0 0.0
        %3389 = vmatprep.subr.mxu0 0.0
        %3390 = vmatpush1.msra.mxu0 0.0
        %3391 = vmatprep.subr.mxu0 0.0
        %3392 = vmatpush1.msra.mxu0 0.0
        %3393 = vmatprep.subr.mxu0 0.0
        %3394 = vmatpush1.msra.mxu0 0.0
        %3395 = vmatprep.subr.mxu0 0.0
        %3396 = vmatpush1.msra.mxu0 0.0
        %3397 = vmatprep.subr.mxu0 0.0
        %3398 = vmatpush1.msra.mxu0 0.0
        %3399 = vmatprep.subr.mxu0 0.0
        %3400 = vmatpush1.msra.mxu0 0.0
        %3401 = vmatprep.subr.mxu0 0.0
        %3402 = vmatpush1.msra.mxu0 0.0
        %3403 = vmatprep.subr.mxu0 0.0
        %3404 = vmatpush1.msra.mxu0 0.0
        %3405 = vmatprep.subr.mxu0 0.0
        %3406 = vmatpush1.msra.mxu0 0.0
        %3407 = vmatprep.subr.mxu0 0.0
        %3408 = vmatpush1.msra.mxu0 0.0
        %3409 = vmatprep.subr.mxu0 0.0
        %3410 = vmatpush1.msra.mxu0 0.0
        %3411 = vmatprep.subr.mxu0 0.0
        %3412 = vmatpush1.msra.mxu0 0.0
        %3413 = vmatprep.subr.mxu0 0.0
        %3414 = vmatpush1.msra.mxu0 0.0
        %3415 = vmatprep.subr.mxu0 0.0
        %3416 = vmatpush1.msra.mxu0 0.0
        %3417 = vmatprep.subr.mxu0 0.0
        %3418 = vmatpush1.msra.mxu0 0.0
        %3419 = vmatprep.subr.mxu0 0.0
        %3420 = vmatpush1.msra.mxu0 0.0
        %3421 = vmatprep.subr.mxu0 0.0
        %3422 = vmatpush1.msra.mxu0 0.0
        %3423 = vmatprep.subr.mxu0 0.0
        %3424 = vmatpush1.msra.mxu0 0.0
        %3425 = vmatprep.subr.mxu0 0.0
        %3426 = vmatpush1.msra.mxu0 0.0
        %3427 = vmatprep.subr.mxu0 0.0
        %3428 = vmatpush1.msra.mxu0 0.0
        %3429 = vmatprep.subr.mxu0 0.0
        %3430 = vmatpush1.msra.mxu0 0.0
        %3431 = vmatprep.subr.mxu0 0.0
        %3432 = vmatpush1.msra.mxu0 0.0
        %3433 = vmatprep.mubr.f32.mxu0 0.0
        %3434 = vmatmul.mubr.f32.gmra.mrb[0].mxu0 %v2527
        %v3435 = vpop.f32.mrb[0].mxu0
        %v3436 = vadd.f32 0.0, %v3435
        %v3437 = vpop.f32.mrb[0].mxu0
        %3438 = vdwg.mxu0
        %3439 = vmatprep.subr.mxu0 0.0
        %3440 = vmatpush1.msra.mxu0 %v688
        %3441 = vmatprep.subr.mxu0 0.0
        %3442 = vmatpush1.msra.mxu0 %v693
        %3443 = vmatprep.subr.mxu0 0.0
        %3444 = vmatpush1.msra.mxu0 0.0
        %3445 = vmatprep.subr.mxu0 0.0
        %3446 = vmatpush1.msra.mxu0 0.0
        %3447 = vmatprep.subr.mxu0 0.0
        %3448 = vmatpush1.msra.mxu0 0.0
        %3449 = vmatprep.subr.mxu0 0.0
        %3450 = vmatpush1.msra.mxu0 0.0
        %3451 = vmatprep.subr.mxu0 0.0
        %3452 = vmatpush1.msra.mxu0 0.0
        %3453 = vmatprep.subr.mxu0 0.0
        %3454 = vmatpush1.msra.mxu0 0.0
        %3455 = vmatprep.subr.mxu0 0.0
        %3456 = vmatpush1.msra.mxu0 0.0
        %3457 = vmatprep.subr.mxu0 0.0
        %3458 = vmatpush1.msra.mxu0 0.0
        %3459 = vmatprep.subr.mxu0 0.0
        %3460 = vmatpush1.msra.mxu0 0.0
        %3461 = vmatprep.subr.mxu0 0.0
        %3462 = vmatpush1.msra.mxu0 0.0
        %3463 = vmatprep.subr.mxu0 0.0
        %3464 = vmatpush1.msra.mxu0 0.0
        %3465 = vmatprep.subr.mxu0 0.0
        %3466 = vmatpush1.msra.mxu0 0.0
        %3467 = vmatprep.subr.mxu0 0.0
        %3468 = vmatpush1.msra.mxu0 0.0
        %3469 = vmatprep.subr.mxu0 0.0
        %3470 = vmatpush1.msra.mxu0 0.0
        %3471 = vmatprep.subr.mxu0 0.0
        %3472 = vmatpush1.msra.mxu0 0.0
        %3473 = vmatprep.subr.mxu0 0.0
        %3474 = vmatpush1.msra.mxu0 0.0
        %3475 = vmatprep.subr.mxu0 0.0
        %3476 = vmatpush1.msra.mxu0 0.0
        %3477 = vmatprep.subr.mxu0 0.0
        %3478 = vmatpush1.msra.mxu0 0.0
        %3479 = vmatprep.subr.mxu0 0.0
        %3480 = vmatpush1.msra.mxu0 0.0
        %3481 = vmatprep.subr.mxu0 0.0
        %3482 = vmatpush1.msra.mxu0 0.0
        %3483 = vmatprep.subr.mxu0 0.0
        %3484 = vmatpush1.msra.mxu0 0.0
        %3485 = vmatprep.subr.mxu0 0.0
        %3486 = vmatpush1.msra.mxu0 0.0
        %3487 = vmatprep.subr.mxu0 0.0
        %3488 = vmatpush1.msra.mxu0 0.0
        %3489 = vmatprep.subr.mxu0 0.0
        %3490 = vmatpush1.msra.mxu0 0.0
        %3491 = vmatprep.subr.mxu0 0.0
        %3492 = vmatpush1.msra.mxu0 0.0
        %3493 = vmatprep.subr.mxu0 0.0
        %3494 = vmatpush1.msra.mxu0 0.0
        %3495 = vmatprep.subr.mxu0 0.0
        %3496 = vmatpush1.msra.mxu0 0.0
        %3497 = vmatprep.subr.mxu0 0.0
        %3498 = vmatpush1.msra.mxu0 0.0
        %3499 = vmatprep.subr.mxu0 0.0
        %3500 = vmatpush1.msra.mxu0 0.0
        %3501 = vmatprep.subr.mxu0 0.0
        %3502 = vmatpush1.msra.mxu0 0.0
        %3503 = vmatprep.mubr.f32.mxu0 0.0
        %3504 = vmatmul.mubr.f32.gmra.mrb[0].mxu0 %v2527
        %v3505 = vpop.f32.mrb[0].mxu0
        %v3506 = vadd.f32 0.0, %v3505
        %v3507 = vpop.f32.mrb[0].mxu0
        %3508 = vdwg.mxu0
        %3509 = vmatprep.subr.mxu0 0.0
        %3510 = vmatpush1.msra.mxu0 %v698
        %3511 = vmatprep.subr.mxu0 0.0
        %3512 = vmatpush1.msra.mxu0 %v703
        %3513 = vmatprep.subr.mxu0 0.0
        %3514 = vmatpush1.msra.mxu0 0.0
        %3515 = vmatprep.subr.mxu0 0.0
        %3516 = vmatpush1.msra.mxu0 0.0
        %3517 = vmatprep.subr.mxu0 0.0
        %3518 = vmatpush1.msra.mxu0 0.0
        %3519 = vmatprep.subr.mxu0 0.0
        %3520 = vmatpush1.msra.mxu0 0.0
        %3521 = vmatprep.subr.mxu0 0.0
        %3522 = vmatpush1.msra.mxu0 0.0
        %3523 = vmatprep.subr.mxu0 0.0
        %3524 = vmatpush1.msra.mxu0 0.0
        %3525 = vmatprep.subr.mxu0 0.0
        %3526 = vmatpush1.msra.mxu0 0.0
        %3527 = vmatprep.subr.mxu0 0.0
        %3528 = vmatpush1.msra.mxu0 0.0
        %3529 = vmatprep.subr.mxu0 0.0
        %3530 = vmatpush1.msra.mxu0 0.0
        %3531 = vmatprep.subr.mxu0 0.0
        %3532 = vmatpush1.msra.mxu0 0.0
        %3533 = vmatprep.subr.mxu0 0.0
        %3534 = vmatpush1.msra.mxu0 0.0
        %3535 = vmatprep.subr.mxu0 0.0
        %3536 = vmatpush1.msra.mxu0 0.0
        %3537 = vmatprep.subr.mxu0 0.0
        %3538 = vmatpush1.msra.mxu0 0.0
        %3539 = vmatprep.subr.mxu0 0.0
        %3540 = vmatpush1.msra.mxu0 0.0
        %3541 = vmatprep.subr.mxu0 0.0
        %3542 = vmatpush1.msra.mxu0 0.0
        %3543 = vmatprep.subr.mxu0 0.0
        %3544 = vmatpush1.msra.mxu0 0.0
        %3545 = vmatprep.subr.mxu0 0.0
        %3546 = vmatpush1.msra.mxu0 0.0
        %3547 = vmatprep.subr.mxu0 0.0
        %3548 = vmatpush1.msra.mxu0 0.0
        %3549 = vmatprep.subr.mxu0 0.0
        %3550 = vmatpush1.msra.mxu0 0.0
        %3551 = vmatprep.subr.mxu0 0.0
        %3552 = vmatpush1.msra.mxu0 0.0
        %3553 = vmatprep.subr.mxu0 0.0
        %3554 = vmatpush1.msra.mxu0 0.0
        %3555 = vmatprep.subr.mxu0 0.0
        %3556 = vmatpush1.msra.mxu0 0.0
        %3557 = vmatprep.subr.mxu0 0.0
        %3558 = vmatpush1.msra.mxu0 0.0
        %3559 = vmatprep.subr.mxu0 0.0
        %3560 = vmatpush1.msra.mxu0 0.0
        %3561 = vmatprep.subr.mxu0 0.0
        %3562 = vmatpush1.msra.mxu0 0.0
        %3563 = vmatprep.subr.mxu0 0.0
        %3564 = vmatpush1.msra.mxu0 0.0
        %3565 = vmatprep.subr.mxu0 0.0
        %3566 = vmatpush1.msra.mxu0 0.0
        %3567 = vmatprep.subr.mxu0 0.0
        %3568 = vmatpush1.msra.mxu0 0.0
        %3569 = vmatprep.subr.mxu0 0.0
        %3570 = vmatpush1.msra.mxu0 0.0
        %3571 = vmatprep.subr.mxu0 0.0
        %3572 = vmatpush1.msra.mxu0 0.0
        %3573 = vmatprep.mubr.f32.mxu0 0.0
        %3574 = vmatmul.mubr.f32.gmra.mrb[0].mxu0 %v2527
        %v3575 = vpop.f32.mrb[0].mxu0
        %v3576 = vadd.f32 0.0, %v3575
        %v3577 = vpop.f32.mrb[0].mxu0
        %3578 = vdwg.mxu0
        %3579 = vmatprep.subr.mxu0 0.0
        %3580 = vmatpush1.msra.mxu0 %v708
        %3581 = vmatprep.subr.mxu0 0.0
        %3582 = vmatpush1.msra.mxu0 %v713
        %3583 = vmatprep.subr.mxu0 0.0
        %3584 = vmatpush1.msra.mxu0 0.0
        %3585 = vmatprep.subr.mxu0 0.0
        %3586 = vmatpush1.msra.mxu0 0.0
        %3587 = vmatprep.subr.mxu0 0.0
        %3588 = vmatpush1.msra.mxu0 0.0
        %3589 = vmatprep.subr.mxu0 0.0
        %3590 = vmatpush1.msra.mxu0 0.0
        %3591 = vmatprep.subr.mxu0 0.0
        %3592 = vmatpush1.msra.mxu0 0.0
        %3593 = vmatprep.subr.mxu0 0.0
        %3594 = vmatpush1.msra.mxu0 0.0
        %3595 = vmatprep.subr.mxu0 0.0
        %3596 = vmatpush1.msra.mxu0 0.0
        %3597 = vmatprep.subr.mxu0 0.0
        %3598 = vmatpush1.msra.mxu0 0.0
        %3599 = vmatprep.subr.mxu0 0.0
        %3600 = vmatpush1.msra.mxu0 0.0
        %3601 = vmatprep.subr.mxu0 0.0
        %3602 = vmatpush1.msra.mxu0 0.0
        %3603 = vmatprep.subr.mxu0 0.0
        %3604 = vmatpush1.msra.mxu0 0.0
        %3605 = vmatprep.subr.mxu0 0.0
        %3606 = vmatpush1.msra.mxu0 0.0
        %3607 = vmatprep.subr.mxu0 0.0
        %3608 = vmatpush1.msra.mxu0 0.0
        %3609 = vmatprep.subr.mxu0 0.0
        %3610 = vmatpush1.msra.mxu0 0.0
        %3611 = vmatprep.subr.mxu0 0.0
        %3612 = vmatpush1.msra.mxu0 0.0
        %3613 = vmatprep.subr.mxu0 0.0
        %3614 = vmatpush1.msra.mxu0 0.0
        %3615 = vmatprep.subr.mxu0 0.0
        %3616 = vmatpush1.msra.mxu0 0.0
        %3617 = vmatprep.subr.mxu0 0.0
        %3618 = vmatpush1.msra.mxu0 0.0
        %3619 = vmatprep.subr.mxu0 0.0
        %3620 = vmatpush1.msra.mxu0 0.0
        %3621 = vmatprep.subr.mxu0 0.0
        %3622 = vmatpush1.msra.mxu0 0.0
        %3623 = vmatprep.subr.mxu0 0.0
        %3624 = vmatpush1.msra.mxu0 0.0
        %3625 = vmatprep.subr.mxu0 0.0
        %3626 = vmatpush1.msra.mxu0 0.0
        %3627 = vmatprep.subr.mxu0 0.0
        %3628 = vmatpush1.msra.mxu0 0.0
        %3629 = vmatprep.subr.mxu0 0.0
        %3630 = vmatpush1.msra.mxu0 0.0
        %3631 = vmatprep.subr.mxu0 0.0
        %3632 = vmatpush1.msra.mxu0 0.0
        %3633 = vmatprep.subr.mxu0 0.0
        %3634 = vmatpush1.msra.mxu0 0.0
        %3635 = vmatprep.subr.mxu0 0.0
        %3636 = vmatpush1.msra.mxu0 0.0
        %3637 = vmatprep.subr.mxu0 0.0
        %3638 = vmatpush1.msra.mxu0 0.0
        %3639 = vmatprep.subr.mxu0 0.0
        %3640 = vmatpush1.msra.mxu0 0.0
        %3641 = vmatprep.subr.mxu0 0.0
        %3642 = vmatpush1.msra.mxu0 0.0
        %3643 = vmatprep.mubr.f32.mxu0 0.0
        %3644 = vmatmul.mubr.f32.gmra.mrb[0].mxu0 %v2527
        %v3645 = vpop.f32.mrb[0].mxu0
        %v3646 = vadd.f32 0.0, %v3645
        %v3647 = vpop.f32.mrb[0].mxu0
        %3648 = vdwg.mxu0
        %s3649 = scalar_lea.vmem %s314, 16
        %v3650 = vld [vmem:[%s3649] sm:$0xff]
        %v3651 = vld [vmem:[%s3649 + $0x8] sm:$0xff]
        %3652 = vxpose.xlu0.b32.start [1/16] %v3650, 128
        %3653 = vxpose.xlu0.b32.cont [2/16] %v3651, 128
        %3654 = vxpose.xlu0.b32.cont [3/16] 0.0, 128
        %3655 = vxpose.xlu0.b32.cont [4/16] 0.0, 128
        %3656 = vxpose.xlu0.b32.cont [5/16] 0.0, 128
        %3657 = vxpose.xlu0.b32.cont [6/16] 0.0, 128
        %3658 = vxpose.xlu0.b32.cont [7/16] 0.0, 128
        %3659 = vxpose.xlu0.b32.cont [8/16] 0.0, 128
        %3660 = vxpose.xlu0.b32.cont [9/16] 0.0, 128
        %3661 = vxpose.xlu0.b32.cont [10/16] 0.0, 128
        %3662 = vxpose.xlu0.b32.cont [11/16] 0.0, 128
        %3663 = vxpose.xlu0.b32.cont [12/16] 0.0, 128
        %3664 = vxpose.xlu0.b32.cont [13/16] 0.0, 128
        %3665 = vxpose.xlu0.b32.cont [14/16] 0.0, 128
        %3666 = vxpose.xlu0.b32.cont [15/16] 0.0, 128
        %3667 = vxpose.xlu0.b32.end [16/16] 0.0, 128
        %v3668 = vpop.trf.xlu0
        %v3669 = vpop.trf.xlu0
        %v3670 = vpop.trf.xlu0
        %v3671 = vpop.trf.xlu0
        %v3672 = vpop.trf.xlu0
        %v3673 = vpop.trf.xlu0
        %v3674 = vpop.trf.xlu0
        %v3675 = vpop.trf.xlu0
        %v3676 = vpop.trf.xlu0
        %v3677 = vpop.trf.xlu0
        %v3678 = vpop.trf.xlu0
        %v3679 = vpop.trf.xlu0
        %v3680 = vpop.trf.xlu0
        %v3681 = vpop.trf.xlu0
        %v3682 = vpop.trf.xlu0
        %v3683 = vpop.trf.xlu0
        %v3684 = vcombine.low %v2596, %v2736
        %v3685 = vcombine.high %v2596, %v2736
        %v3687 = vunpack.c.l.s4 1983009808
        %v3688 = vunpack.c.0.s8 %v3687
        %v3689 = vlaneseq
        %v3690 = vshrl.u32 %v3689, 7
        %v3691 = vsub.s32 %v3688, %v3690
        %v3692 = vrot.slane %v3684, %v3691
        %v3694 = vunpack.c.l.s4 1983009808
        %v3695 = vunpack.c.0.s8 %v3694
        %v3696 = vlaneseq
        %v3697 = vshrl.u32 %v3696, 7
        %v3698 = vsub.s32 %v3695, %v3697
        %v3699 = vrot.slane %v3685, %v3698
        %v3700 = vcombine.low %v2666, %v2806
        %v3701 = vcombine.high %v2666, %v2806
        %v3703 = vunpack.c.l.s4 1983009808
        %v3704 = vunpack.c.0.s8 %v3703
        %v3705 = vlaneseq
        %v3706 = vshrl.u32 %v3705, 7
        %v3707 = vsub.s32 %v3704, %v3706
        %v3708 = vrot.slane %v3700, %v3707
        %v3710 = vunpack.c.l.s4 1983009808
        %v3711 = vunpack.c.0.s8 %v3710
        %v3712 = vlaneseq
        %v3713 = vshrl.u32 %v3712, 7
        %v3714 = vsub.s32 %v3711, %v3713
        %v3715 = vrot.slane %v3701, %v3714
        %v3716 = vcombine.low %v2876, %v3016
        %v3717 = vcombine.high %v2876, %v3016
        %v3719 = vunpack.c.l.s4 1983009808
        %v3720 = vunpack.c.0.s8 %v3719
        %v3721 = vlaneseq
        %v3722 = vshrl.u32 %v3721, 7
        %v3723 = vsub.s32 %v3720, %v3722
        %v3724 = vrot.slane %v3716, %v3723
        %v3726 = vunpack.c.l.s4 1983009808
        %v3727 = vunpack.c.0.s8 %v3726
        %v3728 = vlaneseq
        %v3729 = vshrl.u32 %v3728, 7
        %v3730 = vsub.s32 %v3727, %v3729
        %v3731 = vrot.slane %v3717, %v3730
        %v3732 = vcombine.low %v2946, %v3086
        %v3733 = vcombine.high %v2946, %v3086
        %v3735 = vunpack.c.l.s4 1983009808
        %v3736 = vunpack.c.0.s8 %v3735
        %v3737 = vlaneseq
        %v3738 = vshrl.u32 %v3737, 7
        %v3739 = vsub.s32 %v3736, %v3738
        %v3740 = vrot.slane %v3732, %v3739
        %v3742 = vunpack.c.l.s4 1983009808
        %v3743 = vunpack.c.0.s8 %v3742
        %v3744 = vlaneseq
        %v3745 = vshrl.u32 %v3744, 7
        %v3746 = vsub.s32 %v3743, %v3745
        %v3747 = vrot.slane %v3733, %v3746
        %v3748 = vcombine.low %v3692, %v3708
        %v3749 = vcombine.high %v3692, %v3708
        %v3751 = vunpack.c.l.s4 1934713408
        %v3752 = vunpack.c.0.s8 %v3751
        %v3753 = vlaneseq
        %v3754 = vshrl.u32 %v3753, 7
        %v3755 = vsub.s32 %v3752, %v3754
        %v3756 = vrot.slane %v3748, %v3755
        %v3758 = vunpack.c.l.s4 1934713408
        %v3759 = vunpack.c.0.s8 %v3758
        %v3760 = vlaneseq
        %v3761 = vshrl.u32 %v3760, 7
        %v3762 = vsub.s32 %v3759, %v3761
        %v3763 = vrot.slane %v3749, %v3762
        %v3764 = vcombine.low %v3699, %v3715
        %v3765 = vcombine.high %v3699, %v3715
        %v3767 = vunpack.c.l.s4 1934713408
        %v3768 = vunpack.c.0.s8 %v3767
        %v3769 = vlaneseq
        %v3770 = vshrl.u32 %v3769, 7
        %v3771 = vsub.s32 %v3768, %v3770
        %v3772 = vrot.slane %v3764, %v3771
        %v3774 = vunpack.c.l.s4 1934713408
        %v3775 = vunpack.c.0.s8 %v3774
        %v3776 = vlaneseq
        %v3777 = vshrl.u32 %v3776, 7
        %v3778 = vsub.s32 %v3775, %v3777
        %v3779 = vrot.slane %v3765, %v3778
        %v3780 = vcombine.low %v3724, %v3740
        %v3781 = vcombine.high %v3724, %v3740
        %v3783 = vunpack.c.l.s4 1934713408
        %v3784 = vunpack.c.0.s8 %v3783
        %v3785 = vlaneseq
        %v3786 = vshrl.u32 %v3785, 7
        %v3787 = vsub.s32 %v3784, %v3786
        %v3788 = vrot.slane %v3780, %v3787
        %v3790 = vunpack.c.l.s4 1934713408
        %v3791 = vunpack.c.0.s8 %v3790
        %v3792 = vlaneseq
        %v3793 = vshrl.u32 %v3792, 7
        %v3794 = vsub.s32 %v3791, %v3793
        %v3795 = vrot.slane %v3781, %v3794
        %v3796 = vcombine.low %v3731, %v3747
        %v3797 = vcombine.high %v3731, %v3747
        %v3799 = vunpack.c.l.s4 1934713408
        %v3800 = vunpack.c.0.s8 %v3799
        %v3801 = vlaneseq
        %v3802 = vshrl.u32 %v3801, 7
        %v3803 = vsub.s32 %v3800, %v3802
        %v3804 = vrot.slane %v3796, %v3803
        %v3806 = vunpack.c.l.s4 1934713408
        %v3807 = vunpack.c.0.s8 %v3806
        %v3808 = vlaneseq
        %v3809 = vshrl.u32 %v3808, 7
        %v3810 = vsub.s32 %v3807, %v3809
        %v3811 = vrot.slane %v3797, %v3810
        %v3812 = vcombine.low %v3756, %v3788
        %v3813 = vcombine.high %v3756, %v3788
        %v3814 = vcombine.low %v3763, %v3795
        %v3815 = vcombine.high %v3763, %v3795
        %v3816 = vcombine.low %v3772, %v3804
        %v3817 = vcombine.high %v3772, %v3804
        %v3818 = vcombine.low %v3779, %v3811
        %v3819 = vcombine.high %v3779, %v3811
        %v3820 = vcombine.low %v3156, %v3296
        %v3821 = vcombine.high %v3156, %v3296
        %v3823 = vunpack.c.l.s4 1983009808
        %v3824 = vunpack.c.0.s8 %v3823
        %v3825 = vlaneseq
        %v3826 = vshrl.u32 %v3825, 7
        %v3827 = vsub.s32 %v3824, %v3826
        %v3828 = vrot.slane %v3820, %v3827
        %v3830 = vunpack.c.l.s4 1983009808
        %v3831 = vunpack.c.0.s8 %v3830
        %v3832 = vlaneseq
        %v3833 = vshrl.u32 %v3832, 7
        %v3834 = vsub.s32 %v3831, %v3833
        %v3835 = vrot.slane %v3821, %v3834
        %v3836 = vcombine.low %v3226, %v3366
        %v3837 = vcombine.high %v3226, %v3366
        %v3839 = vunpack.c.l.s4 1983009808
        %v3840 = vunpack.c.0.s8 %v3839
        %v3841 = vlaneseq
        %v3842 = vshrl.u32 %v3841, 7
        %v3843 = vsub.s32 %v3840, %v3842
        %v3844 = vrot.slane %v3836, %v3843
        %v3846 = vunpack.c.l.s4 1983009808
        %v3847 = vunpack.c.0.s8 %v3846
        %v3848 = vlaneseq
        %v3849 = vshrl.u32 %v3848, 7
        %v3850 = vsub.s32 %v3847, %v3849
        %v3851 = vrot.slane %v3837, %v3850
        %v3852 = vcombine.low %v3436, %v3576
        %v3853 = vcombine.high %v3436, %v3576
        %v3855 = vunpack.c.l.s4 1983009808
        %v3856 = vunpack.c.0.s8 %v3855
        %v3857 = vlaneseq
        %v3858 = vshrl.u32 %v3857, 7
        %v3859 = vsub.s32 %v3856, %v3858
        %v3860 = vrot.slane %v3852, %v3859
        %v3862 = vunpack.c.l.s4 1983009808
        %v3863 = vunpack.c.0.s8 %v3862
        %v3864 = vlaneseq
        %v3865 = vshrl.u32 %v3864, 7
        %v3866 = vsub.s32 %v3863, %v3865
        %v3867 = vrot.slane %v3853, %v3866
        %v3868 = vcombine.low %v3506, %v3646
        %v3869 = vcombine.high %v3506, %v3646
        %v3871 = vunpack.c.l.s4 1983009808
        %v3872 = vunpack.c.0.s8 %v3871
        %v3873 = vlaneseq
        %v3874 = vshrl.u32 %v3873, 7
        %v3875 = vsub.s32 %v3872, %v3874
        %v3876 = vrot.slane %v3868, %v3875
        %v3878 = vunpack.c.l.s4 1983009808
        %v3879 = vunpack.c.0.s8 %v3878
        %v3880 = vlaneseq
        %v3881 = vshrl.u32 %v3880, 7
        %v3882 = vsub.s32 %v3879, %v3881
        %v3883 = vrot.slane %v3869, %v3882
        %v3884 = vcombine.low %v3828, %v3844
        %v3885 = vcombine.high %v3828, %v3844
        %v3887 = vunpack.c.l.s4 1934713408
        %v3888 = vunpack.c.0.s8 %v3887
        %v3889 = vlaneseq
        %v3890 = vshrl.u32 %v3889, 7
        %v3891 = vsub.s32 %v3888, %v3890
        %v3892 = vrot.slane %v3884, %v3891
        %v3894 = vunpack.c.l.s4 1934713408
        %v3895 = vunpack.c.0.s8 %v3894
        %v3896 = vlaneseq
        %v3897 = vshrl.u32 %v3896, 7
        %v3898 = vsub.s32 %v3895, %v3897
        %v3899 = vrot.slane %v3885, %v3898
        %v3900 = vcombine.low %v3835, %v3851
        %v3901 = vcombine.high %v3835, %v3851
        %v3903 = vunpack.c.l.s4 1934713408
        %v3904 = vunpack.c.0.s8 %v3903
        %v3905 = vlaneseq
        %v3906 = vshrl.u32 %v3905, 7
        %v3907 = vsub.s32 %v3904, %v3906
        %v3908 = vrot.slane %v3900, %v3907
        %v3910 = vunpack.c.l.s4 1934713408
        %v3911 = vunpack.c.0.s8 %v3910
        %v3912 = vlaneseq
        %v3913 = vshrl.u32 %v3912, 7
        %v3914 = vsub.s32 %v3911, %v3913
        %v3915 = vrot.slane %v3901, %v3914
        %v3916 = vcombine.low %v3860, %v3876
        %v3917 = vcombine.high %v3860, %v3876
        %v3919 = vunpack.c.l.s4 1934713408
        %v3920 = vunpack.c.0.s8 %v3919
        %v3921 = vlaneseq
        %v3922 = vshrl.u32 %v3921, 7
        %v3923 = vsub.s32 %v3920, %v3922
        %v3924 = vrot.slane %v3916, %v3923
        %v3926 = vunpack.c.l.s4 1934713408
        %v3927 = vunpack.c.0.s8 %v3926
        %v3928 = vlaneseq
        %v3929 = vshrl.u32 %v3928, 7
        %v3930 = vsub.s32 %v3927, %v3929
        %v3931 = vrot.slane %v3917, %v3930
        %v3932 = vcombine.low %v3867, %v3883
        %v3933 = vcombine.high %v3867, %v3883
        %v3935 = vunpack.c.l.s4 1934713408
        %v3936 = vunpack.c.0.s8 %v3935
        %v3937 = vlaneseq
        %v3938 = vshrl.u32 %v3937, 7
        %v3939 = vsub.s32 %v3936, %v3938
        %v3940 = vrot.slane %v3932, %v3939
        %v3942 = vunpack.c.l.s4 1934713408
        %v3943 = vunpack.c.0.s8 %v3942
        %v3944 = vlaneseq
        %v3945 = vshrl.u32 %v3944, 7
        %v3946 = vsub.s32 %v3943, %v3945
        %v3947 = vrot.slane %v3933, %v3946
        %v3948 = vcombine.low %v3892, %v3924
        %v3949 = vcombine.high %v3892, %v3924
        %v3950 = vcombine.low %v3899, %v3931
        %v3951 = vcombine.high %v3899, %v3931
        %v3952 = vcombine.low %v3908, %v3940
        %v3953 = vcombine.high %v3908, %v3940
        %v3954 = vcombine.low %v3915, %v3947
        %v3955 = vcombine.high %v3915, %v3947
        %3958 = vrot.lane.b32.xlu0 %v3813, 32
        %v3959 = vpop.permute.xlu0 %3958
        %3960 = vrot.lane.b32.xlu0 %v3949, 32
        %v3961 = vpop.permute.xlu0 %3960
        %3966 = vrot.lane.b32.xlu0 %v3814, 64
        %v3967 = vpop.permute.xlu0 %3966
        %3968 = vrot.lane.b32.xlu0 %v3950, 64
        %v3969 = vpop.permute.xlu0 %3968
        %3974 = vrot.lane.b32.xlu0 %v3815, 96
        %v3975 = vpop.permute.xlu0 %3974
        %3976 = vrot.lane.b32.xlu0 %v3951, 96
        %v3977 = vpop.permute.xlu0 %3976
        %3982 = vrot.lane.b32.xlu0 %v3817, 32
        %v3983 = vpop.permute.xlu0 %3982
        %3984 = vrot.lane.b32.xlu0 %v3953, 32
        %v3985 = vpop.permute.xlu0 %3984
        %3990 = vrot.lane.b32.xlu0 %v3818, 64
        %v3991 = vpop.permute.xlu0 %3990
        %3992 = vrot.lane.b32.xlu0 %v3954, 64
        %v3993 = vpop.permute.xlu0 %3992
        %3998 = vrot.lane.b32.xlu0 %v3819, 96
        %v3999 = vpop.permute.xlu0 %3998
        %4000 = vrot.lane.b32.xlu0 %v3955, 96
        %v4001 = vpop.permute.xlu0 %4000
        %v4004 = vsel %vm716, %v3812, %v3959
        %v4005 = vsel %vm716, %v3948, %v3961
        %v4006 = vsel %vm2258, %v4004, %v3967
        %v4007 = vsel %vm2258, %v4005, %v3969
        %v4008 = vsel %vm2261, %v4006, %v3975
        %v4009 = vsel %vm2261, %v4007, %v3977
        %v4010 = vsel %vm716, %v3816, %v3983
        %v4011 = vsel %vm716, %v3952, %v3985
        %v4012 = vsel %vm2258, %v4010, %v3991
        %v4013 = vsel %vm2258, %v4011, %v3993
        %v4014 = vsel %vm2261, %v4012, %v3999
        %v4015 = vsel %vm2261, %v4013, %v4001
        %v4017 = vsel %vm778, %v3668, 0
        %4019 = vmatprep.subr.mxu0 %v4014
        %4020 = vmatpush1.msra.mxu0 %v4008
        %4021 = vmatprep.subr.mxu0 %v4015
        %4022 = vmatpush1.msra.mxu0 %v4009
        %4023 = vmatprep.subr.mxu0 0.0
        %4024 = vmatpush1.msra.mxu0 0.0
        %4025 = vmatprep.subr.mxu0 0.0
        %4026 = vmatpush1.msra.mxu0 0.0
        %4027 = vmatprep.subr.mxu0 0.0
        %4028 = vmatpush1.msra.mxu0 0.0
        %4029 = vmatprep.subr.mxu0 0.0
        %4030 = vmatpush1.msra.mxu0 0.0
        %4031 = vmatprep.subr.mxu0 0.0
        %4032 = vmatpush1.msra.mxu0 0.0
        %4033 = vmatprep.subr.mxu0 0.0
        %4034 = vmatpush1.msra.mxu0 0.0
        %4035 = vmatprep.subr.mxu0 0.0
        %4036 = vmatpush1.msra.mxu0 0.0
        %4037 = vmatprep.subr.mxu0 0.0
        %4038 = vmatpush1.msra.mxu0 0.0
        %4039 = vmatprep.subr.mxu0 0.0
        %4040 = vmatpush1.msra.mxu0 0.0
        %4041 = vmatprep.subr.mxu0 0.0
        %4042 = vmatpush1.msra.mxu0 0.0
        %4043 = vmatprep.subr.mxu0 0.0
        %4044 = vmatpush1.msra.mxu0 0.0
        %4045 = vmatprep.subr.mxu0 0.0
        %4046 = vmatpush1.msra.mxu0 0.0
        %4047 = vmatprep.subr.mxu0 0.0
        %4048 = vmatpush1.msra.mxu0 0.0
        %4049 = vmatprep.subr.mxu0 0.0
        %4050 = vmatpush1.msra.mxu0 0.0
        %4051 = vmatprep.subr.mxu0 0.0
        %4052 = vmatpush1.msra.mxu0 0.0
        %4053 = vmatprep.subr.mxu0 0.0
        %4054 = vmatpush1.msra.mxu0 0.0
        %4055 = vmatprep.subr.mxu0 0.0
        %4056 = vmatpush1.msra.mxu0 0.0
        %4057 = vmatprep.subr.mxu0 0.0
        %4058 = vmatpush1.msra.mxu0 0.0
        %4059 = vmatprep.subr.mxu0 0.0
        %4060 = vmatpush1.msra.mxu0 0.0
        %4061 = vmatprep.subr.mxu0 0.0
        %4062 = vmatpush1.msra.mxu0 0.0
        %4063 = vmatprep.subr.mxu0 0.0
        %4064 = vmatpush1.msra.mxu0 0.0
        %4065 = vmatprep.subr.mxu0 0.0
        %4066 = vmatpush1.msra.mxu0 0.0
        %4067 = vmatprep.subr.mxu0 0.0
        %4068 = vmatpush1.msra.mxu0 0.0
        %4069 = vmatprep.subr.mxu0 0.0
        %4070 = vmatpush1.msra.mxu0 0.0
        %4071 = vmatprep.subr.mxu0 0.0
        %4072 = vmatpush1.msra.mxu0 0.0
        %4073 = vmatprep.subr.mxu0 0.0
        %4074 = vmatpush1.msra.mxu0 0.0
        %4075 = vmatprep.subr.mxu0 0.0
        %4076 = vmatpush1.msra.mxu0 0.0
        %4077 = vmatprep.subr.mxu0 0.0
        %4078 = vmatpush1.msra.mxu0 0.0
        %4079 = vmatprep.subr.mxu0 0.0
        %4080 = vmatpush1.msra.mxu0 0.0
        %4081 = vmatprep.subr.mxu0 0.0
        %4082 = vmatpush1.msra.mxu0 0.0
        %4083 = vmatprep.mubr.f32.mxu0 0.0
        %4084 = vmatmul.mubr.f32.gmra.mrb[0].mxu0 %v4017
        %v4085 = vpop.f32.mrb[0].mxu0
        %v4086 = vadd.f32 0.0, %v4085
        %v4087 = vpop.f32.mrb[0].mxu0
        %v4088 = vadd.f32 0.0, %v4087
        %4089 = vdwg.mxu0
        %s4090 = scalar_lea.vmem %s298, 64 [#allocation4]
        %v4091 = vld [vmem:[%s4090] sm:$0xff]
        %v4092 = vld [vmem:[%s4090 + $0x8] sm:$0xff]
        %v4093 = vld [vmem:[%s4090 + $0x10] sm:$0xff]
        %v4094 = vld [vmem:[%s4090 + $0x18] sm:$0xff]
        %v4095 = vld [vmem:[%s4090 + $0x20] sm:$0xff]
        %v4096 = vld [vmem:[%s4090 + $0x28] sm:$0xff]
        %v4097 = vld [vmem:[%s4090 + $0x30] sm:$0xff]
        %v4098 = vld [vmem:[%s4090 + $0x38] sm:$0xff]
        %4100 = vrot.lane.b32.xlu0 %v4086, 96
        %v4101 = vpop.permute.xlu0 %4100
        %4103 = vrot.lane.b32.xlu0 %v4086, 64
        %v4104 = vpop.permute.xlu0 %4103
        %4106 = vrot.lane.b32.xlu0 %v4086, 32
        %v4107 = vpop.permute.xlu0 %4106
        %4110 = vrot.lane.b32.xlu0 %v4088, 96
        %v4111 = vpop.permute.xlu0 %4110
        %4113 = vrot.lane.b32.xlu0 %v4088, 64
        %v4114 = vpop.permute.xlu0 %4113
        %4116 = vrot.lane.b32.xlu0 %v4088, 32
        %v4117 = vpop.permute.xlu0 %4116
        %v4119 = vcombine.low %v4086, %v4104
        %v4120 = vcombine.high %v4086, %v4104
        %v4122 = vunpack.c.l.s4 1983009808
        %v4123 = vunpack.c.0.s8 %v4122
        %v4124 = vlaneseq
        %v4125 = vshrl.u32 %v4124, 7
        %v4126 = vsub.s32 %v4123, %v4125
        %v4127 = vrot.slane %v4119, %v4126
        %v4129 = vunpack.c.l.s4 1983009808
        %v4130 = vunpack.c.0.s8 %v4129
        %v4131 = vlaneseq
        %v4132 = vshrl.u32 %v4131, 7
        %v4133 = vsub.s32 %v4130, %v4132
        %v4134 = vrot.slane %v4120, %v4133
        %v4135 = vcombine.low %v4101, %v4107
        %v4136 = vcombine.high %v4101, %v4107
        %v4138 = vunpack.c.l.s4 1983009808
        %v4139 = vunpack.c.0.s8 %v4138
        %v4140 = vlaneseq
        %v4141 = vshrl.u32 %v4140, 7
        %v4142 = vsub.s32 %v4139, %v4141
        %v4143 = vrot.slane %v4135, %v4142
        %v4145 = vunpack.c.l.s4 1983009808
        %v4146 = vunpack.c.0.s8 %v4145
        %v4147 = vlaneseq
        %v4148 = vshrl.u32 %v4147, 7
        %v4149 = vsub.s32 %v4146, %v4148
        %v4150 = vrot.slane %v4136, %v4149
        %v4151 = vcombine.low %v4088, %v4114
        %v4152 = vcombine.high %v4088, %v4114
        %v4154 = vunpack.c.l.s4 1983009808
        %v4155 = vunpack.c.0.s8 %v4154
        %v4156 = vlaneseq
        %v4157 = vshrl.u32 %v4156, 7
        %v4158 = vsub.s32 %v4155, %v4157
        %v4159 = vrot.slane %v4151, %v4158
        %v4161 = vunpack.c.l.s4 1983009808
        %v4162 = vunpack.c.0.s8 %v4161
        %v4163 = vlaneseq
        %v4164 = vshrl.u32 %v4163, 7
        %v4165 = vsub.s32 %v4162, %v4164
        %v4166 = vrot.slane %v4152, %v4165
        %v4167 = vcombine.low %v4111, %v4117
        %v4168 = vcombine.high %v4111, %v4117
        %v4170 = vunpack.c.l.s4 1983009808
        %v4171 = vunpack.c.0.s8 %v4170
        %v4172 = vlaneseq
        %v4173 = vshrl.u32 %v4172, 7
        %v4174 = vsub.s32 %v4171, %v4173
        %v4175 = vrot.slane %v4167, %v4174
        %v4177 = vunpack.c.l.s4 1983009808
        %v4178 = vunpack.c.0.s8 %v4177
        %v4179 = vlaneseq
        %v4180 = vshrl.u32 %v4179, 7
        %v4181 = vsub.s32 %v4178, %v4180
        %v4182 = vrot.slane %v4168, %v4181
        %v4183 = vcombine.low %v4127, %v4143
        %v4184 = vcombine.high %v4127, %v4143
        %v4186 = vunpack.c.l.s4 1934713408
        %v4187 = vunpack.c.0.s8 %v4186
        %v4188 = vlaneseq
        %v4189 = vshrl.u32 %v4188, 7
        %v4190 = vsub.s32 %v4187, %v4189
        %v4191 = vrot.slane %v4183, %v4190
        %v4193 = vunpack.c.l.s4 1934713408
        %v4194 = vunpack.c.0.s8 %v4193
        %v4195 = vlaneseq
        %v4196 = vshrl.u32 %v4195, 7
        %v4197 = vsub.s32 %v4194, %v4196
        %v4198 = vrot.slane %v4184, %v4197
        %v4199 = vcombine.low %v4134, %v4150
        %v4200 = vcombine.high %v4134, %v4150
        %v4202 = vunpack.c.l.s4 1934713408
        %v4203 = vunpack.c.0.s8 %v4202
        %v4204 = vlaneseq
        %v4205 = vshrl.u32 %v4204, 7
        %v4206 = vsub.s32 %v4203, %v4205
        %v4207 = vrot.slane %v4199, %v4206
        %v4209 = vunpack.c.l.s4 1934713408
        %v4210 = vunpack.c.0.s8 %v4209
        %v4211 = vlaneseq
        %v4212 = vshrl.u32 %v4211, 7
        %v4213 = vsub.s32 %v4210, %v4212
        %v4214 = vrot.slane %v4200, %v4213
        %v4215 = vcombine.low %v4159, %v4175
        %v4216 = vcombine.high %v4159, %v4175
        %v4218 = vunpack.c.l.s4 1934713408
        %v4219 = vunpack.c.0.s8 %v4218
        %v4220 = vlaneseq
        %v4221 = vshrl.u32 %v4220, 7
        %v4222 = vsub.s32 %v4219, %v4221
        %v4223 = vrot.slane %v4215, %v4222
        %v4225 = vunpack.c.l.s4 1934713408
        %v4226 = vunpack.c.0.s8 %v4225
        %v4227 = vlaneseq
        %v4228 = vshrl.u32 %v4227, 7
        %v4229 = vsub.s32 %v4226, %v4228
        %v4230 = vrot.slane %v4216, %v4229
        %v4231 = vcombine.low %v4166, %v4182
        %v4232 = vcombine.high %v4166, %v4182
        %v4234 = vunpack.c.l.s4 1934713408
        %v4235 = vunpack.c.0.s8 %v4234
        %v4236 = vlaneseq
        %v4237 = vshrl.u32 %v4236, 7
        %v4238 = vsub.s32 %v4235, %v4237
        %v4239 = vrot.slane %v4231, %v4238
        %v4241 = vunpack.c.l.s4 1934713408
        %v4242 = vunpack.c.0.s8 %v4241
        %v4243 = vlaneseq
        %v4244 = vshrl.u32 %v4243, 7
        %v4245 = vsub.s32 %v4242, %v4244
        %v4246 = vrot.slane %v4232, %v4245
        %v4247 = vcombine.low %v4191, %v4223
        %v4248 = vcombine.high %v4191, %v4223
        %v4249 = vcombine.low %v4198, %v4230
        %v4250 = vcombine.high %v4198, %v4230
        %v4251 = vcombine.low %v4207, %v4239
        %v4252 = vcombine.high %v4207, %v4239
        %v4253 = vcombine.low %v4214, %v4246
        %v4254 = vcombine.high %v4214, %v4246
        %v4255 = vadd.f32 %v4091, %v4247
        %v4256 = vadd.f32 %v4092, %v4248
        %v4257 = vadd.f32 %v4093, %v4249
        %v4258 = vadd.f32 %v4094, %v4250
        %v4259 = vadd.f32 %v4095, %v4251
        %v4260 = vadd.f32 %v4096, %v4252
        %v4261 = vadd.f32 %v4097, %v4253
        %v4262 = vadd.f32 %v4098, %v4254
        %4263 = vst.msk [vmem:[%s4090] sm:$0xff] %vm716, %v4255
        %4264 = vst.msk [vmem:[%s4090 + $0x8] sm:$0xff] %vm716, %v4256
        %4265 = vst.msk [vmem:[%s4090 + $0x10] sm:$0xff] %vm716, %v4257
        %4266 = vst.msk [vmem:[%s4090 + $0x18] sm:$0xff] %vm716, %v4258
        %4267 = vst.msk [vmem:[%s4090 + $0x20] sm:$0xff] %vm716, %v4259
        %4268 = vst.msk [vmem:[%s4090 + $0x28] sm:$0xff] %vm716, %v4260
        %4269 = vst.msk [vmem:[%s4090 + $0x30] sm:$0xff] %vm716, %v4261
        %4270 = vst.msk [vmem:[%s4090 + $0x38] sm:$0xff] %vm716, %v4262
        %s4271 = scalar_lea.vmem %s4, 16
        %v4272 = vld [vmem:[%s4271] sm:$0xff]
        %v4274 = vsel %vm778, %v4272, 0
        %4276 = vmatprep.subr.mxu0 0.0
        %4277 = vmatpush1.msra.mxu0 %v558
        %4278 = vmatprep.subr.mxu0 0.0
        %4279 = vmatpush1.msra.mxu0 %v563
        %4280 = vmatprep.subr.mxu0 0.0
        %4281 = vmatpush1.msra.mxu0 0.0
        %4282 = vmatprep.subr.mxu0 0.0
        %4283 = vmatpush1.msra.mxu0 0.0
        %4284 = vmatprep.subr.mxu0 0.0
        %4285 = vmatpush1.msra.mxu0 0.0
        %4286 = vmatprep.subr.mxu0 0.0
        %4287 = vmatpush1.msra.mxu0 0.0
        %4288 = vmatprep.subr.mxu0 0.0
        %4289 = vmatpush1.msra.mxu0 0.0
        %4290 = vmatprep.subr.mxu0 0.0
        %4291 = vmatpush1.msra.mxu0 0.0
        %4292 = vmatprep.subr.mxu0 0.0
        %4293 = vmatpush1.msra.mxu0 0.0
        %4294 = vmatprep.subr.mxu0 0.0
        %4295 = vmatpush1.msra.mxu0 0.0
        %4296 = vmatprep.subr.mxu0 0.0
        %4297 = vmatpush1.msra.mxu0 0.0
        %4298 = vmatprep.subr.mxu0 0.0
        %4299 = vmatpush1.msra.mxu0 0.0
        %4300 = vmatprep.subr.mxu0 0.0
        %4301 = vmatpush1.msra.mxu0 0.0
        %4302 = vmatprep.subr.mxu0 0.0
        %4303 = vmatpush1.msra.mxu0 0.0
        %4304 = vmatprep.subr.mxu0 0.0
        %4305 = vmatpush1.msra.mxu0 0.0
        %4306 = vmatprep.subr.mxu0 0.0
        %4307 = vmatpush1.msra.mxu0 0.0
        %4308 = vmatprep.subr.mxu0 0.0
        %4309 = vmatpush1.msra.mxu0 0.0
        %4310 = vmatprep.subr.mxu0 0.0
        %4311 = vmatpush1.msra.mxu0 0.0
        %4312 = vmatprep.subr.mxu0 0.0
        %4313 = vmatpush1.msra.mxu0 0.0
        %4314 = vmatprep.subr.mxu0 0.0
        %4315 = vmatpush1.msra.mxu0 0.0
        %4316 = vmatprep.subr.mxu0 0.0
        %4317 = vmatpush1.msra.mxu0 0.0
        %4318 = vmatprep.subr.mxu0 0.0
        %4319 = vmatpush1.msra.mxu0 0.0
        %4320 = vmatprep.subr.mxu0 0.0
        %4321 = vmatpush1.msra.mxu0 0.0
        %4322 = vmatprep.subr.mxu0 0.0
        %4323 = vmatpush1.msra.mxu0 0.0
        %4324 = vmatprep.subr.mxu0 0.0
        %4325 = vmatpush1.msra.mxu0 0.0
        %4326 = vmatprep.subr.mxu0 0.0
        %4327 = vmatpush1.msra.mxu0 0.0
        %4328 = vmatprep.subr.mxu0 0.0
        %4329 = vmatpush1.msra.mxu0 0.0
        %4330 = vmatprep.subr.mxu0 0.0
        %4331 = vmatpush1.msra.mxu0 0.0
        %4332 = vmatprep.subr.mxu0 0.0
        %4333 = vmatpush1.msra.mxu0 0.0
        %4334 = vmatprep.subr.mxu0 0.0
        %4335 = vmatpush1.msra.mxu0 0.0
        %4336 = vmatprep.subr.mxu0 0.0
        %4337 = vmatpush1.msra.mxu0 0.0
        %4338 = vmatprep.subr.mxu0 0.0
        %4339 = vmatpush1.msra.mxu0 0.0
        %4340 = vmatprep.mubr.f32.mxu0 0.0
        %4341 = vmatmul.mubr.f32.gmra.mrb[0].mxu0 %v4274
        %v4342 = vpop.f32.mrb[0].mxu0
        %v4343 = vadd.f32 0.0, %v4342
        %v4344 = vpop.f32.mrb[0].mxu0
        %4345 = vdwg.mxu0
        %4346 = vmatprep.subr.mxu0 0.0
        %4347 = vmatpush1.msra.mxu0 %v568
        %4348 = vmatprep.subr.mxu0 0.0
        %4349 = vmatpush1.msra.mxu0 %v573
        %4350 = vmatprep.subr.mxu0 0.0
        %4351 = vmatpush1.msra.mxu0 0.0
        %4352 = vmatprep.subr.mxu0 0.0
        %4353 = vmatpush1.msra.mxu0 0.0
        %4354 = vmatprep.subr.mxu0 0.0
        %4355 = vmatpush1.msra.mxu0 0.0
        %4356 = vmatprep.subr.mxu0 0.0
        %4357 = vmatpush1.msra.mxu0 0.0
        %4358 = vmatprep.subr.mxu0 0.0
        %4359 = vmatpush1.msra.mxu0 0.0
        %4360 = vmatprep.subr.mxu0 0.0
        %4361 = vmatpush1.msra.mxu0 0.0
        %4362 = vmatprep.subr.mxu0 0.0
        %4363 = vmatpush1.msra.mxu0 0.0
        %4364 = vmatprep.subr.mxu0 0.0
        %4365 = vmatpush1.msra.mxu0 0.0
        %4366 = vmatprep.subr.mxu0 0.0
        %4367 = vmatpush1.msra.mxu0 0.0
        %4368 = vmatprep.subr.mxu0 0.0
        %4369 = vmatpush1.msra.mxu0 0.0
        %4370 = vmatprep.subr.mxu0 0.0
        %4371 = vmatpush1.msra.mxu0 0.0
        %4372 = vmatprep.subr.mxu0 0.0
        %4373 = vmatpush1.msra.mxu0 0.0
        %4374 = vmatprep.subr.mxu0 0.0
        %4375 = vmatpush1.msra.mxu0 0.0
        %4376 = vmatprep.subr.mxu0 0.0
        %4377 = vmatpush1.msra.mxu0 0.0
        %4378 = vmatprep.subr.mxu0 0.0
        %4379 = vmatpush1.msra.mxu0 0.0
        %4380 = vmatprep.subr.mxu0 0.0
        %4381 = vmatpush1.msra.mxu0 0.0
        %4382 = vmatprep.subr.mxu0 0.0
        %4383 = vmatpush1.msra.mxu0 0.0
        %4384 = vmatprep.subr.mxu0 0.0
        %4385 = vmatpush1.msra.mxu0 0.0
        %4386 = vmatprep.subr.mxu0 0.0
        %4387 = vmatpush1.msra.mxu0 0.0
        %4388 = vmatprep.subr.mxu0 0.0
        %4389 = vmatpush1.msra.mxu0 0.0
        %4390 = vmatprep.subr.mxu0 0.0
        %4391 = vmatpush1.msra.mxu0 0.0
        %4392 = vmatprep.subr.mxu0 0.0
        %4393 = vmatpush1.msra.mxu0 0.0
        %4394 = vmatprep.subr.mxu0 0.0
        %4395 = vmatpush1.msra.mxu0 0.0
        %4396 = vmatprep.subr.mxu0 0.0
        %4397 = vmatpush1.msra.mxu0 0.0
        %4398 = vmatprep.subr.mxu0 0.0
        %4399 = vmatpush1.msra.mxu0 0.0
        %4400 = vmatprep.subr.mxu0 0.0
        %4401 = vmatpush1.msra.mxu0 0.0
        %4402 = vmatprep.subr.mxu0 0.0
        %4403 = vmatpush1.msra.mxu0 0.0
        %4404 = vmatprep.subr.mxu0 0.0
        %4405 = vmatpush1.msra.mxu0 0.0
        %4406 = vmatprep.subr.mxu0 0.0
        %4407 = vmatpush1.msra.mxu0 0.0
        %4408 = vmatprep.subr.mxu0 0.0
        %4409 = vmatpush1.msra.mxu0 0.0
        %4410 = vmatprep.mubr.f32.mxu0 0.0
        %4411 = vmatmul.mubr.f32.gmra.mrb[0].mxu0 %v4274
        %v4412 = vpop.f32.mrb[0].mxu0
        %v4413 = vadd.f32 0.0, %v4412
        %v4414 = vpop.f32.mrb[0].mxu0
        %4415 = vdwg.mxu0
        %4416 = vmatprep.subr.mxu0 0.0
        %4417 = vmatpush1.msra.mxu0 %v578
        %4418 = vmatprep.subr.mxu0 0.0
        %4419 = vmatpush1.msra.mxu0 %v583
        %4420 = vmatprep.subr.mxu0 0.0
        %4421 = vmatpush1.msra.mxu0 0.0
        %4422 = vmatprep.subr.mxu0 0.0
        %4423 = vmatpush1.msra.mxu0 0.0
        %4424 = vmatprep.subr.mxu0 0.0
        %4425 = vmatpush1.msra.mxu0 0.0
        %4426 = vmatprep.subr.mxu0 0.0
        %4427 = vmatpush1.msra.mxu0 0.0
        %4428 = vmatprep.subr.mxu0 0.0
        %4429 = vmatpush1.msra.mxu0 0.0
        %4430 = vmatprep.subr.mxu0 0.0
        %4431 = vmatpush1.msra.mxu0 0.0
        %4432 = vmatprep.subr.mxu0 0.0
        %4433 = vmatpush1.msra.mxu0 0.0
        %4434 = vmatprep.subr.mxu0 0.0
        %4435 = vmatpush1.msra.mxu0 0.0
        %4436 = vmatprep.subr.mxu0 0.0
        %4437 = vmatpush1.msra.mxu0 0.0
        %4438 = vmatprep.subr.mxu0 0.0
        %4439 = vmatpush1.msra.mxu0 0.0
        %4440 = vmatprep.subr.mxu0 0.0
        %4441 = vmatpush1.msra.mxu0 0.0
        %4442 = vmatprep.subr.mxu0 0.0
        %4443 = vmatpush1.msra.mxu0 0.0
        %4444 = vmatprep.subr.mxu0 0.0
        %4445 = vmatpush1.msra.mxu0 0.0
        %4446 = vmatprep.subr.mxu0 0.0
        %4447 = vmatpush1.msra.mxu0 0.0
        %4448 = vmatprep.subr.mxu0 0.0
        %4449 = vmatpush1.msra.mxu0 0.0
        %4450 = vmatprep.subr.mxu0 0.0
        %4451 = vmatpush1.msra.mxu0 0.0
        %4452 = vmatprep.subr.mxu0 0.0
        %4453 = vmatpush1.msra.mxu0 0.0
        %4454 = vmatprep.subr.mxu0 0.0
        %4455 = vmatpush1.msra.mxu0 0.0
        %4456 = vmatprep.subr.mxu0 0.0
        %4457 = vmatpush1.msra.mxu0 0.0
        %4458 = vmatprep.subr.mxu0 0.0
        %4459 = vmatpush1.msra.mxu0 0.0
        %4460 = vmatprep.subr.mxu0 0.0
        %4461 = vmatpush1.msra.mxu0 0.0
        %4462 = vmatprep.subr.mxu0 0.0
        %4463 = vmatpush1.msra.mxu0 0.0
        %4464 = vmatprep.subr.mxu0 0.0
        %4465 = vmatpush1.msra.mxu0 0.0
        %4466 = vmatprep.subr.mxu0 0.0
        %4467 = vmatpush1.msra.mxu0 0.0
        %4468 = vmatprep.subr.mxu0 0.0
        %4469 = vmatpush1.msra.mxu0 0.0
        %4470 = vmatprep.subr.mxu0 0.0
        %4471 = vmatpush1.msra.mxu0 0.0
        %4472 = vmatprep.subr.mxu0 0.0
        %4473 = vmatpush1.msra.mxu0 0.0
        %4474 = vmatprep.subr.mxu0 0.0
        %4475 = vmatpush1.msra.mxu0 0.0
        %4476 = vmatprep.subr.mxu0 0.0
        %4477 = vmatpush1.msra.mxu0 0.0
        %4478 = vmatprep.subr.mxu0 0.0
        %4479 = vmatpush1.msra.mxu0 0.0
        %4480 = vmatprep.mubr.f32.mxu0 0.0
        %4481 = vmatmul.mubr.f32.gmra.mrb[0].mxu0 %v4274
        %v4482 = vpop.f32.mrb[0].mxu0
        %v4483 = vadd.f32 0.0, %v4482
        %v4484 = vpop.f32.mrb[0].mxu0
        %4485 = vdwg.mxu0
        %4486 = vmatprep.subr.mxu0 0.0
        %4487 = vmatpush1.msra.mxu0 %v588
        %4488 = vmatprep.subr.mxu0 0.0
        %4489 = vmatpush1.msra.mxu0 %v593
        %4490 = vmatprep.subr.mxu0 0.0
        %4491 = vmatpush1.msra.mxu0 0.0
        %4492 = vmatprep.subr.mxu0 0.0
        %4493 = vmatpush1.msra.mxu0 0.0
        %4494 = vmatprep.subr.mxu0 0.0
        %4495 = vmatpush1.msra.mxu0 0.0
        %4496 = vmatprep.subr.mxu0 0.0
        %4497 = vmatpush1.msra.mxu0 0.0
        %4498 = vmatprep.subr.mxu0 0.0
        %4499 = vmatpush1.msra.mxu0 0.0
        %4500 = vmatprep.subr.mxu0 0.0
        %4501 = vmatpush1.msra.mxu0 0.0
        %4502 = vmatprep.subr.mxu0 0.0
        %4503 = vmatpush1.msra.mxu0 0.0
        %4504 = vmatprep.subr.mxu0 0.0
        %4505 = vmatpush1.msra.mxu0 0.0
        %4506 = vmatprep.subr.mxu0 0.0
        %4507 = vmatpush1.msra.mxu0 0.0
        %4508 = vmatprep.subr.mxu0 0.0
        %4509 = vmatpush1.msra.mxu0 0.0
        %4510 = vmatprep.subr.mxu0 0.0
        %4511 = vmatpush1.msra.mxu0 0.0
        %4512 = vmatprep.subr.mxu0 0.0
        %4513 = vmatpush1.msra.mxu0 0.0
        %4514 = vmatprep.subr.mxu0 0.0
        %4515 = vmatpush1.msra.mxu0 0.0
        %4516 = vmatprep.subr.mxu0 0.0
        %4517 = vmatpush1.msra.mxu0 0.0
        %4518 = vmatprep.subr.mxu0 0.0
        %4519 = vmatpush1.msra.mxu0 0.0
        %4520 = vmatprep.subr.mxu0 0.0
        %4521 = vmatpush1.msra.mxu0 0.0
        %4522 = vmatprep.subr.mxu0 0.0
        %4523 = vmatpush1.msra.mxu0 0.0
        %4524 = vmatprep.subr.mxu0 0.0
        %4525 = vmatpush1.msra.mxu0 0.0
        %4526 = vmatprep.subr.mxu0 0.0
        %4527 = vmatpush1.msra.mxu0 0.0
        %4528 = vmatprep.subr.mxu0 0.0
        %4529 = vmatpush1.msra.mxu0 0.0
        %4530 = vmatprep.subr.mxu0 0.0
        %4531 = vmatpush1.msra.mxu0 0.0
        %4532 = vmatprep.subr.mxu0 0.0
        %4533 = vmatpush1.msra.mxu0 0.0
        %4534 = vmatprep.subr.mxu0 0.0
        %4535 = vmatpush1.msra.mxu0 0.0
        %4536 = vmatprep.subr.mxu0 0.0
        %4537 = vmatpush1.msra.mxu0 0.0
        %4538 = vmatprep.subr.mxu0 0.0
        %4539 = vmatpush1.msra.mxu0 0.0
        %4540 = vmatprep.subr.mxu0 0.0
        %4541 = vmatpush1.msra.mxu0 0.0
        %4542 = vmatprep.subr.mxu0 0.0
        %4543 = vmatpush1.msra.mxu0 0.0
        %4544 = vmatprep.subr.mxu0 0.0
        %4545 = vmatpush1.msra.mxu0 0.0
        %4546 = vmatprep.subr.mxu0 0.0
        %4547 = vmatpush1.msra.mxu0 0.0
        %4548 = vmatprep.subr.mxu0 0.0
        %4549 = vmatpush1.msra.mxu0 0.0
        %4550 = vmatprep.mubr.f32.mxu0 0.0
        %4551 = vmatmul.mubr.f32.gmra.mrb[0].mxu0 %v4274
        %v4552 = vpop.f32.mrb[0].mxu0
        %v4553 = vadd.f32 0.0, %v4552
        %v4554 = vpop.f32.mrb[0].mxu0
        %4555 = vdwg.mxu0
        %4556 = vmatprep.subr.mxu0 0.0
        %4557 = vmatpush1.msra.mxu0 %v598
        %4558 = vmatprep.subr.mxu0 0.0
        %4559 = vmatpush1.msra.mxu0 %v603
        %4560 = vmatprep.subr.mxu0 0.0
        %4561 = vmatpush1.msra.mxu0 0.0
        %4562 = vmatprep.subr.mxu0 0.0
        %4563 = vmatpush1.msra.mxu0 0.0
        %4564 = vmatprep.subr.mxu0 0.0
        %4565 = vmatpush1.msra.mxu0 0.0
        %4566 = vmatprep.subr.mxu0 0.0
        %4567 = vmatpush1.msra.mxu0 0.0
        %4568 = vmatprep.subr.mxu0 0.0
        %4569 = vmatpush1.msra.mxu0 0.0
        %4570 = vmatprep.subr.mxu0 0.0
        %4571 = vmatpush1.msra.mxu0 0.0
        %4572 = vmatprep.subr.mxu0 0.0
        %4573 = vmatpush1.msra.mxu0 0.0
        %4574 = vmatprep.subr.mxu0 0.0
        %4575 = vmatpush1.msra.mxu0 0.0
        %4576 = vmatprep.subr.mxu0 0.0
        %4577 = vmatpush1.msra.mxu0 0.0
        %4578 = vmatprep.subr.mxu0 0.0
        %4579 = vmatpush1.msra.mxu0 0.0
        %4580 = vmatprep.subr.mxu0 0.0
        %4581 = vmatpush1.msra.mxu0 0.0
        %4582 = vmatprep.subr.mxu0 0.0
        %4583 = vmatpush1.msra.mxu0 0.0
        %4584 = vmatprep.subr.mxu0 0.0
        %4585 = vmatpush1.msra.mxu0 0.0
        %4586 = vmatprep.subr.mxu0 0.0
        %4587 = vmatpush1.msra.mxu0 0.0
        %4588 = vmatprep.subr.mxu0 0.0
        %4589 = vmatpush1.msra.mxu0 0.0
        %4590 = vmatprep.subr.mxu0 0.0
        %4591 = vmatpush1.msra.mxu0 0.0
        %4592 = vmatprep.subr.mxu0 0.0
        %4593 = vmatpush1.msra.mxu0 0.0
        %4594 = vmatprep.subr.mxu0 0.0
        %4595 = vmatpush1.msra.mxu0 0.0
        %4596 = vmatprep.subr.mxu0 0.0
        %4597 = vmatpush1.msra.mxu0 0.0
        %4598 = vmatprep.subr.mxu0 0.0
        %4599 = vmatpush1.msra.mxu0 0.0
        %4600 = vmatprep.subr.mxu0 0.0
        %4601 = vmatpush1.msra.mxu0 0.0
        %4602 = vmatprep.subr.mxu0 0.0
        %4603 = vmatpush1.msra.mxu0 0.0
        %4604 = vmatprep.subr.mxu0 0.0
        %4605 = vmatpush1.msra.mxu0 0.0
        %4606 = vmatprep.subr.mxu0 0.0
        %4607 = vmatpush1.msra.mxu0 0.0
        %4608 = vmatprep.subr.mxu0 0.0
        %4609 = vmatpush1.msra.mxu0 0.0
        %4610 = vmatprep.subr.mxu0 0.0
        %4611 = vmatpush1.msra.mxu0 0.0
        %4612 = vmatprep.subr.mxu0 0.0
        %4613 = vmatpush1.msra.mxu0 0.0
        %4614 = vmatprep.subr.mxu0 0.0
        %4615 = vmatpush1.msra.mxu0 0.0
        %4616 = vmatprep.subr.mxu0 0.0
        %4617 = vmatpush1.msra.mxu0 0.0
        %4618 = vmatprep.subr.mxu0 0.0
        %4619 = vmatpush1.msra.mxu0 0.0
        %4620 = vmatprep.mubr.f32.mxu0 0.0
        %4621 = vmatmul.mubr.f32.gmra.mrb[0].mxu0 %v4274
        %v4622 = vpop.f32.mrb[0].mxu0
        %v4623 = vadd.f32 0.0, %v4622
        %v4624 = vpop.f32.mrb[0].mxu0
        %4625 = vdwg.mxu0
        %4626 = vmatprep.subr.mxu0 0.0
        %4627 = vmatpush1.msra.mxu0 %v608
        %4628 = vmatprep.subr.mxu0 0.0
        %4629 = vmatpush1.msra.mxu0 %v613
        %4630 = vmatprep.subr.mxu0 0.0
        %4631 = vmatpush1.msra.mxu0 0.0
        %4632 = vmatprep.subr.mxu0 0.0
        %4633 = vmatpush1.msra.mxu0 0.0
        %4634 = vmatprep.subr.mxu0 0.0
        %4635 = vmatpush1.msra.mxu0 0.0
        %4636 = vmatprep.subr.mxu0 0.0
        %4637 = vmatpush1.msra.mxu0 0.0
        %4638 = vmatprep.subr.mxu0 0.0
        %4639 = vmatpush1.msra.mxu0 0.0
        %4640 = vmatprep.subr.mxu0 0.0
        %4641 = vmatpush1.msra.mxu0 0.0
        %4642 = vmatprep.subr.mxu0 0.0
        %4643 = vmatpush1.msra.mxu0 0.0
        %4644 = vmatprep.subr.mxu0 0.0
        %4645 = vmatpush1.msra.mxu0 0.0
        %4646 = vmatprep.subr.mxu0 0.0
        %4647 = vmatpush1.msra.mxu0 0.0
        %4648 = vmatprep.subr.mxu0 0.0
        %4649 = vmatpush1.msra.mxu0 0.0
        %4650 = vmatprep.subr.mxu0 0.0
        %4651 = vmatpush1.msra.mxu0 0.0
        %4652 = vmatprep.subr.mxu0 0.0
        %4653 = vmatpush1.msra.mxu0 0.0
        %4654 = vmatprep.subr.mxu0 0.0
        %4655 = vmatpush1.msra.mxu0 0.0
        %4656 = vmatprep.subr.mxu0 0.0
        %4657 = vmatpush1.msra.mxu0 0.0
        %4658 = vmatprep.subr.mxu0 0.0
        %4659 = vmatpush1.msra.mxu0 0.0
        %4660 = vmatprep.subr.mxu0 0.0
        %4661 = vmatpush1.msra.mxu0 0.0
        %4662 = vmatprep.subr.mxu0 0.0
        %4663 = vmatpush1.msra.mxu0 0.0
        %4664 = vmatprep.subr.mxu0 0.0
        %4665 = vmatpush1.msra.mxu0 0.0
        %4666 = vmatprep.subr.mxu0 0.0
        %4667 = vmatpush1.msra.mxu0 0.0
        %4668 = vmatprep.subr.mxu0 0.0
        %4669 = vmatpush1.msra.mxu0 0.0
        %4670 = vmatprep.subr.mxu0 0.0
        %4671 = vmatpush1.msra.mxu0 0.0
        %4672 = vmatprep.subr.mxu0 0.0
        %4673 = vmatpush1.msra.mxu0 0.0
        %4674 = vmatprep.subr.mxu0 0.0
        %4675 = vmatpush1.msra.mxu0 0.0
        %4676 = vmatprep.subr.mxu0 0.0
        %4677 = vmatpush1.msra.mxu0 0.0
        %4678 = vmatprep.subr.mxu0 0.0
        %4679 = vmatpush1.msra.mxu0 0.0
        %4680 = vmatprep.subr.mxu0 0.0
        %4681 = vmatpush1.msra.mxu0 0.0
        %4682 = vmatprep.subr.mxu0 0.0
        %4683 = vmatpush1.msra.mxu0 0.0
        %4684 = vmatprep.subr.mxu0 0.0
        %4685 = vmatpush1.msra.mxu0 0.0
        %4686 = vmatprep.subr.mxu0 0.0
        %4687 = vmatpush1.msra.mxu0 0.0
        %4688 = vmatprep.subr.mxu0 0.0
        %4689 = vmatpush1.msra.mxu0 0.0
        %4690 = vmatprep.mubr.f32.mxu0 0.0
        %4691 = vmatmul.mubr.f32.gmra.mrb[0].mxu0 %v4274
        %v4692 = vpop.f32.mrb[0].mxu0
        %v4693 = vadd.f32 0.0, %v4692
        %v4694 = vpop.f32.mrb[0].mxu0
        %4695 = vdwg.mxu0
        %4696 = vmatprep.subr.mxu0 0.0
        %4697 = vmatpush1.msra.mxu0 %v618
        %4698 = vmatprep.subr.mxu0 0.0
        %4699 = vmatpush1.msra.mxu0 %v623
        %4700 = vmatprep.subr.mxu0 0.0
        %4701 = vmatpush1.msra.mxu0 0.0
        %4702 = vmatprep.subr.mxu0 0.0
        %4703 = vmatpush1.msra.mxu0 0.0
        %4704 = vmatprep.subr.mxu0 0.0
        %4705 = vmatpush1.msra.mxu0 0.0
        %4706 = vmatprep.subr.mxu0 0.0
        %4707 = vmatpush1.msra.mxu0 0.0
        %4708 = vmatprep.subr.mxu0 0.0
        %4709 = vmatpush1.msra.mxu0 0.0
        %4710 = vmatprep.subr.mxu0 0.0
        %4711 = vmatpush1.msra.mxu0 0.0
        %4712 = vmatprep.subr.mxu0 0.0
        %4713 = vmatpush1.msra.mxu0 0.0
        %4714 = vmatprep.subr.mxu0 0.0
        %4715 = vmatpush1.msra.mxu0 0.0
        %4716 = vmatprep.subr.mxu0 0.0
        %4717 = vmatpush1.msra.mxu0 0.0
        %4718 = vmatprep.subr.mxu0 0.0
        %4719 = vmatpush1.msra.mxu0 0.0
        %4720 = vmatprep.subr.mxu0 0.0
        %4721 = vmatpush1.msra.mxu0 0.0
        %4722 = vmatprep.subr.mxu0 0.0
        %4723 = vmatpush1.msra.mxu0 0.0
        %4724 = vmatprep.subr.mxu0 0.0
        %4725 = vmatpush1.msra.mxu0 0.0
        %4726 = vmatprep.subr.mxu0 0.0
        %4727 = vmatpush1.msra.mxu0 0.0
        %4728 = vmatprep.subr.mxu0 0.0
        %4729 = vmatpush1.msra.mxu0 0.0
        %4730 = vmatprep.subr.mxu0 0.0
        %4731 = vmatpush1.msra.mxu0 0.0
        %4732 = vmatprep.subr.mxu0 0.0
        %4733 = vmatpush1.msra.mxu0 0.0
        %4734 = vmatprep.subr.mxu0 0.0
        %4735 = vmatpush1.msra.mxu0 0.0
        %4736 = vmatprep.subr.mxu0 0.0
        %4737 = vmatpush1.msra.mxu0 0.0
        %4738 = vmatprep.subr.mxu0 0.0
        %4739 = vmatpush1.msra.mxu0 0.0
        %4740 = vmatprep.subr.mxu0 0.0
        %4741 = vmatpush1.msra.mxu0 0.0
        %4742 = vmatprep.subr.mxu0 0.0
        %4743 = vmatpush1.msra.mxu0 0.0
        %4744 = vmatprep.subr.mxu0 0.0
        %4745 = vmatpush1.msra.mxu0 0.0
        %4746 = vmatprep.subr.mxu0 0.0
        %4747 = vmatpush1.msra.mxu0 0.0
        %4748 = vmatprep.subr.mxu0 0.0
        %4749 = vmatpush1.msra.mxu0 0.0
        %4750 = vmatprep.subr.mxu0 0.0
        %4751 = vmatpush1.msra.mxu0 0.0
        %4752 = vmatprep.subr.mxu0 0.0
        %4753 = vmatpush1.msra.mxu0 0.0
        %4754 = vmatprep.subr.mxu0 0.0
        %4755 = vmatpush1.msra.mxu0 0.0
        %4756 = vmatprep.subr.mxu0 0.0
        %4757 = vmatpush1.msra.mxu0 0.0
        %4758 = vmatprep.subr.mxu0 0.0
        %4759 = vmatpush1.msra.mxu0 0.0
        %4760 = vmatprep.mubr.f32.mxu0 0.0
        %4761 = vmatmul.mubr.f32.gmra.mrb[0].mxu0 %v4274
        %v4762 = vpop.f32.mrb[0].mxu0
        %v4763 = vadd.f32 0.0, %v4762
        %v4764 = vpop.f32.mrb[0].mxu0
        %4765 = vdwg.mxu0
        %4766 = vmatprep.subr.mxu0 0.0
        %4767 = vmatpush1.msra.mxu0 %v628
        %4768 = vmatprep.subr.mxu0 0.0
        %4769 = vmatpush1.msra.mxu0 %v633
        %4770 = vmatprep.subr.mxu0 0.0
        %4771 = vmatpush1.msra.mxu0 0.0
        %4772 = vmatprep.subr.mxu0 0.0
        %4773 = vmatpush1.msra.mxu0 0.0
        %4774 = vmatprep.subr.mxu0 0.0
        %4775 = vmatpush1.msra.mxu0 0.0
        %4776 = vmatprep.subr.mxu0 0.0
        %4777 = vmatpush1.msra.mxu0 0.0
        %4778 = vmatprep.subr.mxu0 0.0
        %4779 = vmatpush1.msra.mxu0 0.0
        %4780 = vmatprep.subr.mxu0 0.0
        %4781 = vmatpush1.msra.mxu0 0.0
        %4782 = vmatprep.subr.mxu0 0.0
        %4783 = vmatpush1.msra.mxu0 0.0
        %4784 = vmatprep.subr.mxu0 0.0
        %4785 = vmatpush1.msra.mxu0 0.0
        %4786 = vmatprep.subr.mxu0 0.0
        %4787 = vmatpush1.msra.mxu0 0.0
        %4788 = vmatprep.subr.mxu0 0.0
        %4789 = vmatpush1.msra.mxu0 0.0
        %4790 = vmatprep.subr.mxu0 0.0
        %4791 = vmatpush1.msra.mxu0 0.0
        %4792 = vmatprep.subr.mxu0 0.0
        %4793 = vmatpush1.msra.mxu0 0.0
        %4794 = vmatprep.subr.mxu0 0.0
        %4795 = vmatpush1.msra.mxu0 0.0
        %4796 = vmatprep.subr.mxu0 0.0
        %4797 = vmatpush1.msra.mxu0 0.0
        %4798 = vmatprep.subr.mxu0 0.0
        %4799 = vmatpush1.msra.mxu0 0.0
        %4800 = vmatprep.subr.mxu0 0.0
        %4801 = vmatpush1.msra.mxu0 0.0
        %4802 = vmatprep.subr.mxu0 0.0
        %4803 = vmatpush1.msra.mxu0 0.0
        %4804 = vmatprep.subr.mxu0 0.0
        %4805 = vmatpush1.msra.mxu0 0.0
        %4806 = vmatprep.subr.mxu0 0.0
        %4807 = vmatpush1.msra.mxu0 0.0
        %4808 = vmatprep.subr.mxu0 0.0
        %4809 = vmatpush1.msra.mxu0 0.0
        %4810 = vmatprep.subr.mxu0 0.0
        %4811 = vmatpush1.msra.mxu0 0.0
        %4812 = vmatprep.subr.mxu0 0.0
        %4813 = vmatpush1.msra.mxu0 0.0
        %4814 = vmatprep.subr.mxu0 0.0
        %4815 = vmatpush1.msra.mxu0 0.0
        %4816 = vmatprep.subr.mxu0 0.0
        %4817 = vmatpush1.msra.mxu0 0.0
        %4818 = vmatprep.subr.mxu0 0.0
        %4819 = vmatpush1.msra.mxu0 0.0
        %4820 = vmatprep.subr.mxu0 0.0
        %4821 = vmatpush1.msra.mxu0 0.0
        %4822 = vmatprep.subr.mxu0 0.0
        %4823 = vmatpush1.msra.mxu0 0.0
        %4824 = vmatprep.subr.mxu0 0.0
        %4825 = vmatpush1.msra.mxu0 0.0
        %4826 = vmatprep.subr.mxu0 0.0
        %4827 = vmatpush1.msra.mxu0 0.0
        %4828 = vmatprep.subr.mxu0 0.0
        %4829 = vmatpush1.msra.mxu0 0.0
        %4830 = vmatprep.mubr.f32.mxu0 0.0
        %4831 = vmatmul.mubr.f32.gmra.mrb[0].mxu0 %v4274
        %v4832 = vpop.f32.mrb[0].mxu0
        %v4833 = vadd.f32 0.0, %v4832
        %v4834 = vpop.f32.mrb[0].mxu0
        %4835 = vdwg.mxu0
        %4836 = vmatprep.subr.mxu0 0.0
        %4837 = vmatpush1.msra.mxu0 %v638
        %4838 = vmatprep.subr.mxu0 0.0
        %4839 = vmatpush1.msra.mxu0 %v643
        %4840 = vmatprep.subr.mxu0 0.0
        %4841 = vmatpush1.msra.mxu0 0.0
        %4842 = vmatprep.subr.mxu0 0.0
        %4843 = vmatpush1.msra.mxu0 0.0
        %4844 = vmatprep.subr.mxu0 0.0
        %4845 = vmatpush1.msra.mxu0 0.0
        %4846 = vmatprep.subr.mxu0 0.0
        %4847 = vmatpush1.msra.mxu0 0.0
        %4848 = vmatprep.subr.mxu0 0.0
        %4849 = vmatpush1.msra.mxu0 0.0
        %4850 = vmatprep.subr.mxu0 0.0
        %4851 = vmatpush1.msra.mxu0 0.0
        %4852 = vmatprep.subr.mxu0 0.0
        %4853 = vmatpush1.msra.mxu0 0.0
        %4854 = vmatprep.subr.mxu0 0.0
        %4855 = vmatpush1.msra.mxu0 0.0
        %4856 = vmatprep.subr.mxu0 0.0
        %4857 = vmatpush1.msra.mxu0 0.0
        %4858 = vmatprep.subr.mxu0 0.0
        %4859 = vmatpush1.msra.mxu0 0.0
        %4860 = vmatprep.subr.mxu0 0.0
        %4861 = vmatpush1.msra.mxu0 0.0
        %4862 = vmatprep.subr.mxu0 0.0
        %4863 = vmatpush1.msra.mxu0 0.0
        %4864 = vmatprep.subr.mxu0 0.0
        %4865 = vmatpush1.msra.mxu0 0.0
        %4866 = vmatprep.subr.mxu0 0.0
        %4867 = vmatpush1.msra.mxu0 0.0
        %4868 = vmatprep.subr.mxu0 0.0
        %4869 = vmatpush1.msra.mxu0 0.0
        %4870 = vmatprep.subr.mxu0 0.0
        %4871 = vmatpush1.msra.mxu0 0.0
        %4872 = vmatprep.subr.mxu0 0.0
        %4873 = vmatpush1.msra.mxu0 0.0
        %4874 = vmatprep.subr.mxu0 0.0
        %4875 = vmatpush1.msra.mxu0 0.0
        %4876 = vmatprep.subr.mxu0 0.0
        %4877 = vmatpush1.msra.mxu0 0.0
        %4878 = vmatprep.subr.mxu0 0.0
        %4879 = vmatpush1.msra.mxu0 0.0
        %4880 = vmatprep.subr.mxu0 0.0
        %4881 = vmatpush1.msra.mxu0 0.0
        %4882 = vmatprep.subr.mxu0 0.0
        %4883 = vmatpush1.msra.mxu0 0.0
        %4884 = vmatprep.subr.mxu0 0.0
        %4885 = vmatpush1.msra.mxu0 0.0
        %4886 = vmatprep.subr.mxu0 0.0
        %4887 = vmatpush1.msra.mxu0 0.0
        %4888 = vmatprep.subr.mxu0 0.0
        %4889 = vmatpush1.msra.mxu0 0.0
        %4890 = vmatprep.subr.mxu0 0.0
        %4891 = vmatpush1.msra.mxu0 0.0
        %4892 = vmatprep.subr.mxu0 0.0
        %4893 = vmatpush1.msra.mxu0 0.0
        %4894 = vmatprep.subr.mxu0 0.0
        %4895 = vmatpush1.msra.mxu0 0.0
        %4896 = vmatprep.subr.mxu0 0.0
        %4897 = vmatpush1.msra.mxu0 0.0
        %4898 = vmatprep.subr.mxu0 0.0
        %4899 = vmatpush1.msra.mxu0 0.0
        %4900 = vmatprep.mubr.f32.mxu0 0.0
        %4901 = vmatmul.mubr.f32.gmra.mrb[0].mxu0 %v4274
        %v4902 = vpop.f32.mrb[0].mxu0
        %v4903 = vadd.f32 0.0, %v4902
        %v4904 = vpop.f32.mrb[0].mxu0
        %4905 = vdwg.mxu0
        %4906 = vmatprep.subr.mxu0 0.0
        %4907 = vmatpush1.msra.mxu0 %v648
        %4908 = vmatprep.subr.mxu0 0.0
        %4909 = vmatpush1.msra.mxu0 %v653
        %4910 = vmatprep.subr.mxu0 0.0
        %4911 = vmatpush1.msra.mxu0 0.0
        %4912 = vmatprep.subr.mxu0 0.0
        %4913 = vmatpush1.msra.mxu0 0.0
        %4914 = vmatprep.subr.mxu0 0.0
        %4915 = vmatpush1.msra.mxu0 0.0
        %4916 = vmatprep.subr.mxu0 0.0
        %4917 = vmatpush1.msra.mxu0 0.0
        %4918 = vmatprep.subr.mxu0 0.0
        %4919 = vmatpush1.msra.mxu0 0.0
        %4920 = vmatprep.subr.mxu0 0.0
        %4921 = vmatpush1.msra.mxu0 0.0
        %4922 = vmatprep.subr.mxu0 0.0
        %4923 = vmatpush1.msra.mxu0 0.0
        %4924 = vmatprep.subr.mxu0 0.0
        %4925 = vmatpush1.msra.mxu0 0.0
        %4926 = vmatprep.subr.mxu0 0.0
        %4927 = vmatpush1.msra.mxu0 0.0
        %4928 = vmatprep.subr.mxu0 0.0
        %4929 = vmatpush1.msra.mxu0 0.0
        %4930 = vmatprep.subr.mxu0 0.0
        %4931 = vmatpush1.msra.mxu0 0.0
        %4932 = vmatprep.subr.mxu0 0.0
        %4933 = vmatpush1.msra.mxu0 0.0
        %4934 = vmatprep.subr.mxu0 0.0
        %4935 = vmatpush1.msra.mxu0 0.0
        %4936 = vmatprep.subr.mxu0 0.0
        %4937 = vmatpush1.msra.mxu0 0.0
        %4938 = vmatprep.subr.mxu0 0.0
        %4939 = vmatpush1.msra.mxu0 0.0
        %4940 = vmatprep.subr.mxu0 0.0
        %4941 = vmatpush1.msra.mxu0 0.0
        %4942 = vmatprep.subr.mxu0 0.0
        %4943 = vmatpush1.msra.mxu0 0.0
        %4944 = vmatprep.subr.mxu0 0.0
        %4945 = vmatpush1.msra.mxu0 0.0
        %4946 = vmatprep.subr.mxu0 0.0
        %4947 = vmatpush1.msra.mxu0 0.0
        %4948 = vmatprep.subr.mxu0 0.0
        %4949 = vmatpush1.msra.mxu0 0.0
        %4950 = vmatprep.subr.mxu0 0.0
        %4951 = vmatpush1.msra.mxu0 0.0
        %4952 = vmatprep.subr.mxu0 0.0
        %4953 = vmatpush1.msra.mxu0 0.0
        %4954 = vmatprep.subr.mxu0 0.0
        %4955 = vmatpush1.msra.mxu0 0.0
        %4956 = vmatprep.subr.mxu0 0.0
        %4957 = vmatpush1.msra.mxu0 0.0
        %4958 = vmatprep.subr.mxu0 0.0
        %4959 = vmatpush1.msra.mxu0 0.0
        %4960 = vmatprep.subr.mxu0 0.0
        %4961 = vmatpush1.msra.mxu0 0.0
        %4962 = vmatprep.subr.mxu0 0.0
        %4963 = vmatpush1.msra.mxu0 0.0
        %4964 = vmatprep.subr.mxu0 0.0
        %4965 = vmatpush1.msra.mxu0 0.0
        %4966 = vmatprep.subr.mxu0 0.0
        %4967 = vmatpush1.msra.mxu0 0.0
        %4968 = vmatprep.subr.mxu0 0.0
        %4969 = vmatpush1.msra.mxu0 0.0
        %4970 = vmatprep.mubr.f32.mxu0 0.0
        %4971 = vmatmul.mubr.f32.gmra.mrb[0].mxu0 %v4274
        %v4972 = vpop.f32.mrb[0].mxu0
        %v4973 = vadd.f32 0.0, %v4972
        %v4974 = vpop.f32.mrb[0].mxu0
        %4975 = vdwg.mxu0
        %4976 = vmatprep.subr.mxu0 0.0
        %4977 = vmatpush1.msra.mxu0 %v658
        %4978 = vmatprep.subr.mxu0 0.0
        %4979 = vmatpush1.msra.mxu0 %v663
        %4980 = vmatprep.subr.mxu0 0.0
        %4981 = vmatpush1.msra.mxu0 0.0
        %4982 = vmatprep.subr.mxu0 0.0
        %4983 = vmatpush1.msra.mxu0 0.0
        %4984 = vmatprep.subr.mxu0 0.0
        %4985 = vmatpush1.msra.mxu0 0.0
        %4986 = vmatprep.subr.mxu0 0.0
        %4987 = vmatpush1.msra.mxu0 0.0
        %4988 = vmatprep.subr.mxu0 0.0
        %4989 = vmatpush1.msra.mxu0 0.0
        %4990 = vmatprep.subr.mxu0 0.0
        %4991 = vmatpush1.msra.mxu0 0.0
        %4992 = vmatprep.subr.mxu0 0.0
        %4993 = vmatpush1.msra.mxu0 0.0
        %4994 = vmatprep.subr.mxu0 0.0
        %4995 = vmatpush1.msra.mxu0 0.0
        %4996 = vmatprep.subr.mxu0 0.0
        %4997 = vmatpush1.msra.mxu0 0.0
        %4998 = vmatprep.subr.mxu0 0.0
        %4999 = vmatpush1.msra.mxu0 0.0
        %5000 = vmatprep.subr.mxu0 0.0
        %5001 = vmatpush1.msra.mxu0 0.0
        %5002 = vmatprep.subr.mxu0 0.0
        %5003 = vmatpush1.msra.mxu0 0.0
        %5004 = vmatprep.subr.mxu0 0.0
        %5005 = vmatpush1.msra.mxu0 0.0
        %5006 = vmatprep.subr.mxu0 0.0
        %5007 = vmatpush1.msra.mxu0 0.0
        %5008 = vmatprep.subr.mxu0 0.0
        %5009 = vmatpush1.msra.mxu0 0.0
        %5010 = vmatprep.subr.mxu0 0.0
        %5011 = vmatpush1.msra.mxu0 0.0
        %5012 = vmatprep.subr.mxu0 0.0
        %5013 = vmatpush1.msra.mxu0 0.0
        %5014 = vmatprep.subr.mxu0 0.0
        %5015 = vmatpush1.msra.mxu0 0.0
        %5016 = vmatprep.subr.mxu0 0.0
        %5017 = vmatpush1.msra.mxu0 0.0
        %5018 = vmatprep.subr.mxu0 0.0
        %5019 = vmatpush1.msra.mxu0 0.0
        %5020 = vmatprep.subr.mxu0 0.0
        %5021 = vmatpush1.msra.mxu0 0.0
        %5022 = vmatprep.subr.mxu0 0.0
        %5023 = vmatpush1.msra.mxu0 0.0
        %5024 = vmatprep.subr.mxu0 0.0
        %5025 = vmatpush1.msra.mxu0 0.0
        %5026 = vmatprep.subr.mxu0 0.0
        %5027 = vmatpush1.msra.mxu0 0.0
        %5028 = vmatprep.subr.mxu0 0.0
        %5029 = vmatpush1.msra.mxu0 0.0
        %5030 = vmatprep.subr.mxu0 0.0
        %5031 = vmatpush1.msra.mxu0 0.0
        %5032 = vmatprep.subr.mxu0 0.0
        %5033 = vmatpush1.msra.mxu0 0.0
        %5034 = vmatprep.subr.mxu0 0.0
        %5035 = vmatpush1.msra.mxu0 0.0
        %5036 = vmatprep.subr.mxu0 0.0
        %5037 = vmatpush1.msra.mxu0 0.0
        %5038 = vmatprep.subr.mxu0 0.0
        %5039 = vmatpush1.msra.mxu0 0.0
        %5040 = vmatprep.mubr.f32.mxu0 0.0
        %5041 = vmatmul.mubr.f32.gmra.mrb[0].mxu0 %v4274
        %v5042 = vpop.f32.mrb[0].mxu0
        %v5043 = vadd.f32 0.0, %v5042
        %v5044 = vpop.f32.mrb[0].mxu0
        %5045 = vdwg.mxu0
        %5046 = vmatprep.subr.mxu0 0.0
        %5047 = vmatpush1.msra.mxu0 %v668
        %5048 = vmatprep.subr.mxu0 0.0
        %5049 = vmatpush1.msra.mxu0 %v673
        %5050 = vmatprep.subr.mxu0 0.0
        %5051 = vmatpush1.msra.mxu0 0.0
        %5052 = vmatprep.subr.mxu0 0.0
        %5053 = vmatpush1.msra.mxu0 0.0
        %5054 = vmatprep.subr.mxu0 0.0
        %5055 = vmatpush1.msra.mxu0 0.0
        %5056 = vmatprep.subr.mxu0 0.0
        %5057 = vmatpush1.msra.mxu0 0.0
        %5058 = vmatprep.subr.mxu0 0.0
        %5059 = vmatpush1.msra.mxu0 0.0
        %5060 = vmatprep.subr.mxu0 0.0
        %5061 = vmatpush1.msra.mxu0 0.0
        %5062 = vmatprep.subr.mxu0 0.0
        %5063 = vmatpush1.msra.mxu0 0.0
        %5064 = vmatprep.subr.mxu0 0.0
        %5065 = vmatpush1.msra.mxu0 0.0
        %5066 = vmatprep.subr.mxu0 0.0
        %5067 = vmatpush1.msra.mxu0 0.0
        %5068 = vmatprep.subr.mxu0 0.0
        %5069 = vmatpush1.msra.mxu0 0.0
        %5070 = vmatprep.subr.mxu0 0.0
        %5071 = vmatpush1.msra.mxu0 0.0
        %5072 = vmatprep.subr.mxu0 0.0
        %5073 = vmatpush1.msra.mxu0 0.0
        %5074 = vmatprep.subr.mxu0 0.0
        %5075 = vmatpush1.msra.mxu0 0.0
        %5076 = vmatprep.subr.mxu0 0.0
        %5077 = vmatpush1.msra.mxu0 0.0
        %5078 = vmatprep.subr.mxu0 0.0
        %5079 = vmatpush1.msra.mxu0 0.0
        %5080 = vmatprep.subr.mxu0 0.0
        %5081 = vmatpush1.msra.mxu0 0.0
        %5082 = vmatprep.subr.mxu0 0.0
        %5083 = vmatpush1.msra.mxu0 0.0
        %5084 = vmatprep.subr.mxu0 0.0
        %5085 = vmatpush1.msra.mxu0 0.0
        %5086 = vmatprep.subr.mxu0 0.0
        %5087 = vmatpush1.msra.mxu0 0.0
        %5088 = vmatprep.subr.mxu0 0.0
        %5089 = vmatpush1.msra.mxu0 0.0
        %5090 = vmatprep.subr.mxu0 0.0
        %5091 = vmatpush1.msra.mxu0 0.0
        %5092 = vmatprep.subr.mxu0 0.0
        %5093 = vmatpush1.msra.mxu0 0.0
        %5094 = vmatprep.subr.mxu0 0.0
        %5095 = vmatpush1.msra.mxu0 0.0
        %5096 = vmatprep.subr.mxu0 0.0
        %5097 = vmatpush1.msra.mxu0 0.0
        %5098 = vmatprep.subr.mxu0 0.0
        %5099 = vmatpush1.msra.mxu0 0.0
        %5100 = vmatprep.subr.mxu0 0.0
        %5101 = vmatpush1.msra.mxu0 0.0
        %5102 = vmatprep.subr.mxu0 0.0
        %5103 = vmatpush1.msra.mxu0 0.0
        %5104 = vmatprep.subr.mxu0 0.0
        %5105 = vmatpush1.msra.mxu0 0.0
        %5106 = vmatprep.subr.mxu0 0.0
        %5107 = vmatpush1.msra.mxu0 0.0
        %5108 = vmatprep.subr.mxu0 0.0
        %5109 = vmatpush1.msra.mxu0 0.0
        %5110 = vmatprep.mubr.f32.mxu0 0.0
        %5111 = vmatmul.mubr.f32.gmra.mrb[0].mxu0 %v4274
        %v5112 = vpop.f32.mrb[0].mxu0
        %v5113 = vadd.f32 0.0, %v5112
        %v5114 = vpop.f32.mrb[0].mxu0
        %5115 = vdwg.mxu0
        %5116 = vmatprep.subr.mxu0 0.0
        %5117 = vmatpush1.msra.mxu0 %v678
        %5118 = vmatprep.subr.mxu0 0.0
        %5119 = vmatpush1.msra.mxu0 %v683
        %5120 = vmatprep.subr.mxu0 0.0
        %5121 = vmatpush1.msra.mxu0 0.0
        %5122 = vmatprep.subr.mxu0 0.0
        %5123 = vmatpush1.msra.mxu0 0.0
        %5124 = vmatprep.subr.mxu0 0.0
        %5125 = vmatpush1.msra.mxu0 0.0
        %5126 = vmatprep.subr.mxu0 0.0
        %5127 = vmatpush1.msra.mxu0 0.0
        %5128 = vmatprep.subr.mxu0 0.0
        %5129 = vmatpush1.msra.mxu0 0.0
        %5130 = vmatprep.subr.mxu0 0.0
        %5131 = vmatpush1.msra.mxu0 0.0
        %5132 = vmatprep.subr.mxu0 0.0
        %5133 = vmatpush1.msra.mxu0 0.0
        %5134 = vmatprep.subr.mxu0 0.0
        %5135 = vmatpush1.msra.mxu0 0.0
        %5136 = vmatprep.subr.mxu0 0.0
        %5137 = vmatpush1.msra.mxu0 0.0
        %5138 = vmatprep.subr.mxu0 0.0
        %5139 = vmatpush1.msra.mxu0 0.0
        %5140 = vmatprep.subr.mxu0 0.0
        %5141 = vmatpush1.msra.mxu0 0.0
        %5142 = vmatprep.subr.mxu0 0.0
        %5143 = vmatpush1.msra.mxu0 0.0
        %5144 = vmatprep.subr.mxu0 0.0
        %5145 = vmatpush1.msra.mxu0 0.0
        %5146 = vmatprep.subr.mxu0 0.0
        %5147 = vmatpush1.msra.mxu0 0.0
        %5148 = vmatprep.subr.mxu0 0.0
        %5149 = vmatpush1.msra.mxu0 0.0
        %5150 = vmatprep.subr.mxu0 0.0
        %5151 = vmatpush1.msra.mxu0 0.0
        %5152 = vmatprep.subr.mxu0 0.0
        %5153 = vmatpush1.msra.mxu0 0.0
        %5154 = vmatprep.subr.mxu0 0.0
        %5155 = vmatpush1.msra.mxu0 0.0
        %5156 = vmatprep.subr.mxu0 0.0
        %5157 = vmatpush1.msra.mxu0 0.0
        %5158 = vmatprep.subr.mxu0 0.0
        %5159 = vmatpush1.msra.mxu0 0.0
        %5160 = vmatprep.subr.mxu0 0.0
        %5161 = vmatpush1.msra.mxu0 0.0
        %5162 = vmatprep.subr.mxu0 0.0
        %5163 = vmatpush1.msra.mxu0 0.0
        %5164 = vmatprep.subr.mxu0 0.0
        %5165 = vmatpush1.msra.mxu0 0.0
        %5166 = vmatprep.subr.mxu0 0.0
        %5167 = vmatpush1.msra.mxu0 0.0
        %5168 = vmatprep.subr.mxu0 0.0
        %5169 = vmatpush1.msra.mxu0 0.0
        %5170 = vmatprep.subr.mxu0 0.0
        %5171 = vmatpush1.msra.mxu0 0.0
        %5172 = vmatprep.subr.mxu0 0.0
        %5173 = vmatpush1.msra.mxu0 0.0
        %5174 = vmatprep.subr.mxu0 0.0
        %5175 = vmatpush1.msra.mxu0 0.0
        %5176 = vmatprep.subr.mxu0 0.0
        %5177 = vmatpush1.msra.mxu0 0.0
        %5178 = vmatprep.subr.mxu0 0.0
        %5179 = vmatpush1.msra.mxu0 0.0
        %5180 = vmatprep.mubr.f32.mxu0 0.0
        %5181 = vmatmul.mubr.f32.gmra.mrb[0].mxu0 %v4274
        %v5182 = vpop.f32.mrb[0].mxu0
        %v5183 = vadd.f32 0.0, %v5182
        %v5184 = vpop.f32.mrb[0].mxu0
        %5185 = vdwg.mxu0
        %5186 = vmatprep.subr.mxu0 0.0
        %5187 = vmatpush1.msra.mxu0 %v688
        %5188 = vmatprep.subr.mxu0 0.0
        %5189 = vmatpush1.msra.mxu0 %v693
        %5190 = vmatprep.subr.mxu0 0.0
        %5191 = vmatpush1.msra.mxu0 0.0
        %5192 = vmatprep.subr.mxu0 0.0
        %5193 = vmatpush1.msra.mxu0 0.0
        %5194 = vmatprep.subr.mxu0 0.0
        %5195 = vmatpush1.msra.mxu0 0.0
        %5196 = vmatprep.subr.mxu0 0.0
        %5197 = vmatpush1.msra.mxu0 0.0
        %5198 = vmatprep.subr.mxu0 0.0
        %5199 = vmatpush1.msra.mxu0 0.0
        %5200 = vmatprep.subr.mxu0 0.0
        %5201 = vmatpush1.msra.mxu0 0.0
        %5202 = vmatprep.subr.mxu0 0.0
        %5203 = vmatpush1.msra.mxu0 0.0
        %5204 = vmatprep.subr.mxu0 0.0
        %5205 = vmatpush1.msra.mxu0 0.0
        %5206 = vmatprep.subr.mxu0 0.0
        %5207 = vmatpush1.msra.mxu0 0.0
        %5208 = vmatprep.subr.mxu0 0.0
        %5209 = vmatpush1.msra.mxu0 0.0
        %5210 = vmatprep.subr.mxu0 0.0
        %5211 = vmatpush1.msra.mxu0 0.0
        %5212 = vmatprep.subr.mxu0 0.0
        %5213 = vmatpush1.msra.mxu0 0.0
        %5214 = vmatprep.subr.mxu0 0.0
        %5215 = vmatpush1.msra.mxu0 0.0
        %5216 = vmatprep.subr.mxu0 0.0
        %5217 = vmatpush1.msra.mxu0 0.0
        %5218 = vmatprep.subr.mxu0 0.0
        %5219 = vmatpush1.msra.mxu0 0.0
        %5220 = vmatprep.subr.mxu0 0.0
        %5221 = vmatpush1.msra.mxu0 0.0
        %5222 = vmatprep.subr.mxu0 0.0
        %5223 = vmatpush1.msra.mxu0 0.0
        %5224 = vmatprep.subr.mxu0 0.0
        %5225 = vmatpush1.msra.mxu0 0.0
        %5226 = vmatprep.subr.mxu0 0.0
        %5227 = vmatpush1.msra.mxu0 0.0
        %5228 = vmatprep.subr.mxu0 0.0
        %5229 = vmatpush1.msra.mxu0 0.0
        %5230 = vmatprep.subr.mxu0 0.0
        %5231 = vmatpush1.msra.mxu0 0.0
        %5232 = vmatprep.subr.mxu0 0.0
        %5233 = vmatpush1.msra.mxu0 0.0
        %5234 = vmatprep.subr.mxu0 0.0
        %5235 = vmatpush1.msra.mxu0 0.0
        %5236 = vmatprep.subr.mxu0 0.0
        %5237 = vmatpush1.msra.mxu0 0.0
        %5238 = vmatprep.subr.mxu0 0.0
        %5239 = vmatpush1.msra.mxu0 0.0
        %5240 = vmatprep.subr.mxu0 0.0
        %5241 = vmatpush1.msra.mxu0 0.0
        %5242 = vmatprep.subr.mxu0 0.0
        %5243 = vmatpush1.msra.mxu0 0.0
        %5244 = vmatprep.subr.mxu0 0.0
        %5245 = vmatpush1.msra.mxu0 0.0
        %5246 = vmatprep.subr.mxu0 0.0
        %5247 = vmatpush1.msra.mxu0 0.0
        %5248 = vmatprep.subr.mxu0 0.0
        %5249 = vmatpush1.msra.mxu0 0.0
        %5250 = vmatprep.mubr.f32.mxu0 0.0
        %5251 = vmatmul.mubr.f32.gmra.mrb[0].mxu0 %v4274
        %v5252 = vpop.f32.mrb[0].mxu0
        %v5253 = vadd.f32 0.0, %v5252
        %v5254 = vpop.f32.mrb[0].mxu0
        %5255 = vdwg.mxu0
        %5256 = vmatprep.subr.mxu0 0.0
        %5257 = vmatpush1.msra.mxu0 %v698
        %5258 = vmatprep.subr.mxu0 0.0
        %5259 = vmatpush1.msra.mxu0 %v703
        %5260 = vmatprep.subr.mxu0 0.0
        %5261 = vmatpush1.msra.mxu0 0.0
        %5262 = vmatprep.subr.mxu0 0.0
        %5263 = vmatpush1.msra.mxu0 0.0
        %5264 = vmatprep.subr.mxu0 0.0
        %5265 = vmatpush1.msra.mxu0 0.0
        %5266 = vmatprep.subr.mxu0 0.0
        %5267 = vmatpush1.msra.mxu0 0.0
        %5268 = vmatprep.subr.mxu0 0.0
        %5269 = vmatpush1.msra.mxu0 0.0
        %5270 = vmatprep.subr.mxu0 0.0
        %5271 = vmatpush1.msra.mxu0 0.0
        %5272 = vmatprep.subr.mxu0 0.0
        %5273 = vmatpush1.msra.mxu0 0.0
        %5274 = vmatprep.subr.mxu0 0.0
        %5275 = vmatpush1.msra.mxu0 0.0
        %5276 = vmatprep.subr.mxu0 0.0
        %5277 = vmatpush1.msra.mxu0 0.0
        %5278 = vmatprep.subr.mxu0 0.0
        %5279 = vmatpush1.msra.mxu0 0.0
        %5280 = vmatprep.subr.mxu0 0.0
        %5281 = vmatpush1.msra.mxu0 0.0
        %5282 = vmatprep.subr.mxu0 0.0
        %5283 = vmatpush1.msra.mxu0 0.0
        %5284 = vmatprep.subr.mxu0 0.0
        %5285 = vmatpush1.msra.mxu0 0.0
        %5286 = vmatprep.subr.mxu0 0.0
        %5287 = vmatpush1.msra.mxu0 0.0
        %5288 = vmatprep.subr.mxu0 0.0
        %5289 = vmatpush1.msra.mxu0 0.0
        %5290 = vmatprep.subr.mxu0 0.0
        %5291 = vmatpush1.msra.mxu0 0.0
        %5292 = vmatprep.subr.mxu0 0.0
        %5293 = vmatpush1.msra.mxu0 0.0
        %5294 = vmatprep.subr.mxu0 0.0
        %5295 = vmatpush1.msra.mxu0 0.0
        %5296 = vmatprep.subr.mxu0 0.0
        %5297 = vmatpush1.msra.mxu0 0.0
        %5298 = vmatprep.subr.mxu0 0.0
        %5299 = vmatpush1.msra.mxu0 0.0
        %5300 = vmatprep.subr.mxu0 0.0
        %5301 = vmatpush1.msra.mxu0 0.0
        %5302 = vmatprep.subr.mxu0 0.0
        %5303 = vmatpush1.msra.mxu0 0.0
        %5304 = vmatprep.subr.mxu0 0.0
        %5305 = vmatpush1.msra.mxu0 0.0
        %5306 = vmatprep.subr.mxu0 0.0
        %5307 = vmatpush1.msra.mxu0 0.0
        %5308 = vmatprep.subr.mxu0 0.0
        %5309 = vmatpush1.msra.mxu0 0.0
        %5310 = vmatprep.subr.mxu0 0.0
        %5311 = vmatpush1.msra.mxu0 0.0
        %5312 = vmatprep.subr.mxu0 0.0
        %5313 = vmatpush1.msra.mxu0 0.0
        %5314 = vmatprep.subr.mxu0 0.0
        %5315 = vmatpush1.msra.mxu0 0.0
        %5316 = vmatprep.subr.mxu0 0.0
        %5317 = vmatpush1.msra.mxu0 0.0
        %5318 = vmatprep.subr.mxu0 0.0
        %5319 = vmatpush1.msra.mxu0 0.0
        %5320 = vmatprep.mubr.f32.mxu0 0.0
        %5321 = vmatmul.mubr.f32.gmra.mrb[0].mxu0 %v4274
        %v5322 = vpop.f32.mrb[0].mxu0
        %v5323 = vadd.f32 0.0, %v5322
        %v5324 = vpop.f32.mrb[0].mxu0
        %5325 = vdwg.mxu0
        %5326 = vmatprep.subr.mxu0 0.0
        %5327 = vmatpush1.msra.mxu0 %v708
        %5328 = vmatprep.subr.mxu0 0.0
        %5329 = vmatpush1.msra.mxu0 %v713
        %5330 = vmatprep.subr.mxu0 0.0
        %5331 = vmatpush1.msra.mxu0 0.0
        %5332 = vmatprep.subr.mxu0 0.0
        %5333 = vmatpush1.msra.mxu0 0.0
        %5334 = vmatprep.subr.mxu0 0.0
        %5335 = vmatpush1.msra.mxu0 0.0
        %5336 = vmatprep.subr.mxu0 0.0
        %5337 = vmatpush1.msra.mxu0 0.0
        %5338 = vmatprep.subr.mxu0 0.0
        %5339 = vmatpush1.msra.mxu0 0.0
        %5340 = vmatprep.subr.mxu0 0.0
        %5341 = vmatpush1.msra.mxu0 0.0
        %5342 = vmatprep.subr.mxu0 0.0
        %5343 = vmatpush1.msra.mxu0 0.0
        %5344 = vmatprep.subr.mxu0 0.0
        %5345 = vmatpush1.msra.mxu0 0.0
        %5346 = vmatprep.subr.mxu0 0.0
        %5347 = vmatpush1.msra.mxu0 0.0
        %5348 = vmatprep.subr.mxu0 0.0
        %5349 = vmatpush1.msra.mxu0 0.0
        %5350 = vmatprep.subr.mxu0 0.0
        %5351 = vmatpush1.msra.mxu0 0.0
        %5352 = vmatprep.subr.mxu0 0.0
        %5353 = vmatpush1.msra.mxu0 0.0
        %5354 = vmatprep.subr.mxu0 0.0
        %5355 = vmatpush1.msra.mxu0 0.0
        %5356 = vmatprep.subr.mxu0 0.0
        %5357 = vmatpush1.msra.mxu0 0.0
        %5358 = vmatprep.subr.mxu0 0.0
        %5359 = vmatpush1.msra.mxu0 0.0
        %5360 = vmatprep.subr.mxu0 0.0
        %5361 = vmatpush1.msra.mxu0 0.0
        %5362 = vmatprep.subr.mxu0 0.0
        %5363 = vmatpush1.msra.mxu0 0.0
        %5364 = vmatprep.subr.mxu0 0.0
        %5365 = vmatpush1.msra.mxu0 0.0
        %5366 = vmatprep.subr.mxu0 0.0
        %5367 = vmatpush1.msra.mxu0 0.0
        %5368 = vmatprep.subr.mxu0 0.0
        %5369 = vmatpush1.msra.mxu0 0.0
        %5370 = vmatprep.subr.mxu0 0.0
        %5371 = vmatpush1.msra.mxu0 0.0
        %5372 = vmatprep.subr.mxu0 0.0
        %5373 = vmatpush1.msra.mxu0 0.0
        %5374 = vmatprep.subr.mxu0 0.0
        %5375 = vmatpush1.msra.mxu0 0.0
        %5376 = vmatprep.subr.mxu0 0.0
        %5377 = vmatpush1.msra.mxu0 0.0
        %5378 = vmatprep.subr.mxu0 0.0
        %5379 = vmatpush1.msra.mxu0 0.0
        %5380 = vmatprep.subr.mxu0 0.0
        %5381 = vmatpush1.msra.mxu0 0.0
        %5382 = vmatprep.subr.mxu0 0.0
        %5383 = vmatpush1.msra.mxu0 0.0
        %5384 = vmatprep.subr.mxu0 0.0
        %5385 = vmatpush1.msra.mxu0 0.0
        %5386 = vmatprep.subr.mxu0 0.0
        %5387 = vmatpush1.msra.mxu0 0.0
        %5388 = vmatprep.subr.mxu0 0.0
        %5389 = vmatpush1.msra.mxu0 0.0
        %5390 = vmatprep.mubr.f32.mxu0 0.0
        %5391 = vmatmul.mubr.f32.gmra.mrb[0].mxu0 %v4274
        %v5392 = vpop.f32.mrb[0].mxu0
        %v5393 = vadd.f32 0.0, %v5392
        %v5394 = vpop.f32.mrb[0].mxu0
        %5395 = vdwg.mxu0
        %s5396 = scalar_lea.vmem %s314, 32
        %v5397 = vld [vmem:[%s5396] sm:$0xff]
        %v5398 = vld [vmem:[%s5396 + $0x8] sm:$0xff]
        %5399 = vxpose.xlu0.b32.start [1/16] %v5397, 128
        %5400 = vxpose.xlu0.b32.cont [2/16] %v5398, 128
        %5401 = vxpose.xlu0.b32.cont [3/16] 0.0, 128
        %5402 = vxpose.xlu0.b32.cont [4/16] 0.0, 128
        %5403 = vxpose.xlu0.b32.cont [5/16] 0.0, 128
        %5404 = vxpose.xlu0.b32.cont [6/16] 0.0, 128
        %5405 = vxpose.xlu0.b32.cont [7/16] 0.0, 128
        %5406 = vxpose.xlu0.b32.cont [8/16] 0.0, 128
        %5407 = vxpose.xlu0.b32.cont [9/16] 0.0, 128
        %5408 = vxpose.xlu0.b32.cont [10/16] 0.0, 128
        %5409 = vxpose.xlu0.b32.cont [11/16] 0.0, 128
        %5410 = vxpose.xlu0.b32.cont [12/16] 0.0, 128
        %5411 = vxpose.xlu0.b32.cont [13/16] 0.0, 128
        %5412 = vxpose.xlu0.b32.cont [14/16] 0.0, 128
        %5413 = vxpose.xlu0.b32.cont [15/16] 0.0, 128
        %5414 = vxpose.xlu0.b32.end [16/16] 0.0, 128
        %v5415 = vpop.trf.xlu0
        %v5416 = vpop.trf.xlu0
        %v5417 = vpop.trf.xlu0
        %v5418 = vpop.trf.xlu0
        %v5419 = vpop.trf.xlu0
        %v5420 = vpop.trf.xlu0
        %v5421 = vpop.trf.xlu0
        %v5422 = vpop.trf.xlu0
        %v5423 = vpop.trf.xlu0
        %v5424 = vpop.trf.xlu0
        %v5425 = vpop.trf.xlu0
        %v5426 = vpop.trf.xlu0
        %v5427 = vpop.trf.xlu0
        %v5428 = vpop.trf.xlu0
        %v5429 = vpop.trf.xlu0
        %v5430 = vpop.trf.xlu0
        %v5431 = vcombine.low %v4343, %v4483
        %v5432 = vcombine.high %v4343, %v4483
        %v5434 = vunpack.c.l.s4 1983009808
        %v5435 = vunpack.c.0.s8 %v5434
        %v5436 = vlaneseq
        %v5437 = vshrl.u32 %v5436, 7
        %v5438 = vsub.s32 %v5435, %v5437
        %v5439 = vrot.slane %v5431, %v5438
        %v5441 = vunpack.c.l.s4 1983009808
        %v5442 = vunpack.c.0.s8 %v5441
        %v5443 = vlaneseq
        %v5444 = vshrl.u32 %v5443, 7
        %v5445 = vsub.s32 %v5442, %v5444
        %v5446 = vrot.slane %v5432, %v5445
        %v5447 = vcombine.low %v4413, %v4553
        %v5448 = vcombine.high %v4413, %v4553
        %v5450 = vunpack.c.l.s4 1983009808
        %v5451 = vunpack.c.0.s8 %v5450
        %v5452 = vlaneseq
        %v5453 = vshrl.u32 %v5452, 7
        %v5454 = vsub.s32 %v5451, %v5453
        %v5455 = vrot.slane %v5447, %v5454
        %v5457 = vunpack.c.l.s4 1983009808
        %v5458 = vunpack.c.0.s8 %v5457
        %v5459 = vlaneseq
        %v5460 = vshrl.u32 %v5459, 7
        %v5461 = vsub.s32 %v5458, %v5460
        %v5462 = vrot.slane %v5448, %v5461
        %v5463 = vcombine.low %v4623, %v4763
        %v5464 = vcombine.high %v4623, %v4763
        %v5466 = vunpack.c.l.s4 1983009808
        %v5467 = vunpack.c.0.s8 %v5466
        %v5468 = vlaneseq
        %v5469 = vshrl.u32 %v5468, 7
        %v5470 = vsub.s32 %v5467, %v5469
        %v5471 = vrot.slane %v5463, %v5470
        %v5473 = vunpack.c.l.s4 1983009808
        %v5474 = vunpack.c.0.s8 %v5473
        %v5475 = vlaneseq
        %v5476 = vshrl.u32 %v5475, 7
        %v5477 = vsub.s32 %v5474, %v5476
        %v5478 = vrot.slane %v5464, %v5477
        %v5479 = vcombine.low %v4693, %v4833
        %v5480 = vcombine.high %v4693, %v4833
        %v5482 = vunpack.c.l.s4 1983009808
        %v5483 = vunpack.c.0.s8 %v5482
        %v5484 = vlaneseq
        %v5485 = vshrl.u32 %v5484, 7
        %v5486 = vsub.s32 %v5483, %v5485
        %v5487 = vrot.slane %v5479, %v5486
        %v5489 = vunpack.c.l.s4 1983009808
        %v5490 = vunpack.c.0.s8 %v5489
        %v5491 = vlaneseq
        %v5492 = vshrl.u32 %v5491, 7
        %v5493 = vsub.s32 %v5490, %v5492
        %v5494 = vrot.slane %v5480, %v5493
        %v5495 = vcombine.low %v5439, %v5455
        %v5496 = vcombine.high %v5439, %v5455
        %v5498 = vunpack.c.l.s4 1934713408
        %v5499 = vunpack.c.0.s8 %v5498
        %v5500 = vlaneseq
        %v5501 = vshrl.u32 %v5500, 7
        %v5502 = vsub.s32 %v5499, %v5501
        %v5503 = vrot.slane %v5495, %v5502
        %v5505 = vunpack.c.l.s4 1934713408
        %v5506 = vunpack.c.0.s8 %v5505
        %v5507 = vlaneseq
        %v5508 = vshrl.u32 %v5507, 7
        %v5509 = vsub.s32 %v5506, %v5508
        %v5510 = vrot.slane %v5496, %v5509
        %v5511 = vcombine.low %v5446, %v5462
        %v5512 = vcombine.high %v5446, %v5462
        %v5514 = vunpack.c.l.s4 1934713408
        %v5515 = vunpack.c.0.s8 %v5514
        %v5516 = vlaneseq
        %v5517 = vshrl.u32 %v5516, 7
        %v5518 = vsub.s32 %v5515, %v5517
        %v5519 = vrot.slane %v5511, %v5518
        %v5521 = vunpack.c.l.s4 1934713408
        %v5522 = vunpack.c.0.s8 %v5521
        %v5523 = vlaneseq
        %v5524 = vshrl.u32 %v5523, 7
        %v5525 = vsub.s32 %v5522, %v5524
        %v5526 = vrot.slane %v5512, %v5525
        %v5527 = vcombine.low %v5471, %v5487
        %v5528 = vcombine.high %v5471, %v5487
        %v5530 = vunpack.c.l.s4 1934713408
        %v5531 = vunpack.c.0.s8 %v5530
        %v5532 = vlaneseq
        %v5533 = vshrl.u32 %v5532, 7
        %v5534 = vsub.s32 %v5531, %v5533
        %v5535 = vrot.slane %v5527, %v5534
        %v5537 = vunpack.c.l.s4 1934713408
        %v5538 = vunpack.c.0.s8 %v5537
        %v5539 = vlaneseq
        %v5540 = vshrl.u32 %v5539, 7
        %v5541 = vsub.s32 %v5538, %v5540
        %v5542 = vrot.slane %v5528, %v5541
        %v5543 = vcombine.low %v5478, %v5494
        %v5544 = vcombine.high %v5478, %v5494
        %v5546 = vunpack.c.l.s4 1934713408
        %v5547 = vunpack.c.0.s8 %v5546
        %v5548 = vlaneseq
        %v5549 = vshrl.u32 %v5548, 7
        %v5550 = vsub.s32 %v5547, %v5549
        %v5551 = vrot.slane %v5543, %v5550
        %v5553 = vunpack.c.l.s4 1934713408
        %v5554 = vunpack.c.0.s8 %v5553
        %v5555 = vlaneseq
        %v5556 = vshrl.u32 %v5555, 7
        %v5557 = vsub.s32 %v5554, %v5556
        %v5558 = vrot.slane %v5544, %v5557
        %v5559 = vcombine.low %v5503, %v5535
        %v5560 = vcombine.high %v5503, %v5535
        %v5561 = vcombine.low %v5510, %v5542
        %v5562 = vcombine.high %v5510, %v5542
        %v5563 = vcombine.low %v5519, %v5551
        %v5564 = vcombine.high %v5519, %v5551
        %v5565 = vcombine.low %v5526, %v5558
        %v5566 = vcombine.high %v5526, %v5558
        %v5567 = vcombine.low %v4903, %v5043
        %v5568 = vcombine.high %v4903, %v5043
        %v5570 = vunpack.c.l.s4 1983009808
        %v5571 = vunpack.c.0.s8 %v5570
        %v5572 = vlaneseq
        %v5573 = vshrl.u32 %v5572, 7
        %v5574 = vsub.s32 %v5571, %v5573
        %v5575 = vrot.slane %v5567, %v5574
        %v5577 = vunpack.c.l.s4 1983009808
        %v5578 = vunpack.c.0.s8 %v5577
        %v5579 = vlaneseq
        %v5580 = vshrl.u32 %v5579, 7
        %v5581 = vsub.s32 %v5578, %v5580
        %v5582 = vrot.slane %v5568, %v5581
        %v5583 = vcombine.low %v4973, %v5113
        %v5584 = vcombine.high %v4973, %v5113
        %v5586 = vunpack.c.l.s4 1983009808
        %v5587 = vunpack.c.0.s8 %v5586
        %v5588 = vlaneseq
        %v5589 = vshrl.u32 %v5588, 7
        %v5590 = vsub.s32 %v5587, %v5589
        %v5591 = vrot.slane %v5583, %v5590
        %v5593 = vunpack.c.l.s4 1983009808
        %v5594 = vunpack.c.0.s8 %v5593
        %v5595 = vlaneseq
        %v5596 = vshrl.u32 %v5595, 7
        %v5597 = vsub.s32 %v5594, %v5596
        %v5598 = vrot.slane %v5584, %v5597
        %v5599 = vcombine.low %v5183, %v5323
        %v5600 = vcombine.high %v5183, %v5323
        %v5602 = vunpack.c.l.s4 1983009808
        %v5603 = vunpack.c.0.s8 %v5602
        %v5604 = vlaneseq
        %v5605 = vshrl.u32 %v5604, 7
        %v5606 = vsub.s32 %v5603, %v5605
        %v5607 = vrot.slane %v5599, %v5606
        %v5609 = vunpack.c.l.s4 1983009808
        %v5610 = vunpack.c.0.s8 %v5609
        %v5611 = vlaneseq
        %v5612 = vshrl.u32 %v5611, 7
        %v5613 = vsub.s32 %v5610, %v5612
        %v5614 = vrot.slane %v5600, %v5613
        %v5615 = vcombine.low %v5253, %v5393
        %v5616 = vcombine.high %v5253, %v5393
        %v5618 = vunpack.c.l.s4 1983009808
        %v5619 = vunpack.c.0.s8 %v5618
        %v5620 = vlaneseq
        %v5621 = vshrl.u32 %v5620, 7
        %v5622 = vsub.s32 %v5619, %v5621
        %v5623 = vrot.slane %v5615, %v5622
        %v5625 = vunpack.c.l.s4 1983009808
        %v5626 = vunpack.c.0.s8 %v5625
        %v5627 = vlaneseq
        %v5628 = vshrl.u32 %v5627, 7
        %v5629 = vsub.s32 %v5626, %v5628
        %v5630 = vrot.slane %v5616, %v5629
        %v5631 = vcombine.low %v5575, %v5591
        %v5632 = vcombine.high %v5575, %v5591
        %v5634 = vunpack.c.l.s4 1934713408
        %v5635 = vunpack.c.0.s8 %v5634
        %v5636 = vlaneseq
        %v5637 = vshrl.u32 %v5636, 7
        %v5638 = vsub.s32 %v5635, %v5637
        %v5639 = vrot.slane %v5631, %v5638
        %v5641 = vunpack.c.l.s4 1934713408
        %v5642 = vunpack.c.0.s8 %v5641
        %v5643 = vlaneseq
        %v5644 = vshrl.u32 %v5643, 7
        %v5645 = vsub.s32 %v5642, %v5644
        %v5646 = vrot.slane %v5632, %v5645
        %v5647 = vcombine.low %v5582, %v5598
        %v5648 = vcombine.high %v5582, %v5598
        %v5650 = vunpack.c.l.s4 1934713408
        %v5651 = vunpack.c.0.s8 %v5650
        %v5652 = vlaneseq
        %v5653 = vshrl.u32 %v5652, 7
        %v5654 = vsub.s32 %v5651, %v5653
        %v5655 = vrot.slane %v5647, %v5654
        %v5657 = vunpack.c.l.s4 1934713408
        %v5658 = vunpack.c.0.s8 %v5657
        %v5659 = vlaneseq
        %v5660 = vshrl.u32 %v5659, 7
        %v5661 = vsub.s32 %v5658, %v5660
        %v5662 = vrot.slane %v5648, %v5661
        %v5663 = vcombine.low %v5607, %v5623
        %v5664 = vcombine.high %v5607, %v5623
        %v5666 = vunpack.c.l.s4 1934713408
        %v5667 = vunpack.c.0.s8 %v5666
        %v5668 = vlaneseq
        %v5669 = vshrl.u32 %v5668, 7
        %v5670 = vsub.s32 %v5667, %v5669
        %v5671 = vrot.slane %v5663, %v5670
        %v5673 = vunpack.c.l.s4 1934713408
        %v5674 = vunpack.c.0.s8 %v5673
        %v5675 = vlaneseq
        %v5676 = vshrl.u32 %v5675, 7
        %v5677 = vsub.s32 %v5674, %v5676
        %v5678 = vrot.slane %v5664, %v5677
        %v5679 = vcombine.low %v5614, %v5630
        %v5680 = vcombine.high %v5614, %v5630
        %v5682 = vunpack.c.l.s4 1934713408
        %v5683 = vunpack.c.0.s8 %v5682
        %v5684 = vlaneseq
        %v5685 = vshrl.u32 %v5684, 7
        %v5686 = vsub.s32 %v5683, %v5685
        %v5687 = vrot.slane %v5679, %v5686
        %v5689 = vunpack.c.l.s4 1934713408
        %v5690 = vunpack.c.0.s8 %v5689
        %v5691 = vlaneseq
        %v5692 = vshrl.u32 %v5691, 7
        %v5693 = vsub.s32 %v5690, %v5692
        %v5694 = vrot.slane %v5680, %v5693
        %v5695 = vcombine.low %v5639, %v5671
        %v5696 = vcombine.high %v5639, %v5671
        %v5697 = vcombine.low %v5646, %v5678
        %v5698 = vcombine.high %v5646, %v5678
        %v5699 = vcombine.low %v5655, %v5687
        %v5700 = vcombine.high %v5655, %v5687
        %v5701 = vcombine.low %v5662, %v5694
        %v5702 = vcombine.high %v5662, %v5694
        %5705 = vrot.lane.b32.xlu0 %v5560, 32
        %v5706 = vpop.permute.xlu0 %5705
        %5707 = vrot.lane.b32.xlu0 %v5696, 32
        %v5708 = vpop.permute.xlu0 %5707
        %5713 = vrot.lane.b32.xlu0 %v5561, 64
        %v5714 = vpop.permute.xlu0 %5713
        %5715 = vrot.lane.b32.xlu0 %v5697, 64
        %v5716 = vpop.permute.xlu0 %5715
        %5721 = vrot.lane.b32.xlu0 %v5562, 96
        %v5722 = vpop.permute.xlu0 %5721
        %5723 = vrot.lane.b32.xlu0 %v5698, 96
        %v5724 = vpop.permute.xlu0 %5723
        %5729 = vrot.lane.b32.xlu0 %v5564, 32
        %v5730 = vpop.permute.xlu0 %5729
        %5731 = vrot.lane.b32.xlu0 %v5700, 32
        %v5732 = vpop.permute.xlu0 %5731
        %5737 = vrot.lane.b32.xlu0 %v5565, 64
        %v5738 = vpop.permute.xlu0 %5737
        %5739 = vrot.lane.b32.xlu0 %v5701, 64
        %v5740 = vpop.permute.xlu0 %5739
        %5745 = vrot.lane.b32.xlu0 %v5566, 96
        %v5746 = vpop.permute.xlu0 %5745
        %5747 = vrot.lane.b32.xlu0 %v5702, 96
        %v5748 = vpop.permute.xlu0 %5747
        %v5751 = vsel %vm716, %v5559, %v5706
        %v5752 = vsel %vm716, %v5695, %v5708
        %v5753 = vsel %vm2258, %v5751, %v5714
        %v5754 = vsel %vm2258, %v5752, %v5716
        %v5755 = vsel %vm2261, %v5753, %v5722
        %v5756 = vsel %vm2261, %v5754, %v5724
        %v5757 = vsel %vm716, %v5563, %v5730
        %v5758 = vsel %vm716, %v5699, %v5732
        %v5759 = vsel %vm2258, %v5757, %v5738
        %v5760 = vsel %vm2258, %v5758, %v5740
        %v5761 = vsel %vm2261, %v5759, %v5746
        %v5762 = vsel %vm2261, %v5760, %v5748
        %v5764 = vsel %vm778, %v5415, 0
        %5766 = vmatprep.subr.mxu0 %v5761
        %5767 = vmatpush1.msra.mxu0 %v5755
        %5768 = vmatprep.subr.mxu0 %v5762
        %5769 = vmatpush1.msra.mxu0 %v5756
        %5770 = vmatprep.subr.mxu0 0.0
        %5771 = vmatpush1.msra.mxu0 0.0
        %5772 = vmatprep.subr.mxu0 0.0
        %5773 = vmatpush1.msra.mxu0 0.0
        %5774 = vmatprep.subr.mxu0 0.0
        %5775 = vmatpush1.msra.mxu0 0.0
        %5776 = vmatprep.subr.mxu0 0.0
        %5777 = vmatpush1.msra.mxu0 0.0
        %5778 = vmatprep.subr.mxu0 0.0
        %5779 = vmatpush1.msra.mxu0 0.0
        %5780 = vmatprep.subr.mxu0 0.0
        %5781 = vmatpush1.msra.mxu0 0.0
        %5782 = vmatprep.subr.mxu0 0.0
        %5783 = vmatpush1.msra.mxu0 0.0
        %5784 = vmatprep.subr.mxu0 0.0
        %5785 = vmatpush1.msra.mxu0 0.0
        %5786 = vmatprep.subr.mxu0 0.0
        %5787 = vmatpush1.msra.mxu0 0.0
        %5788 = vmatprep.subr.mxu0 0.0
        %5789 = vmatpush1.msra.mxu0 0.0
        %5790 = vmatprep.subr.mxu0 0.0
        %5791 = vmatpush1.msra.mxu0 0.0
        %5792 = vmatprep.subr.mxu0 0.0
        %5793 = vmatpush1.msra.mxu0 0.0
        %5794 = vmatprep.subr.mxu0 0.0
        %5795 = vmatpush1.msra.mxu0 0.0
        %5796 = vmatprep.subr.mxu0 0.0
        %5797 = vmatpush1.msra.mxu0 0.0
        %5798 = vmatprep.subr.mxu0 0.0
        %5799 = vmatpush1.msra.mxu0 0.0
        %5800 = vmatprep.subr.mxu0 0.0
        %5801 = vmatpush1.msra.mxu0 0.0
        %5802 = vmatprep.subr.mxu0 0.0
        %5803 = vmatpush1.msra.mxu0 0.0
        %5804 = vmatprep.subr.mxu0 0.0
        %5805 = vmatpush1.msra.mxu0 0.0
        %5806 = vmatprep.subr.mxu0 0.0
        %5807 = vmatpush1.msra.mxu0 0.0
        %5808 = vmatprep.subr.mxu0 0.0
        %5809 = vmatpush1.msra.mxu0 0.0
        %5810 = vmatprep.subr.mxu0 0.0
        %5811 = vmatpush1.msra.mxu0 0.0
        %5812 = vmatprep.subr.mxu0 0.0
        %5813 = vmatpush1.msra.mxu0 0.0
        %5814 = vmatprep.subr.mxu0 0.0
        %5815 = vmatpush1.msra.mxu0 0.0
        %5816 = vmatprep.subr.mxu0 0.0
        %5817 = vmatpush1.msra.mxu0 0.0
        %5818 = vmatprep.subr.mxu0 0.0
        %5819 = vmatpush1.msra.mxu0 0.0
        %5820 = vmatprep.subr.mxu0 0.0
        %5821 = vmatpush1.msra.mxu0 0.0
        %5822 = vmatprep.subr.mxu0 0.0
        %5823 = vmatpush1.msra.mxu0 0.0
        %5824 = vmatprep.subr.mxu0 0.0
        %5825 = vmatpush1.msra.mxu0 0.0
        %5826 = vmatprep.subr.mxu0 0.0
        %5827 = vmatpush1.msra.mxu0 0.0
        %5828 = vmatprep.subr.mxu0 0.0
        %5829 = vmatpush1.msra.mxu0 0.0
        %5830 = vmatprep.mubr.f32.mxu0 0.0
        %5831 = vmatmul.mubr.f32.gmra.mrb[0].mxu0 %v5764
        %v5832 = vpop.f32.mrb[0].mxu0
        %v5833 = vadd.f32 0.0, %v5832
        %v5834 = vpop.f32.mrb[0].mxu0
        %v5835 = vadd.f32 0.0, %v5834
        %5836 = vdwg.mxu0
        %s5837 = scalar_lea.vmem %s298, 128 [#allocation4]
        %v5838 = vld [vmem:[%s5837] sm:$0xff]
        %v5839 = vld [vmem:[%s5837 + $0x8] sm:$0xff]
        %v5840 = vld [vmem:[%s5837 + $0x10] sm:$0xff]
        %v5841 = vld [vmem:[%s5837 + $0x18] sm:$0xff]
        %v5842 = vld [vmem:[%s5837 + $0x20] sm:$0xff]
        %v5843 = vld [vmem:[%s5837 + $0x28] sm:$0xff]
        %v5844 = vld [vmem:[%s5837 + $0x30] sm:$0xff]
        %v5845 = vld [vmem:[%s5837 + $0x38] sm:$0xff]
        %5847 = vrot.lane.b32.xlu0 %v5833, 96
        %v5848 = vpop.permute.xlu0 %5847
        %5850 = vrot.lane.b32.xlu0 %v5833, 64
        %v5851 = vpop.permute.xlu0 %5850
        %5853 = vrot.lane.b32.xlu0 %v5833, 32
        %v5854 = vpop.permute.xlu0 %5853
        %5857 = vrot.lane.b32.xlu0 %v5835, 96
        %v5858 = vpop.permute.xlu0 %5857
        %5860 = vrot.lane.b32.xlu0 %v5835, 64
        %v5861 = vpop.permute.xlu0 %5860
        %5863 = vrot.lane.b32.xlu0 %v5835, 32
        %v5864 = vpop.permute.xlu0 %5863
        %v5866 = vcombine.low %v5833, %v5851
        %v5867 = vcombine.high %v5833, %v5851
        %v5869 = vunpack.c.l.s4 1983009808
        %v5870 = vunpack.c.0.s8 %v5869
        %v5871 = vlaneseq
        %v5872 = vshrl.u32 %v5871, 7
        %v5873 = vsub.s32 %v5870, %v5872
        %v5874 = vrot.slane %v5866, %v5873
        %v5876 = vunpack.c.l.s4 1983009808
        %v5877 = vunpack.c.0.s8 %v5876
        %v5878 = vlaneseq
        %v5879 = vshrl.u32 %v5878, 7
        %v5880 = vsub.s32 %v5877, %v5879
        %v5881 = vrot.slane %v5867, %v5880
        %v5882 = vcombine.low %v5848, %v5854
        %v5883 = vcombine.high %v5848, %v5854
        %v5885 = vunpack.c.l.s4 1983009808
        %v5886 = vunpack.c.0.s8 %v5885
        %v5887 = vlaneseq
        %v5888 = vshrl.u32 %v5887, 7
        %v5889 = vsub.s32 %v5886, %v5888
        %v5890 = vrot.slane %v5882, %v5889
        %v5892 = vunpack.c.l.s4 1983009808
        %v5893 = vunpack.c.0.s8 %v5892
        %v5894 = vlaneseq
        %v5895 = vshrl.u32 %v5894, 7
        %v5896 = vsub.s32 %v5893, %v5895
        %v5897 = vrot.slane %v5883, %v5896
        %v5898 = vcombine.low %v5835, %v5861
        %v5899 = vcombine.high %v5835, %v5861
        %v5901 = vunpack.c.l.s4 1983009808
        %v5902 = vunpack.c.0.s8 %v5901
        %v5903 = vlaneseq
        %v5904 = vshrl.u32 %v5903, 7
        %v5905 = vsub.s32 %v5902, %v5904
        %v5906 = vrot.slane %v5898, %v5905
        %v5908 = vunpack.c.l.s4 1983009808
        %v5909 = vunpack.c.0.s8 %v5908
        %v5910 = vlaneseq
        %v5911 = vshrl.u32 %v5910, 7
        %v5912 = vsub.s32 %v5909, %v5911
        %v5913 = vrot.slane %v5899, %v5912
        %v5914 = vcombine.low %v5858, %v5864
        %v5915 = vcombine.high %v5858, %v5864
        %v5917 = vunpack.c.l.s4 1983009808
        %v5918 = vunpack.c.0.s8 %v5917
        %v5919 = vlaneseq
        %v5920 = vshrl.u32 %v5919, 7
        %v5921 = vsub.s32 %v5918, %v5920
        %v5922 = vrot.slane %v5914, %v5921
        %v5924 = vunpack.c.l.s4 1983009808
        %v5925 = vunpack.c.0.s8 %v5924
        %v5926 = vlaneseq
        %v5927 = vshrl.u32 %v5926, 7
        %v5928 = vsub.s32 %v5925, %v5927
        %v5929 = vrot.slane %v5915, %v5928
        %v5930 = vcombine.low %v5874, %v5890
        %v5931 = vcombine.high %v5874, %v5890
        %v5933 = vunpack.c.l.s4 1934713408
        %v5934 = vunpack.c.0.s8 %v5933
        %v5935 = vlaneseq
        %v5936 = vshrl.u32 %v5935, 7
        %v5937 = vsub.s32 %v5934, %v5936
        %v5938 = vrot.slane %v5930, %v5937
        %v5940 = vunpack.c.l.s4 1934713408
        %v5941 = vunpack.c.0.s8 %v5940
        %v5942 = vlaneseq
        %v5943 = vshrl.u32 %v5942, 7
        %v5944 = vsub.s32 %v5941, %v5943
        %v5945 = vrot.slane %v5931, %v5944
        %v5946 = vcombine.low %v5881, %v5897
        %v5947 = vcombine.high %v5881, %v5897
        %v5949 = vunpack.c.l.s4 1934713408
        %v5950 = vunpack.c.0.s8 %v5949
        %v5951 = vlaneseq
        %v5952 = vshrl.u32 %v5951, 7
        %v5953 = vsub.s32 %v5950, %v5952
        %v5954 = vrot.slane %v5946, %v5953
        %v5956 = vunpack.c.l.s4 1934713408
        %v5957 = vunpack.c.0.s8 %v5956
        %v5958 = vlaneseq
        %v5959 = vshrl.u32 %v5958, 7
        %v5960 = vsub.s32 %v5957, %v5959
        %v5961 = vrot.slane %v5947, %v5960
        %v5962 = vcombine.low %v5906, %v5922
        %v5963 = vcombine.high %v5906, %v5922
        %v5965 = vunpack.c.l.s4 1934713408
        %v5966 = vunpack.c.0.s8 %v5965
        %v5967 = vlaneseq
        %v5968 = vshrl.u32 %v5967, 7
        %v5969 = vsub.s32 %v5966, %v5968
        %v5970 = vrot.slane %v5962, %v5969
        %v5972 = vunpack.c.l.s4 1934713408
        %v5973 = vunpack.c.0.s8 %v5972
        %v5974 = vlaneseq
        %v5975 = vshrl.u32 %v5974, 7
        %v5976 = vsub.s32 %v5973, %v5975
        %v5977 = vrot.slane %v5963, %v5976
        %v5978 = vcombine.low %v5913, %v5929
        %v5979 = vcombine.high %v5913, %v5929
        %v5981 = vunpack.c.l.s4 1934713408
        %v5982 = vunpack.c.0.s8 %v5981
        %v5983 = vlaneseq
        %v5984 = vshrl.u32 %v5983, 7
        %v5985 = vsub.s32 %v5982, %v5984
        %v5986 = vrot.slane %v5978, %v5985
        %v5988 = vunpack.c.l.s4 1934713408
        %v5989 = vunpack.c.0.s8 %v5988
        %v5990 = vlaneseq
        %v5991 = vshrl.u32 %v5990, 7
        %v5992 = vsub.s32 %v5989, %v5991
        %v5993 = vrot.slane %v5979, %v5992
        %v5994 = vcombine.low %v5938, %v5970
        %v5995 = vcombine.high %v5938, %v5970
        %v5996 = vcombine.low %v5945, %v5977
        %v5997 = vcombine.high %v5945, %v5977
        %v5998 = vcombine.low %v5954, %v5986
        %v5999 = vcombine.high %v5954, %v5986
        %v6000 = vcombine.low %v5961, %v5993
        %v6001 = vcombine.high %v5961, %v5993
        %v6002 = vadd.f32 %v5838, %v5994
        %v6003 = vadd.f32 %v5839, %v5995
        %v6004 = vadd.f32 %v5840, %v5996
        %v6005 = vadd.f32 %v5841, %v5997
        %v6006 = vadd.f32 %v5842, %v5998
        %v6007 = vadd.f32 %v5843, %v5999
        %v6008 = vadd.f32 %v5844, %v6000
        %v6009 = vadd.f32 %v5845, %v6001
        %6010 = vst.msk [vmem:[%s5837] sm:$0xff] %vm716, %v6002
        %6011 = vst.msk [vmem:[%s5837 + $0x8] sm:$0xff] %vm716, %v6003
        %6012 = vst.msk [vmem:[%s5837 + $0x10] sm:$0xff] %vm716, %v6004
        %6013 = vst.msk [vmem:[%s5837 + $0x18] sm:$0xff] %vm716, %v6005
        %6014 = vst.msk [vmem:[%s5837 + $0x20] sm:$0xff] %vm716, %v6006
        %6015 = vst.msk [vmem:[%s5837 + $0x28] sm:$0xff] %vm716, %v6007
        %6016 = vst.msk [vmem:[%s5837 + $0x30] sm:$0xff] %vm716, %v6008
        %6017 = vst.msk [vmem:[%s5837 + $0x38] sm:$0xff] %vm716, %v6009
        %s6018 = sand.u32 %s163, 1
        %s6019 = scalar_lea.sflag [#allocation3], %s6018
        %s6020 = sand.u32 %s163, 1
        %s6021 = smul.addr %s6020, 256
        %s6022 = scalar_lea.vmem [#allocation2], %s6021
        %s6023 = sand.u32 %s189, 1
        %s6024 = scalar_lea.sflag [#allocation5], %s6023
        %s6025 = sand.u32 %s189, 1
        %s6026 = smul.addr %s6025, 192
        %s6027 = scalar_lea.vmem [#allocation4], %s6026
        // Predicated region
        $region45: #{tpu_custom_call.1} parent=39 // pred_check
          %p6028 = pneg %p173
        $region46: #{tpu_custom_call.1} parent=39 // pred_check_branch
          %6030 = sbr.rel (%p6028) target = $region48
        $region47: #{tpu_custom_call.1} parent=39 // pred_region
          %s6031 = smul.u32 16, %s29
          %s6033 = ssub.s32 4096, 4096
          %6034 = vsyncadd %s6019, %s6033
          %s6035 = smul.addr %s6031, 2
          %s6036 = smul.addr %s28, 32
          %s6037 = sadd.s32 %s6035, %s6036
          %s6038 = smul.addr %s6037, 128
          %s6039 = scalar_lea.hbm %s5, %s6038
          %s6040 = sshll.u32 %s6022, 4
          %s6041 = int_to_ptr.vmem [resolvable:$true] %s6040
          %6046 = dma.vmem_to_hbm [thread:$0]  %s6041, 4096, %s6039, %s6019, 128, 128, 8
        $region48: #{tpu_custom_call.1} parent=39 // pred_fallthru
          _
        // Predicated region
        $region49: #{tpu_custom_call.1} parent=39 // pred_check
          %p6047 = pneg %p199
        $region50: #{tpu_custom_call.1} parent=39 // pred_check_branch
          %6049 = sbr.rel (%p6047) target = $region52
        $region51: #{tpu_custom_call.1} parent=39 // pred_region
          %s6050 = smul.u32 3, %s28
          %s6052 = ssub.s32 3072, 3072
          %6053 = vsyncadd %s6024, %s6052
          %s6054 = smul.addr %s6050, 8
          %s6055 = smul.addr %s6054, 128
          %s6056 = scalar_lea.hbm %s6, %s6055
          %s6057 = sshll.u32 %s6027, 4
          %s6058 = int_to_ptr.vmem [resolvable:$true] %s6057
          %6063 = dma.vmem_to_hbm [thread:$0]  %s6058, 3072, %s6056, %s6024, 128, 128, 8
        $region52: #{tpu_custom_call.1} parent=39 // pred_fallthru
          _
      $region40: #{tpu_custom_call.1} parent=5 // pred_fallthru
        _
      %p6064 = scmp.le.s32.totalorder 2, %s19
      // Predicated region
      $region53: #{tpu_custom_call.1} parent=5 // pred_check
        %p6065 = pneg %p6064
      $region54: #{tpu_custom_call.1} parent=5 // pred_check_branch
        %6067 = sbr.rel (%p6065) target = $region56
      $region55: #{tpu_custom_call.1} parent=5 // pred_region
        %s6068 = ssub.s32 %s19, 2
        // Predicated region
        $region57: #{tpu_custom_call.1} parent=55 // pred_check
          %p6069 = pneg %p179
        $region58: #{tpu_custom_call.1} parent=55 // pred_check_branch
          %6071 = sbr.rel (%p6069) target = $region60
        $region59: #{tpu_custom_call.1} parent=55 // pred_region
          %s6072 = sand.u32 %s164, 1
          %s6073 = scalar_lea.sflag [#allocation3], %s6072
          %s6074 = sand.u32 %s164, 1
          %s6075 = smul.addr %s6074, 256
          %s6076 = scalar_lea.vmem [#allocation2], %s6075
          %6077 = dma.done %s6073, 4096
        $region60: #{tpu_custom_call.1} parent=55 // pred_fallthru
          _
        // Predicated region
        $region61: #{tpu_custom_call.1} parent=55 // pred_check
          %p6078 = pneg %p205
        $region62: #{tpu_custom_call.1} parent=55 // pred_check_branch
          %6080 = sbr.rel (%p6078) target = $region64
        $region63: #{tpu_custom_call.1} parent=55 // pred_region
          %s6081 = sand.u32 %s190, 1
          %s6082 = scalar_lea.sflag [#allocation5], %s6081
          %s6083 = sand.u32 %s190, 1
          %s6084 = smul.addr %s6083, 192
          %s6085 = scalar_lea.vmem [#allocation4], %s6084
          %6086 = dma.done %s6082, 3072
        $region64: #{tpu_custom_call.1} parent=55 // pred_fallthru
          _
      $region56: #{tpu_custom_call.1} parent=5 // pred_fallthru
        _
    $region6: #{tpu_custom_call.1} parent=1 // loop_footer
      %s23 = sadd.s32 1, %s19
    $region7: #{tpu_custom_call.1} parent=1 // loop_footer_branch
      %18 = sbr.rel target = $region3
    $region8: #{tpu_custom_call.1} parent=1 // loop_exit
      _
    %6087 = vsyncpa [#allocation3], 1
    %s6088 = scalar_lea.sflag [#allocation3], 1
    %6089 = vsyncpa %s6088, 1
    %6090 = vsyncpa [#allocation5], 1
    %s6091 = scalar_lea.sflag [#allocation5], 1
    %6092 = vsyncpa %s6091, 1

</llo_original>
